<compile_context>
chip_gen: v7x
topology: tpu7x:2x2x1
jax: 0.10.0
libtpu: 0.0.40
codegen_flags: <defaults>
</compile_context>

<pallas_src>
import numpy as np
import jax
import jax.numpy as jnp
from jax import lax
from jax.experimental import pallas as pl
from jax.experimental.pallas import tpu as pltpu


_LANE = 128
_PALLAS_MIN_D = 128      # below this, <1 MXU/lane tile -> pure overhead
_PALLAS_MIN_B = 256      # below this, the ~0.35us/step + call overhead dominates
_MATMUL_PREC = lax.Precision.HIGHEST


def _round_up(x, m):
    return ((x + m - 1) // m) * m


# ---------------------------------------------------------------------------
# Pallas kernel:  pred += x_tile @ PhiT_tile ;  grad += x_tile @ AeffT_tile
# grid = (batch_tiles, k_tiles); the outputs are resident across the k axis.
# ---------------------------------------------------------------------------
def _koopman_kernel(x_ref, phit_ref, aefft_ref, pred_ref, grad_ref):
    @pl.when(pl.program_id(1) == 0)
    def _():
        pred_ref[...] = jnp.zeros_like(pred_ref)
        grad_ref[...] = jnp.zeros_like(grad_ref)

    x = x_ref[...]
    pred_ref[...] += jnp.dot(x, phit_ref[...],
                             preferred_element_type=jnp.float32,
                             precision=_MATMUL_PREC)
    grad_ref[...] += jnp.dot(x, aefft_ref[...],
                             preferred_element_type=jnp.float32,
                             precision=_MATMUL_PREC)


def _pick_tile_b(b_padded):
    # >= 2 batch grid steps (so "parallel" shards across v7x's two TCs) and a
    # 256 cap that is MXU-tile aligned on v5e (128x) / v6e / v7x (256x) and
    # keeps the per-step VMEM footprint modest even at large D.
    if b_padded % 256 == 0 and b_padded >= 512:
        return 256
    return 128


def _pick_tile_k(d_padded):
    for tk in (512, 384, 256, 128):
        if d_padded % tk == 0:
            return min(tk, d_padded)
    return d_padded


def _fused_pred_grad_pallas(inp, phi_t, aeff_t):
    """inp: (B, D) f32, phi_t / aeff_t: (D, D) f32 -> pred, grad each (B, D)."""
    b, d = inp.shape
    bp = _round_up(b, _LANE)          # batch padded so the batch tile divides it
    dp = _round_up(d, _LANE)          # lane-dense N and 128-aligned K

    if (bp, dp) != (b, d):
        # Zero padding keeps the contraction exact and the padded output lanes
        # exactly zero, so the final slice recovers the true pred/grad.
        inp = jnp.pad(inp, ((0, bp - b), (0, dp - d)))
        phi_t = jnp.pad(phi_t, ((0, dp - d), (0, dp - d)))
        aeff_t = jnp.pad(aeff_t, ((0, dp - d), (0, dp - d)))

    tb = _pick_tile_b(bp)
    tk = _pick_tile_k(dp)
    grid = (bp // tb, dp // tk)       # reduction (K) axis last

    # Per-step VMEM estimate: double-buffered input + two weights + two outputs.
    vmem_bytes = 4 * (2 * tb * tk + 2 * 2 * tk * dp + 2 * 2 * tb * dp) + (1 << 20)
    vmem_limit = int(min(max(32 << 20, vmem_bytes), 64 << 20))

    pred_p, grad_p = pl.pallas_call(
        _koopman_kernel,
        out_shape=(jax.ShapeDtypeStruct((bp, dp), jnp.float32),
                   jax.ShapeDtypeStruct((bp, dp), jnp.float32)),
        grid=grid,
        in_specs=[
            pl.BlockSpec((tb, tk), lambda i, k: (i, k)),    # input  (batch, K) tile
            pl.BlockSpec((tk, dp), lambda i, k: (k, 0)),    # Phi.T       K tile
            pl.BlockSpec((tk, dp), lambda i, k: (k, 0)),    # A_eff.T     K tile
        ],
        out_specs=(
            pl.BlockSpec((tb, dp), lambda i, k: (i, 0)),    # pred (resident in k)
            pl.BlockSpec((tb, dp), lambda i, k: (i, 0)),    # grad (resident in k)
        ),
        compiler_params=pltpu.CompilerParams(
            dimension_semantics=("parallel", "arbitrary"),
            vmem_limit_bytes=vmem_limit),
    )(inp, phi_t, aeff_t)

    return pred_p[:b, :d], grad_p[:b, :d]


def _pred_grad(inp, phi, aeff):
    b, d = inp.shape
    if d < _PALLAS_MIN_D or b < _PALLAS_MIN_B:
        # Tiny problem: pallas_call launch + DMA + partial-store overhead would
        # dominate -- let XLA fuse the two small matmuls.
        pred = jnp.dot(inp, phi.T, precision=_MATMUL_PREC)
        grad = jnp.dot(inp, aeff.T, precision=_MATMUL_PREC)
        return pred, grad
    return _fused_pred_grad_pallas(inp, phi.T, aeff.T)


# ---------------------------------------------------------------------------
# Forward wrapper (glue: skew-symmetrize, expm, host eig)
# ---------------------------------------------------------------------------
def aug_koopman_forward(inp, dt, t0, A, imag_eigen):
    del t0  # unused by the module's forward()
    # TODO(synk): the module runs in float64 (.double()); TPU Pallas has no
    # f64, so everything on device is float32.
    inp = inp.astype(jnp.float32)
    A = A.astype(jnp.float32)
    A_eff = (A - A.T) * 0.5 if imag_eigen else A

    # Dispatch all device work first (async) ...
    Phi = jax.scipy.linalg.expm(A_eff * jnp.float32(dt))             # (D, D)
    pred, grad = _pred_grad(inp, Phi, A_eff)

    # ... then the blocking host eig, so it overlaps the device expm+matmuls.
    # TODO(synk): no eig on TPU; torch.eig's packed real eigenvector format is
    # not reproduced -- complex numpy eigenpairs are returned instead.
    A_host = np.asarray(jax.device_get(A_eff), dtype=np.float64)
    ev, evec = np.linalg.eig(A_host)
    eig_vals = jnp.stack([jnp.asarray(ev.real, jnp.float32),
                          jnp.asarray(ev.imag, jnp.float32)], axis=1)  # (D, 2)
    eig_vects = jnp.asarray(evec.astype(np.complex64))

    # Phi returned batched (1, D, D) to match torch_expm(A.unsqueeze(0) * dt).
    return pred, grad, Phi[None, :, :], eig_vals, eig_vects


# ---------------------------------------------------------------------------
# Pure-JAX reference for validation
# ---------------------------------------------------------------------------
def reference_pred_grad(inp, dt, A, imag_eigen):
    A_eff = (A - A.T) * 0.5 if imag_eigen else A
    Phi = jax.scipy.linalg.expm(A_eff * jnp.float32(dt))
    pred = jnp.dot(inp, Phi.T, precision=_MATMUL_PREC)
    grad = jnp.dot(inp, A_eff.T, precision=_MATMUL_PREC)
    return pred, grad, Phi


if __name__ == "__main__":
    key = jax.random.PRNGKey(0)
    k_inp, k_a, k_inp2, k_a2 = jax.random.split(key, 4)
    dt = jnp.float32(0.1)
    t0 = jnp.float32(0.0)

    # --- 1. Small, module-consistent demo (takes the XLA fallback path) -----
    params = dict(nb_Batch=2, Batch_size=8, dim_latent=4,
                  dim_output=8, Imag_Eigen=True)
    B, D = params['Batch_size'], params['dim_output']
    inp = jax.random.normal(k_inp, (B, D), dtype=jnp.float32)
    A = jax.random.uniform(k_a, (D, D), dtype=jnp.float32)

    # y_aug parameter exists in the module but is never used in forward().
    y_aug = jnp.zeros((params['nb_Batch'], params['Batch_size'],
                       params['dim_latent']), jnp.float32)

    outs = aug_koopman_forward(inp, dt, t0, A, params['Imag_Eigen'])
    pred, grad, Phi, eig_vals, eig_vects = jax.block_until_ready(outs)
    r_pred, r_grad, r_Phi = reference_pred_grad(inp, dt, A, params['Imag_Eigen'])
    assert jnp.allclose(pred, r_pred, atol=1e-5, rtol=1e-5), "pred mismatch"
    assert jnp.allclose(grad, r_grad, atol=1e-5, rtol=1e-5), "grad mismatch"
    assert jnp.allclose(Phi[0], r_Phi, atol=1e-5, rtol=1e-5), "Phi mismatch"
    assert eig_vals.shape == (D, 2) and eig_vects.shape == (D, D)

    # --- 2. Pallas-path validation at MXU-worthy shapes ---------------------
    for (Bl, Dl) in ((256, 128),      # aligned: no padding needed
                     (300, 200)):     # unaligned: exercises the zero-padding
        inp_l = jax.random.normal(k_inp2, (Bl, Dl), dtype=jnp.float32)
        A_l = jax.random.uniform(k_a2, (Dl, Dl), dtype=jnp.float32)
        outs_l = aug_koopman_forward(inp_l, dt, t0, A_l, True)
        pred_l, grad_l, Phi_l, ev_l, evec_l = jax.block_until_ready(outs_l)
        r_pred_l, r_grad_l, _ = reference_pred_grad(inp_l, dt, A_l, True)
        assert pred_l.shape == (Bl, Dl) and grad_l.shape == (Bl, Dl)
        assert jnp.allclose(pred_l, r_pred_l, atol=1e-2, rtol=1e-2), \
            f"pallas pred mismatch at {(Bl, Dl)}"
        assert jnp.allclose(grad_l, r_grad_l, atol=1e-2, rtol=1e-2), \
            f"pallas grad mismatch at {(Bl, Dl)}"

    print("KERNEL_OK")
</pallas_src>

<mosaic_0001>
module attributes {stable_mosaic.version = 11 : i64} {
  func.func @_koopman_kernel(%arg0: i32, %arg1: i32, %arg2: memref<128x128xf32, #tpu.memory_space<vmem>>, %arg3: memref<128x128xf32, #tpu.memory_space<vmem>>, %arg4: memref<128x128xf32, #tpu.memory_space<vmem>>, %arg5: memref<128x128xf32, #tpu.memory_space<vmem>>, %arg6: memref<128x128xf32, #tpu.memory_space<vmem>>) attributes {dimension_semantics = [#tpu.dimension_semantics<parallel>, #tpu.dimension_semantics<arbitrary>], iteration_bounds = array<i64: 2, 1>, scalar_prefetch = 0 : i64, scratch_operands = 0 : i64, tpu.core_type = #tpu.core_type<tc>, window_params = [{transform_indices = @transform_0, window_bounds = array<i64: 128, 128>}, {transform_indices = @transform_1, window_bounds = array<i64: 128, 128>}, {transform_indices = @transform_2, window_bounds = array<i64: 128, 128>}, {transform_indices = @transform_3, window_bounds = array<i64: 128, 128>}, {transform_indices = @transform_4, window_bounds = array<i64: 128, 128>}]} {
    %c0_i32 = arith.constant 0 : i32
    %0 = arith.cmpi eq, %arg1, %c0_i32 : i32
    %1 = arith.extui %0 : i1 to i32
    %c0_i32_0 = arith.constant 0 : i32
    %2 = arith.cmpi ne, %1, %c0_i32_0 : i32
    scf.if %2 {
      %cst_15 = arith.constant 0.000000e+00 : f32
      %14 = vector.broadcast %cst_15 : f32 to vector<128x128xf32>
      %c0_16 = arith.constant 0 : index
      %c0_17 = arith.constant 0 : index
      %15 = vector.load %arg5[%c0_16, %c0_17] : memref<128x128xf32, #tpu.memory_space<vmem>>, vector<128x128xf32>
      tpu.vector_store %arg5[%c0_16, %c0_17], %14 {strides = array<i32>} : memref<128x128xf32, #tpu.memory_space<vmem>>, vector<128x128xf32>,
      %cst_18 = arith.constant 0.000000e+00 : f32
      %16 = vector.broadcast %cst_18 : f32 to vector<128x128xf32>
      %c0_19 = arith.constant 0 : index
      %c0_20 = arith.constant 0 : index
      %17 = vector.load %arg6[%c0_19, %c0_20] : memref<128x128xf32, #tpu.memory_space<vmem>>, vector<128x128xf32>
      tpu.vector_store %arg6[%c0_19, %c0_20], %16 {strides = array<i32>} : memref<128x128xf32, #tpu.memory_space<vmem>>, vector<128x128xf32>,
    } else {
    }
    %c0 = arith.constant 0 : index
    %c0_1 = arith.constant 0 : index
    %3 = vector.load %arg2[%c0, %c0_1] : memref<128x128xf32, #tpu.memory_space<vmem>>, vector<128x128xf32>
    %c0_2 = arith.constant 0 : index
    %c0_3 = arith.constant 0 : index
    %4 = vector.load %arg5[%c0_2, %c0_3] : memref<128x128xf32, #tpu.memory_space<vmem>>, vector<128x128xf32>
    %c0_4 = arith.constant 0 : index
    %c0_5 = arith.constant 0 : index
    %5 = vector.load %arg3[%c0_4, %c0_5] : memref<128x128xf32, #tpu.memory_space<vmem>>, vector<128x128xf32>
    %cst = arith.constant dense<0.000000e+00> : vector<128x128xf32>
    %6 = tpu.matmul %3, %5, %cst {dimension_numbers = #tpu.dot_dimension_numbers<[1], [0], [0], [1], [0, 0, 1, 1], [], []>, precision = #tpu.contract_precision<fp32>} : vector<128x128xf32>, vector<128x128xf32>, vector<128x128xf32> -> vector<128x128xf32>
    %7 = arith.addf %4, %6 : vector<128x128xf32>
    %c0_6 = arith.constant 0 : index
    %c0_7 = arith.constant 0 : index
    %8 = vector.load %arg5[%c0_6, %c0_7] : memref<128x128xf32, #tpu.memory_space<vmem>>, vector<128x128xf32>
    tpu.vector_store %arg5[%c0_6, %c0_7], %7 {strides = array<i32>} : memref<128x128xf32, #tpu.memory_space<vmem>>, vector<128x128xf32>,
    %c0_8 = arith.constant 0 : index
    %c0_9 = arith.constant 0 : index
    %9 = vector.load %arg6[%c0_8, %c0_9] : memref<128x128xf32, #tpu.memory_space<vmem>>, vector<128x128xf32>
    %c0_10 = arith.constant 0 : index
    %c0_11 = arith.constant 0 : index
    %10 = vector.load %arg4[%c0_10, %c0_11] : memref<128x128xf32, #tpu.memory_space<vmem>>, vector<128x128xf32>
    %cst_12 = arith.constant dense<0.000000e+00> : vector<128x128xf32>
    %11 = tpu.matmul %3, %10, %cst_12 {dimension_numbers = #tpu.dot_dimension_numbers<[1], [0], [0], [1], [0, 0, 1, 1], [], []>, precision = #tpu.contract_precision<fp32>} : vector<128x128xf32>, vector<128x128xf32>, vector<128x128xf32> -> vector<128x128xf32>
    %12 = arith.addf %9, %11 : vector<128x128xf32>
    %c0_13 = arith.constant 0 : index
    %c0_14 = arith.constant 0 : index
    %13 = vector.load %arg6[%c0_13, %c0_14] : memref<128x128xf32, #tpu.memory_space<vmem>>, vector<128x128xf32>
    tpu.vector_store %arg6[%c0_13, %c0_14], %12 {strides = array<i32>} : memref<128x128xf32, #tpu.memory_space<vmem>>, vector<128x128xf32>,
    return
  }
  func.func @transform_0(%arg0: i32, %arg1: i32) -> (i32, i32) {
    %c0_i32 = arith.constant 0 : i32
    return %arg0, %arg1 : i32, i32
  }
  func.func @transform_1(%arg0: i32, %arg1: i32) -> (i32, i32) {
    %c0_i32 = arith.constant 0 : i32
    %c0_i32_0 = arith.constant 0 : i32
    return %arg1, %c0_i32 : i32, i32
  }
  func.func @transform_2(%arg0: i32, %arg1: i32) -> (i32, i32) {
    %c0_i32 = arith.constant 0 : i32
    %c0_i32_0 = arith.constant 0 : i32
    return %arg1, %c0_i32 : i32, i32
  }
  func.func @transform_3(%arg0: i32, %arg1: i32) -> (i32, i32) {
    %c0_i32 = arith.constant 0 : i32
    %c0_i32_0 = arith.constant 0 : i32
    return %arg0, %c0_i32 : i32, i32
  }
  func.func @transform_4(%arg0: i32, %arg1: i32) -> (i32, i32) {
    %c0_i32 = arith.constant 0 : i32
    %c0_i32_0 = arith.constant 0 : i32
    return %arg0, %c0_i32 : i32, i32
  }
}

</mosaic_0001>

<llo_original>
// kernel: tpu_custom_call.1
$region0: #{tpu_custom_call.1}
  #allocation0 [shape = 'u32[]', space=smem, size = 0x4, offset = 0x4, fixed_abs, tag = 'smem constant byte address 0x4 - core index']
  #allocation1 [shape = 'u32[144,128]{1,0:T(1,128)}', space=vmem, size = 0x12000, scoped, tag = 'internal scratch']
  %s0 = inlined_call_operand.hbm [shape: f32[256,128], index: 0, kind: input, shape index: {}]
  %s1 = inlined_call_operand.hbm [shape: f32[128,128], index: 1, kind: input, shape index: {}]
  %s2 = inlined_call_operand.hbm [shape: f32[128,128], index: 2, kind: input, shape index: {}]
  %s3 = inlined_call_operand.hbm [shape: f32[256,128], index: 3, kind: output, shape index: {0}]
  %s4 = inlined_call_operand.hbm [shape: f32[256,128], index: 4, kind: output, shape index: {1}]
  %5 = xla_tuple %s3, %s4
  %s6 = sld [smem:[#allocation0]]
  $region69: #{tpu_custom_call.1} parent=0
    _
  %s8 = ssub.s32 1, %s6
  %s9 = scalar_select 0, %s8, %s6
  $region1: #{tpu_custom_call.1} parent=0
    #allocation2 [shape = 'u8[131072]{0}', space=vmem, size = 0x20000, scoped, tag = 'input window, operand 0']
    #allocation3 [shape = 's32[2]{0}', space=sflag, size = 0x8, scoped, tag = 'scoped memory for tpu_custom_call.1']
    #allocation4 [shape = 's32[2]{0}', space=sflag, size = 0x8, scoped, tag = 'scoped memory for tpu_custom_call.1']
    #allocation5 [shape = 'u8[65536]{0}', space=vmem, size = 0x10000, scoped, tag = 'input window, operand 1, single buffered']
    #allocation6 [shape = 's32[1]{0}', space=sflag, size = 0x4, scoped, tag = 'scoped memory for tpu_custom_call.1']
    #allocation7 [shape = 'u8[65536]{0}', space=vmem, size = 0x10000, scoped, tag = 'input window, operand 2, single buffered']
    #allocation8 [shape = 'u8[131072]{0}', space=vmem, size = 0x20000, scoped, tag = 'output window, operand 0']
    #allocation9 [shape = 'u8[131072]{0}', space=vmem, size = 0x20000, scoped, tag = 'output window, operand 1']
    #allocation10 [shape = 's32[2]{0}', space=sflag, size = 0x8, scoped, tag = 'scoped memory for tpu_custom_call.1']
    %10 = vsyncpa [#allocation3], 0
    %s11 = scalar_lea.sflag [#allocation3], 1
    %12 = vsyncpa %s11, 0
    %13 = vsyncpa [#allocation6], 0
    %14 = vsyncpa [#allocation4], 0
    %s15 = scalar_lea.sflag [#allocation4], 1
    %16 = vsyncpa %s15, 0
    %17 = vsyncpa [#allocation10], 0
    %s18 = scalar_lea.sflag [#allocation10], 1
    %19 = vsyncpa %s18, 0
    loop: start=0, step=1, limit=4
    $region2: #{tpu_custom_call.1} parent=1 // loop_pre_header
      _
    $region3: #{tpu_custom_call.1} parent=1 // loop_header
      %s21 = sphi 0, %s25
      %p22 = scmp.ge.s32.totalorder %s21, 4
      %s28 = sphi 0, %s40
      %s29 = sphi 0, %s36
      %s30 = sphi 0, %s28
      %s31 = sphi 0, %s29
      %s32 = sphi 0, %s30
      %s33 = sphi 0, %s31
      %s45 = sphi 0, %s47
      %s48 = sphi 0, %s45
      %s49 = sphi 0, %s48
      %s65 = sphi 0, %s49
      %s71 = sphi 0, %s73
      %s74 = sphi 0, %s71
      %s75 = sphi 0, %s74
      %s91 = sphi 0, %s75
      %s97 = sphi 0, %s99
      %s100 = sphi 0, %s97
      %s101 = sphi 0, %s100
      %s117 = sphi 0, %s101
      %s123 = sphi 0, %s125
      %s126 = sphi 0, %s123
      %s127 = sphi 0, %s126
      %s143 = sphi 0, %s127
      %s149 = sphi 0, %s151
      %s152 = sphi 0, %s149
      %s153 = sphi 0, %s152
      %s169 = sphi 0, %s153
    $region4: #{tpu_custom_call.1} parent=1 // loop_header_branch
      %24 = sbr.rel (%p22) target = $region8
    $region5: #{tpu_custom_call.1} parent=1 // loop_body
      %s26 = ssub.s32 %s21, 1
      %s27 = ssub.s32 %s21, 2
      %s34 = sadd.s32 1, %s29
      %p35 = scmp.ge.s32.totalorder %s34, 1
      %s36 = scalar_select %p35, 0, %s34
      %s37 = sadd.s32 1, %s28
      %s38 = scalar_select %p35, %s37, %s28
      %p39 = scmp.ge.s32.totalorder %s38, 2
      %s40 = scalar_select %p39, 0, %s38
      %s41 = ssub.s32 %s28, %s40
      %s42 = ssub.s32 %s29, %s36
      %s43 = sor.u32 %s41, %s42
      %p44 = scmp.eq.s32.totalorder %s43, 0
      %s46 = sadd.s32 %s45, 1
      %s47 = scalar_select %p44, %s45, %s46
      %p50 = pneg %p44
      %p51 = scmp.eq.s32.totalorder %s21, 1
      %p52 = por %p50, %p51
      %p53 = scmp.ne.s32.totalorder %s45, %s48
      %p54 = scmp.eq.s32.totalorder %s21, 0
      %p55 = por %p53, %p54
      %p56 = scmp.ne.s32.totalorder %s45, %s48
      %p57 = scmp.eq.s32.totalorder %s26, 1
      %p58 = por %p56, %p57
      %p59 = scmp.ne.s32.totalorder %s48, %s49
      %p60 = scmp.eq.s32.totalorder %s26, 0
      %p61 = por %p59, %p60
      %p62 = scmp.ne.s32.totalorder %s48, %s49
      %p63 = scmp.eq.s32.totalorder %s27, 1
      %p64 = por %p62, %p63
      %p66 = scmp.ne.s32.totalorder %s49, %s65
      %p67 = scmp.eq.s32.totalorder %s27, 0
      %p68 = por %p66, %p67
      %s69 = ssub.s32 %s29, %s36
      %p70 = scmp.eq.s32.totalorder %s69, 0
      %s72 = sadd.s32 %s71, 1
      %s73 = scalar_select %p70, %s71, %s72
      %p76 = pneg %p70
      %p77 = scmp.eq.s32.totalorder %s21, 1
      %p78 = por %p76, %p77
      %p79 = scmp.ne.s32.totalorder %s71, %s74
      %p80 = scmp.eq.s32.totalorder %s21, 0
      %p81 = por %p79, %p80
      %p82 = scmp.ne.s32.totalorder %s71, %s74
      %p83 = scmp.eq.s32.totalorder %s26, 1
      %p84 = por %p82, %p83
      %p85 = scmp.ne.s32.totalorder %s74, %s75
      %p86 = scmp.eq.s32.totalorder %s26, 0
      %p87 = por %p85, %p86
      %p88 = scmp.ne.s32.totalorder %s74, %s75
      %p89 = scmp.eq.s32.totalorder %s27, 1
      %p90 = por %p88, %p89
      %p92 = scmp.ne.s32.totalorder %s75, %s91
      %p93 = scmp.eq.s32.totalorder %s27, 0
      %p94 = por %p92, %p93
      %s95 = ssub.s32 %s29, %s36
      %p96 = scmp.eq.s32.totalorder %s95, 0
      %s98 = sadd.s32 %s97, 1
      %s99 = scalar_select %p96, %s97, %s98
      %p102 = pneg %p96
      %p103 = scmp.eq.s32.totalorder %s21, 1
      %p104 = por %p102, %p103
      %p105 = scmp.ne.s32.totalorder %s97, %s100
      %p106 = scmp.eq.s32.totalorder %s21, 0
      %p107 = por %p105, %p106
      %p108 = scmp.ne.s32.totalorder %s97, %s100
      %p109 = scmp.eq.s32.totalorder %s26, 1
      %p110 = por %p108, %p109
      %p111 = scmp.ne.s32.totalorder %s100, %s101
      %p112 = scmp.eq.s32.totalorder %s26, 0
      %p113 = por %p111, %p112
      %p114 = scmp.ne.s32.totalorder %s100, %s101
      %p115 = scmp.eq.s32.totalorder %s27, 1
      %p116 = por %p114, %p115
      %p118 = scmp.ne.s32.totalorder %s101, %s117
      %p119 = scmp.eq.s32.totalorder %s27, 0
      %p120 = por %p118, %p119
      %s121 = ssub.s32 %s28, %s40
      %p122 = scmp.eq.s32.totalorder %s121, 0
      %s124 = sadd.s32 %s123, 1
      %s125 = scalar_select %p122, %s123, %s124
      %p128 = pneg %p122
      %p129 = scmp.eq.s32.totalorder %s21, 1
      %p130 = por %p128, %p129
      %p131 = scmp.ne.s32.totalorder %s123, %s126
      %p132 = scmp.eq.s32.totalorder %s21, 0
      %p133 = por %p131, %p132
      %p134 = scmp.ne.s32.totalorder %s123, %s126
      %p135 = scmp.eq.s32.totalorder %s26, 1
      %p136 = por %p134, %p135
      %p137 = scmp.ne.s32.totalorder %s126, %s127
      %p138 = scmp.eq.s32.totalorder %s26, 0
      %p139 = por %p137, %p138
      %p140 = scmp.ne.s32.totalorder %s126, %s127
      %p141 = scmp.eq.s32.totalorder %s27, 1
      %p142 = por %p140, %p141
      %p144 = scmp.ne.s32.totalorder %s127, %s143
      %p145 = scmp.eq.s32.totalorder %s27, 0
      %p146 = por %p144, %p145
      %s147 = ssub.s32 %s28, %s40
      %p148 = scmp.eq.s32.totalorder %s147, 0
      %s150 = sadd.s32 %s149, 1
      %s151 = scalar_select %p148, %s149, %s150
      %p154 = pneg %p148
      %p155 = scmp.eq.s32.totalorder %s21, 1
      %p156 = por %p154, %p155
      %p157 = scmp.ne.s32.totalorder %s149, %s152
      %p158 = scmp.eq.s32.totalorder %s21, 0
      %p159 = por %p157, %p158
      %p160 = scmp.ne.s32.totalorder %s149, %s152
      %p161 = scmp.eq.s32.totalorder %s26, 1
      %p162 = por %p160, %p161
      %p163 = scmp.ne.s32.totalorder %s152, %s153
      %p164 = scmp.eq.s32.totalorder %s26, 0
      %p165 = por %p163, %p164
      %p166 = scmp.ne.s32.totalorder %s152, %s153
      %p167 = scmp.eq.s32.totalorder %s27, 1
      %p168 = por %p166, %p167
      %p170 = scmp.ne.s32.totalorder %s153, %s169
      %p171 = scmp.eq.s32.totalorder %s27, 0
      %p172 = por %p170, %p171
      %p173 = scmp.le.s32.totalorder 1, %s21
      %p174 = scmp.lt.s32.totalorder %s21, 3
      %p175 = pnand %p173, %p174
      %p176 = pneg %p175
      // Predicated region
      $region9: #{tpu_custom_call.1} parent=5 // pred_check
        _
      $region10: #{tpu_custom_call.1} parent=5 // pred_check_branch
        %178 = sbr.rel (%p175) target = $region12
      $region11: #{tpu_custom_call.1} parent=5 // pred_region
        %s179 = ssub.s32 %s21, 1
        // Predicated region
        $region13: #{tpu_custom_call.1} parent=11 // pred_check
          %p180 = pneg %p87
        $region14: #{tpu_custom_call.1} parent=11 // pred_check_branch
          %182 = sbr.rel (%p180) target = $region16
        $region15: #{tpu_custom_call.1} parent=11 // pred_region
          %s183 = smul.u32 16, %s31
          %s185 = ssub.s32 2048, 2048
          %186 = vsyncadd [#allocation6], %s185
          %s187 = smul.addr %s183, 128
          %s188 = scalar_lea.hbm %s1, %s187
          %s189 = sshll.u32 [#allocation5], 4
          %s190 = int_to_ptr.vmem [resolvable:$true] %s189
          %195 = dma.hbm_to_vmem [thread:$0]  %s188, 2048, %s190, [#allocation6], 128, 128, 8
        $region16: #{tpu_custom_call.1} parent=11 // pred_fallthru
          _
        // Predicated region
        $region17: #{tpu_custom_call.1} parent=11 // pred_check
          %p196 = pneg %p113
        $region18: #{tpu_custom_call.1} parent=11 // pred_check_branch
          %198 = sbr.rel (%p196) target = $region20
        $region19: #{tpu_custom_call.1} parent=11 // pred_region
          %s199 = smul.u32 16, %s31
          %s201 = ssub.s32 2048, 2048
          %202 = vsyncadd [#allocation6], %s201
          %s203 = smul.addr %s199, 128
          %s204 = scalar_lea.hbm %s2, %s203
          %s205 = sshll.u32 [#allocation7], 4
          %s206 = int_to_ptr.vmem [resolvable:$true] %s205
          %211 = dma.hbm_to_vmem [thread:$0]  %s204, 2048, %s206, [#allocation6], 128, 128, 8
        $region20: #{tpu_custom_call.1} parent=11 // pred_fallthru
          _
      $region12: #{tpu_custom_call.1} parent=5 // pred_fallthru
        _
      %p212 = scmp.lt.s32.totalorder %s21, 2
      // Predicated region
      $region21: #{tpu_custom_call.1} parent=5 // pred_check
        %p213 = pneg %p212
      $region22: #{tpu_custom_call.1} parent=5 // pred_check_branch
        %215 = sbr.rel (%p213) target = $region24
      $region23: #{tpu_custom_call.1} parent=5 // pred_region
        // Predicated region
        $region25: #{tpu_custom_call.1} parent=23 // pred_check
          %p216 = pneg %p55
        $region26: #{tpu_custom_call.1} parent=23 // pred_check_branch
          %218 = sbr.rel (%p216) target = $region28
        $region27: #{tpu_custom_call.1} parent=23 // pred_region
          %s219 = sand.u32 %s45, 1
          %s220 = scalar_lea.sflag [#allocation3], %s219
          %s221 = sand.u32 %s45, 1
          %s222 = smul.addr %s221, 128
          %s223 = scalar_lea.vmem [#allocation2], %s222
          %s224 = smul.u32 16, %s28
          %s226 = ssub.s32 2048, 2048
          %227 = vsyncadd %s220, %s226
          %s228 = sadd.s32 %s29, %s224
          %s229 = smul.addr %s228, 128
          %s230 = scalar_lea.hbm %s0, %s229
          %s231 = sshll.u32 %s223, 4
          %s232 = int_to_ptr.vmem [resolvable:$true] %s231
          %237 = dma.hbm_to_vmem [thread:$0]  %s230, 2048, %s232, %s220, 128, 128, 8
        $region28: #{tpu_custom_call.1} parent=23 // pred_fallthru
          _
      $region24: #{tpu_custom_call.1} parent=5 // pred_fallthru
        _
      %p238 = scmp.le.s32.totalorder 1, %s21
      %p239 = scmp.lt.s32.totalorder %s21, 3
      %p240 = pnand %p238, %p239
      %p241 = pneg %p240
      // Predicated region
      $region29: #{tpu_custom_call.1} parent=5 // pred_check
        _
      $region30: #{tpu_custom_call.1} parent=5 // pred_check_branch
        %243 = sbr.rel (%p240) target = $region32
      $region31: #{tpu_custom_call.1} parent=5 // pred_region
        %s244 = ssub.s32 %s21, 1
        %s245 = sand.u32 %s48, 1
        %s246 = scalar_lea.sflag [#allocation3], %s245
        %s247 = sand.u32 %s48, 1
        %s248 = smul.addr %s247, 128
        %s249 = scalar_lea.vmem [#allocation2], %s248
        // Predicated region
        $region33: #{tpu_custom_call.1} parent=31 // pred_check
          %p250 = pneg %p61
        $region34: #{tpu_custom_call.1} parent=31 // pred_check_branch
          %252 = sbr.rel (%p250) target = $region36
        $region35: #{tpu_custom_call.1} parent=31 // pred_region
          %253 = dma.done %s246, 2048
        $region36: #{tpu_custom_call.1} parent=31 // pred_fallthru
          _
        // Predicated region
        $region37: #{tpu_custom_call.1} parent=31 // pred_check
          %p254 = pneg %p87
        $region38: #{tpu_custom_call.1} parent=31 // pred_check_branch
          %256 = sbr.rel (%p254) target = $region40
        $region39: #{tpu_custom_call.1} parent=31 // pred_region
          %257 = dma.done [#allocation6], 2048
        $region40: #{tpu_custom_call.1} parent=31 // pred_fallthru
          _
        // Predicated region
        $region41: #{tpu_custom_call.1} parent=31 // pred_check
          %p258 = pneg %p113
        $region42: #{tpu_custom_call.1} parent=31 // pred_check_branch
          %260 = sbr.rel (%p258) target = $region44
        $region43: #{tpu_custom_call.1} parent=31 // pred_region
          %261 = dma.done [#allocation6], 2048
        $region44: #{tpu_custom_call.1} parent=31 // pred_fallthru
          _
        %s262 = sand.u32 %s48, 1
        %s263 = scalar_lea.sflag [#allocation3], %s262
        %s264 = sand.u32 %s48, 1
        %s265 = smul.addr %s264, 128
        %s266 = scalar_lea.vmem [#allocation2], %s265
        %p267 = pneg %p61
        %p268 = pneg %p58
        %p269 = pneg %p87
        %p270 = pneg %p84
        %p271 = pneg %p113
        %p272 = pneg %p110
        %p273 = pneg %p139
        %p274 = pneg %p136
        %s275 = sand.u32 %s126, 1
        %s276 = scalar_lea.sflag [#allocation4], %s275
        %s277 = sand.u32 %s126, 1
        %s278 = smul.addr %s277, 128
        %s279 = scalar_lea.vmem [#allocation8], %s278
        %p280 = pneg %p165
        %p281 = pneg %p162
        %s282 = sand.u32 %s152, 1
        %s283 = scalar_lea.sflag [#allocation10], %s282
        %s284 = sand.u32 %s152, 1
        %s285 = smul.addr %s284, 128
        %s286 = scalar_lea.vmem [#allocation9], %s285
        %s287 = smul.u32 16, %s30
        %s288 = smul.u32 16, %s31
        %s289 = smul.u32 16, %s31
        %s290 = smul.u32 16, %s30
        %s291 = smul.u32 16, %s30
        %p292 = scmp.eq.s32.totalorder %s31, 0
        // Predicated region
        $region45: #{tpu_custom_call.1} parent=31 // pred_check
          %p293 = pneg %p292
        $region46: #{tpu_custom_call.1} parent=31 // pred_check_branch
          %295 = sbr.rel (%p293) target = $region48
        $region47: #{tpu_custom_call.1} parent=31 // pred_region
          %296 = vst [vmem:[%s279] sm:$0xff] 0.0
          %297 = vst [vmem:[%s279 + $0x8] sm:$0xff] 0.0
          %298 = vst [vmem:[%s279 + $0x10] sm:$0xff] 0.0
          %299 = vst [vmem:[%s279 + $0x18] sm:$0xff] 0.0
          %300 = vst [vmem:[%s279 + $0x20] sm:$0xff] 0.0
          %301 = vst [vmem:[%s279 + $0x28] sm:$0xff] 0.0
          %302 = vst [vmem:[%s279 + $0x30] sm:$0xff] 0.0
          %303 = vst [vmem:[%s279 + $0x38] sm:$0xff] 0.0
          %304 = vst [vmem:[%s279 + $0x40] sm:$0xff] 0.0
          %305 = vst [vmem:[%s279 + $0x48] sm:$0xff] 0.0
          %306 = vst [vmem:[%s279 + $0x50] sm:$0xff] 0.0
          %307 = vst [vmem:[%s279 + $0x58] sm:$0xff] 0.0
          %308 = vst [vmem:[%s279 + $0x60] sm:$0xff] 0.0
          %309 = vst [vmem:[%s279 + $0x68] sm:$0xff] 0.0
          %310 = vst [vmem:[%s279 + $0x70] sm:$0xff] 0.0
          %311 = vst [vmem:[%s279 + $0x78] sm:$0xff] 0.0
          %312 = vst [vmem:[%s286] sm:$0xff] 0.0
          %313 = vst [vmem:[%s286 + $0x8] sm:$0xff] 0.0
          %314 = vst [vmem:[%s286 + $0x10] sm:$0xff] 0.0
          %315 = vst [vmem:[%s286 + $0x18] sm:$0xff] 0.0
          %316 = vst [vmem:[%s286 + $0x20] sm:$0xff] 0.0
          %317 = vst [vmem:[%s286 + $0x28] sm:$0xff] 0.0
          %318 = vst [vmem:[%s286 + $0x30] sm:$0xff] 0.0
          %319 = vst [vmem:[%s286 + $0x38] sm:$0xff] 0.0
          %320 = vst [vmem:[%s286 + $0x40] sm:$0xff] 0.0
          %321 = vst [vmem:[%s286 + $0x48] sm:$0xff] 0.0
          %322 = vst [vmem:[%s286 + $0x50] sm:$0xff] 0.0
          %323 = vst [vmem:[%s286 + $0x58] sm:$0xff] 0.0
          %324 = vst [vmem:[%s286 + $0x60] sm:$0xff] 0.0
          %325 = vst [vmem:[%s286 + $0x68] sm:$0xff] 0.0
          %326 = vst [vmem:[%s286 + $0x70] sm:$0xff] 0.0
          %327 = vst [vmem:[%s286 + $0x78] sm:$0xff] 0.0
        $region48: #{tpu_custom_call.1} parent=31 // pred_fallthru
          _
        %v328 = vld [vmem:[%s249] sm:$0xff]
        %v329 = vld [vmem:[%s249 + $0x8] sm:$0xff]
        %v330 = vld [vmem:[%s249 + $0x10] sm:$0xff]
        %v331 = vld [vmem:[%s249 + $0x18] sm:$0xff]
        %v332 = vld [vmem:[%s249 + $0x20] sm:$0xff]
        %v333 = vld [vmem:[%s249 + $0x28] sm:$0xff]
        %v334 = vld [vmem:[%s249 + $0x30] sm:$0xff]
        %v335 = vld [vmem:[%s249 + $0x38] sm:$0xff]
        %v336 = vld [vmem:[%s249 + $0x40] sm:$0xff]
        %v337 = vld [vmem:[%s249 + $0x48] sm:$0xff]
        %v338 = vld [vmem:[%s249 + $0x50] sm:$0xff]
        %v339 = vld [vmem:[%s249 + $0x58] sm:$0xff]
        %v340 = vld [vmem:[%s249 + $0x60] sm:$0xff]
        %v341 = vld [vmem:[%s249 + $0x68] sm:$0xff]
        %v342 = vld [vmem:[%s249 + $0x70] sm:$0xff]
        %v343 = vld [vmem:[%s249 + $0x78] sm:$0xff]
        %v344 = vld [vmem:[%s279] sm:$0xff]
        %v345 = vld [vmem:[%s279 + $0x8] sm:$0xff]
        %v346 = vld [vmem:[%s279 + $0x10] sm:$0xff]
        %v347 = vld [vmem:[%s279 + $0x18] sm:$0xff]
        %v348 = vld [vmem:[%s279 + $0x20] sm:$0xff]
        %v349 = vld [vmem:[%s279 + $0x28] sm:$0xff]
        %v350 = vld [vmem:[%s279 + $0x30] sm:$0xff]
        %v351 = vld [vmem:[%s279 + $0x38] sm:$0xff]
        %v352 = vld [vmem:[%s279 + $0x40] sm:$0xff]
        %v353 = vld [vmem:[%s279 + $0x48] sm:$0xff]
        %v354 = vld [vmem:[%s279 + $0x50] sm:$0xff]
        %v355 = vld [vmem:[%s279 + $0x58] sm:$0xff]
        %v356 = vld [vmem:[%s279 + $0x60] sm:$0xff]
        %v357 = vld [vmem:[%s279 + $0x68] sm:$0xff]
        %v358 = vld [vmem:[%s279 + $0x70] sm:$0xff]
        %v359 = vld [vmem:[%s279 + $0x78] sm:$0xff]
        %v360 = vld [vmem:[#allocation5] sm:$0xff]
        %v361 = vld [vmem:[#allocation5 + $0x8] sm:$0xff]
        %v362 = vld [vmem:[#allocation5 + $0x10] sm:$0xff]
        %v363 = vld [vmem:[#allocation5 + $0x18] sm:$0xff]
        %v364 = vld [vmem:[#allocation5 + $0x20] sm:$0xff]
        %v365 = vld [vmem:[#allocation5 + $0x28] sm:$0xff]
        %v366 = vld [vmem:[#allocation5 + $0x30] sm:$0xff]
        %v367 = vld [vmem:[#allocation5 + $0x38] sm:$0xff]
        %v368 = vld [vmem:[#allocation5 + $0x40] sm:$0xff]
        %v369 = vld [vmem:[#allocation5 + $0x48] sm:$0xff]
        %v370 = vld [vmem:[#allocation5 + $0x50] sm:$0xff]
        %v371 = vld [vmem:[#allocation5 + $0x58] sm:$0xff]
        %v372 = vld [vmem:[#allocation5 + $0x60] sm:$0xff]
        %v373 = vld [vmem:[#allocation5 + $0x68] sm:$0xff]
        %v374 = vld [vmem:[#allocation5 + $0x70] sm:$0xff]
        %v375 = vld [vmem:[#allocation5 + $0x78] sm:$0xff]
        %376 = vmatprep.subr.mxu0 0.0
        %v377 = vand.u32 %v360, 4294901760
        %378 = vmatpush1.msra.mxu0 %v377
        %379 = vmatprep.subr.mxu0 0.0
        %v380 = vand.u32 %v361, 4294901760
        %381 = vmatpush1.msra.mxu0 %v380
        %382 = vmatprep.subr.mxu0 0.0
        %v383 = vand.u32 %v362, 4294901760
        %384 = vmatpush1.msra.mxu0 %v383
        %385 = vmatprep.subr.mxu0 0.0
        %v386 = vand.u32 %v363, 4294901760
        %387 = vmatpush1.msra.mxu0 %v386
        %388 = vmatprep.subr.mxu0 0.0
        %v389 = vand.u32 %v364, 4294901760
        %390 = vmatpush1.msra.mxu0 %v389
        %391 = vmatprep.subr.mxu0 0.0
        %v392 = vand.u32 %v365, 4294901760
        %393 = vmatpush1.msra.mxu0 %v392
        %394 = vmatprep.subr.mxu0 0.0
        %v395 = vand.u32 %v366, 4294901760
        %396 = vmatpush1.msra.mxu0 %v395
        %397 = vmatprep.subr.mxu0 0.0
        %v398 = vand.u32 %v367, 4294901760
        %399 = vmatpush1.msra.mxu0 %v398
        %400 = vmatprep.subr.mxu0 0.0
        %v401 = vand.u32 %v368, 4294901760
        %402 = vmatpush1.msra.mxu0 %v401
        %403 = vmatprep.subr.mxu0 0.0
        %v404 = vand.u32 %v369, 4294901760
        %405 = vmatpush1.msra.mxu0 %v404
        %406 = vmatprep.subr.mxu0 0.0
        %v407 = vand.u32 %v370, 4294901760
        %408 = vmatpush1.msra.mxu0 %v407
        %409 = vmatprep.subr.mxu0 0.0
        %v410 = vand.u32 %v371, 4294901760
        %411 = vmatpush1.msra.mxu0 %v410
        %412 = vmatprep.subr.mxu0 0.0
        %v413 = vand.u32 %v372, 4294901760
        %414 = vmatpush1.msra.mxu0 %v413
        %415 = vmatprep.subr.mxu0 0.0
        %v416 = vand.u32 %v373, 4294901760
        %417 = vmatpush1.msra.mxu0 %v416
        %418 = vmatprep.subr.mxu0 0.0
        %v419 = vand.u32 %v374, 4294901760
        %420 = vmatpush1.msra.mxu0 %v419
        %421 = vmatprep.subr.mxu0 0.0
        %v422 = vand.u32 %v375, 4294901760
        %423 = vmatpush1.msra.mxu0 %v422
        %424 = vmatprep.subr.mxu0 0.0
        %425 = vmatpush1.msra.mxu0 0.0
        %426 = vmatprep.subr.mxu0 0.0
        %427 = vmatpush1.msra.mxu0 0.0
        %428 = vmatprep.subr.mxu0 0.0
        %429 = vmatpush1.msra.mxu0 0.0
        %430 = vmatprep.subr.mxu0 0.0
        %431 = vmatpush1.msra.mxu0 0.0
        %432 = vmatprep.subr.mxu0 0.0
        %433 = vmatpush1.msra.mxu0 0.0
        %434 = vmatprep.subr.mxu0 0.0
        %435 = vmatpush1.msra.mxu0 0.0
        %436 = vmatprep.subr.mxu0 0.0
        %437 = vmatpush1.msra.mxu0 0.0
        %438 = vmatprep.subr.mxu0 0.0
        %439 = vmatpush1.msra.mxu0 0.0
        %440 = vmatprep.subr.mxu0 0.0
        %441 = vmatpush1.msra.mxu0 0.0
        %442 = vmatprep.subr.mxu0 0.0
        %443 = vmatpush1.msra.mxu0 0.0
        %444 = vmatprep.subr.mxu0 0.0
        %445 = vmatpush1.msra.mxu0 0.0
        %446 = vmatprep.subr.mxu0 0.0
        %447 = vmatpush1.msra.mxu0 0.0
        %448 = vmatprep.subr.mxu0 0.0
        %449 = vmatpush1.msra.mxu0 0.0
        %450 = vmatprep.subr.mxu0 0.0
        %451 = vmatpush1.msra.mxu0 0.0
        %452 = vmatprep.subr.mxu0 0.0
        %453 = vmatpush1.msra.mxu0 0.0
        %454 = vmatprep.subr.mxu0 0.0
        %455 = vmatpush1.msra.mxu0 0.0
        %456 = vmatprep.mubr.f32.mxu0 0.0
        %v457 = vand.u32 %v328, 4294901760
        %v458 = vsub.f32 %v328, %v457
        %v459 = vand.u32 %v458, 4294901760
        %v460 = vsub.f32 %v458, %v459
        %v461 = vand.u32 %v460, 4294901760
        %462 = vmatmul.mubr.f32.gmra.mrb[0].mxu0 %v461
        %v463 = vpop.f32.mrb[0].mxu0
        %v464 = vadd.f32 0.0, %v463
        %v465 = vpop.f32.mrb[0].mxu0
        %466 = vmatprep.mubr.f32.mxu0 0.0
        %v467 = vand.u32 %v329, 4294901760
        %v468 = vsub.f32 %v329, %v467
        %v469 = vand.u32 %v468, 4294901760
        %v470 = vsub.f32 %v468, %v469
        %v471 = vand.u32 %v470, 4294901760
        %472 = vmatmul.mubr.f32.gmra.mrb[0].mxu0 %v471
        %v473 = vpop.f32.mrb[0].mxu0
        %v474 = vadd.f32 0.0, %v473
        %v475 = vpop.f32.mrb[0].mxu0
        %476 = vmatprep.mubr.f32.mxu0 0.0
        %v477 = vand.u32 %v330, 4294901760
        %v478 = vsub.f32 %v330, %v477
        %v479 = vand.u32 %v478, 4294901760
        %v480 = vsub.f32 %v478, %v479
        %v481 = vand.u32 %v480, 4294901760
        %482 = vmatmul.mubr.f32.gmra.mrb[0].mxu0 %v481
        %v483 = vpop.f32.mrb[0].mxu0
        %v484 = vadd.f32 0.0, %v483
        %v485 = vpop.f32.mrb[0].mxu0
        %486 = vmatprep.mubr.f32.mxu0 0.0
        %v487 = vand.u32 %v331, 4294901760
        %v488 = vsub.f32 %v331, %v487
        %v489 = vand.u32 %v488, 4294901760
        %v490 = vsub.f32 %v488, %v489
        %v491 = vand.u32 %v490, 4294901760
        %492 = vmatmul.mubr.f32.gmra.mrb[0].mxu0 %v491
        %v493 = vpop.f32.mrb[0].mxu0
        %v494 = vadd.f32 0.0, %v493
        %v495 = vpop.f32.mrb[0].mxu0
        %496 = vmatprep.mubr.f32.mxu0 0.0
        %v497 = vand.u32 %v332, 4294901760
        %v498 = vsub.f32 %v332, %v497
        %v499 = vand.u32 %v498, 4294901760
        %v500 = vsub.f32 %v498, %v499
        %v501 = vand.u32 %v500, 4294901760
        %502 = vmatmul.mubr.f32.gmra.mrb[0].mxu0 %v501
        %v503 = vpop.f32.mrb[0].mxu0
        %v504 = vadd.f32 0.0, %v503
        %v505 = vpop.f32.mrb[0].mxu0
        %506 = vmatprep.mubr.f32.mxu0 0.0
        %v507 = vand.u32 %v333, 4294901760
        %v508 = vsub.f32 %v333, %v507
        %v509 = vand.u32 %v508, 4294901760
        %v510 = vsub.f32 %v508, %v509
        %v511 = vand.u32 %v510, 4294901760
        %512 = vmatmul.mubr.f32.gmra.mrb[0].mxu0 %v511
        %v513 = vpop.f32.mrb[0].mxu0
        %v514 = vadd.f32 0.0, %v513
        %v515 = vpop.f32.mrb[0].mxu0
        %516 = vmatprep.mubr.f32.mxu0 0.0
        %v517 = vand.u32 %v334, 4294901760
        %v518 = vsub.f32 %v334, %v517
        %v519 = vand.u32 %v518, 4294901760
        %v520 = vsub.f32 %v518, %v519
        %v521 = vand.u32 %v520, 4294901760
        %522 = vmatmul.mubr.f32.gmra.mrb[0].mxu0 %v521
        %v523 = vpop.f32.mrb[0].mxu0
        %v524 = vadd.f32 0.0, %v523
        %v525 = vpop.f32.mrb[0].mxu0
        %526 = vmatprep.mubr.f32.mxu0 0.0
        %v527 = vand.u32 %v335, 4294901760
        %v528 = vsub.f32 %v335, %v527
        %v529 = vand.u32 %v528, 4294901760
        %v530 = vsub.f32 %v528, %v529
        %v531 = vand.u32 %v530, 4294901760
        %532 = vmatmul.mubr.f32.gmra.mrb[0].mxu0 %v531
        %v533 = vpop.f32.mrb[0].mxu0
        %v534 = vadd.f32 0.0, %v533
        %v535 = vpop.f32.mrb[0].mxu0
        %536 = vmatprep.mubr.f32.mxu0 0.0
        %v537 = vand.u32 %v336, 4294901760
        %v538 = vsub.f32 %v336, %v537
        %v539 = vand.u32 %v538, 4294901760
        %v540 = vsub.f32 %v538, %v539
        %v541 = vand.u32 %v540, 4294901760
        %542 = vmatmul.mubr.f32.gmra.mrb[0].mxu0 %v541
        %v543 = vpop.f32.mrb[0].mxu0
        %v544 = vadd.f32 0.0, %v543
        %v545 = vpop.f32.mrb[0].mxu0
        %546 = vmatprep.mubr.f32.mxu0 0.0
        %v547 = vand.u32 %v337, 4294901760
        %v548 = vsub.f32 %v337, %v547
        %v549 = vand.u32 %v548, 4294901760
        %v550 = vsub.f32 %v548, %v549
        %v551 = vand.u32 %v550, 4294901760
        %552 = vmatmul.mubr.f32.gmra.mrb[0].mxu0 %v551
        %v553 = vpop.f32.mrb[0].mxu0
        %v554 = vadd.f32 0.0, %v553
        %v555 = vpop.f32.mrb[0].mxu0
        %556 = vmatprep.mubr.f32.mxu0 0.0
        %v557 = vand.u32 %v338, 4294901760
        %v558 = vsub.f32 %v338, %v557
        %v559 = vand.u32 %v558, 4294901760
        %v560 = vsub.f32 %v558, %v559
        %v561 = vand.u32 %v560, 4294901760
        %562 = vmatmul.mubr.f32.gmra.mrb[0].mxu0 %v561
        %v563 = vpop.f32.mrb[0].mxu0
        %v564 = vadd.f32 0.0, %v563
        %v565 = vpop.f32.mrb[0].mxu0
        %566 = vmatprep.mubr.f32.mxu0 0.0
        %v567 = vand.u32 %v339, 4294901760
        %v568 = vsub.f32 %v339, %v567
        %v569 = vand.u32 %v568, 4294901760
        %v570 = vsub.f32 %v568, %v569
        %v571 = vand.u32 %v570, 4294901760
        %572 = vmatmul.mubr.f32.gmra.mrb[0].mxu0 %v571
        %v573 = vpop.f32.mrb[0].mxu0
        %v574 = vadd.f32 0.0, %v573
        %v575 = vpop.f32.mrb[0].mxu0
        %576 = vmatprep.mubr.f32.mxu0 0.0
        %v577 = vand.u32 %v340, 4294901760
        %v578 = vsub.f32 %v340, %v577
        %v579 = vand.u32 %v578, 4294901760
        %v580 = vsub.f32 %v578, %v579
        %v581 = vand.u32 %v580, 4294901760
        %582 = vmatmul.mubr.f32.gmra.mrb[0].mxu0 %v581
        %v583 = vpop.f32.mrb[0].mxu0
        %v584 = vadd.f32 0.0, %v583
        %v585 = vpop.f32.mrb[0].mxu0
        %586 = vmatprep.mubr.f32.mxu0 0.0
        %v587 = vand.u32 %v341, 4294901760
        %v588 = vsub.f32 %v341, %v587
        %v589 = vand.u32 %v588, 4294901760
        %v590 = vsub.f32 %v588, %v589
        %v591 = vand.u32 %v590, 4294901760
        %592 = vmatmul.mubr.f32.gmra.mrb[0].mxu0 %v591
        %v593 = vpop.f32.mrb[0].mxu0
        %v594 = vadd.f32 0.0, %v593
        %v595 = vpop.f32.mrb[0].mxu0
        %596 = vmatprep.mubr.f32.mxu0 0.0
        %v597 = vand.u32 %v342, 4294901760
        %v598 = vsub.f32 %v342, %v597
        %v599 = vand.u32 %v598, 4294901760
        %v600 = vsub.f32 %v598, %v599
        %v601 = vand.u32 %v600, 4294901760
        %602 = vmatmul.mubr.f32.gmra.mrb[0].mxu0 %v601
        %v603 = vpop.f32.mrb[0].mxu0
        %v604 = vadd.f32 0.0, %v603
        %v605 = vpop.f32.mrb[0].mxu0
        %606 = vmatprep.mubr.f32.mxu0 0.0
        %v607 = vand.u32 %v343, 4294901760
        %v608 = vsub.f32 %v343, %v607
        %v609 = vand.u32 %v608, 4294901760
        %v610 = vsub.f32 %v608, %v609
        %v611 = vand.u32 %v610, 4294901760
        %612 = vmatmul.mubr.f32.gmra.mrb[0].mxu0 %v611
        %v613 = vpop.f32.mrb[0].mxu0
        %v614 = vadd.f32 0.0, %v613
        %v615 = vpop.f32.mrb[0].mxu0
        %616 = vdwg.mxu0
        %617 = vmatprep.subr.mxu0 0.0
        %v618 = vand.u32 %v360, 4294901760
        %v619 = vsub.f32 %v360, %v618
        %v620 = vand.u32 %v619, 4294901760
        %v621 = vsub.f32 %v619, %v620
        %v622 = vand.u32 %v621, 4294901760
        %623 = vmatpush1.msra.mxu0 %v622
        %624 = vmatprep.subr.mxu0 0.0
        %v625 = vand.u32 %v361, 4294901760
        %v626 = vsub.f32 %v361, %v625
        %v627 = vand.u32 %v626, 4294901760
        %v628 = vsub.f32 %v626, %v627
        %v629 = vand.u32 %v628, 4294901760
        %630 = vmatpush1.msra.mxu0 %v629
        %631 = vmatprep.subr.mxu0 0.0
        %v632 = vand.u32 %v362, 4294901760
        %v633 = vsub.f32 %v362, %v632
        %v634 = vand.u32 %v633, 4294901760
        %v635 = vsub.f32 %v633, %v634
        %v636 = vand.u32 %v635, 4294901760
        %637 = vmatpush1.msra.mxu0 %v636
        %638 = vmatprep.subr.mxu0 0.0
        %v639 = vand.u32 %v363, 4294901760
        %v640 = vsub.f32 %v363, %v639
        %v641 = vand.u32 %v640, 4294901760
        %v642 = vsub.f32 %v640, %v641
        %v643 = vand.u32 %v642, 4294901760
        %644 = vmatpush1.msra.mxu0 %v643
        %645 = vmatprep.subr.mxu0 0.0
        %v646 = vand.u32 %v364, 4294901760
        %v647 = vsub.f32 %v364, %v646
        %v648 = vand.u32 %v647, 4294901760
        %v649 = vsub.f32 %v647, %v648
        %v650 = vand.u32 %v649, 4294901760
        %651 = vmatpush1.msra.mxu0 %v650
        %652 = vmatprep.subr.mxu0 0.0
        %v653 = vand.u32 %v365, 4294901760
        %v654 = vsub.f32 %v365, %v653
        %v655 = vand.u32 %v654, 4294901760
        %v656 = vsub.f32 %v654, %v655
        %v657 = vand.u32 %v656, 4294901760
        %658 = vmatpush1.msra.mxu0 %v657
        %659 = vmatprep.subr.mxu0 0.0
        %v660 = vand.u32 %v366, 4294901760
        %v661 = vsub.f32 %v366, %v660
        %v662 = vand.u32 %v661, 4294901760
        %v663 = vsub.f32 %v661, %v662
        %v664 = vand.u32 %v663, 4294901760
        %665 = vmatpush1.msra.mxu0 %v664
        %666 = vmatprep.subr.mxu0 0.0
        %v667 = vand.u32 %v367, 4294901760
        %v668 = vsub.f32 %v367, %v667
        %v669 = vand.u32 %v668, 4294901760
        %v670 = vsub.f32 %v668, %v669
        %v671 = vand.u32 %v670, 4294901760
        %672 = vmatpush1.msra.mxu0 %v671
        %673 = vmatprep.subr.mxu0 0.0
        %v674 = vand.u32 %v368, 4294901760
        %v675 = vsub.f32 %v368, %v674
        %v676 = vand.u32 %v675, 4294901760
        %v677 = vsub.f32 %v675, %v676
        %v678 = vand.u32 %v677, 4294901760
        %679 = vmatpush1.msra.mxu0 %v678
        %680 = vmatprep.subr.mxu0 0.0
        %v681 = vand.u32 %v369, 4294901760
        %v682 = vsub.f32 %v369, %v681
        %v683 = vand.u32 %v682, 4294901760
        %v684 = vsub.f32 %v682, %v683
        %v685 = vand.u32 %v684, 4294901760
        %686 = vmatpush1.msra.mxu0 %v685
        %687 = vmatprep.subr.mxu0 0.0
        %v688 = vand.u32 %v370, 4294901760
        %v689 = vsub.f32 %v370, %v688
        %v690 = vand.u32 %v689, 4294901760
        %v691 = vsub.f32 %v689, %v690
        %v692 = vand.u32 %v691, 4294901760
        %693 = vmatpush1.msra.mxu0 %v692
        %694 = vmatprep.subr.mxu0 0.0
        %v695 = vand.u32 %v371, 4294901760
        %v696 = vsub.f32 %v371, %v695
        %v697 = vand.u32 %v696, 4294901760
        %v698 = vsub.f32 %v696, %v697
        %v699 = vand.u32 %v698, 4294901760
        %700 = vmatpush1.msra.mxu0 %v699
        %701 = vmatprep.subr.mxu0 0.0
        %v702 = vand.u32 %v372, 4294901760
        %v703 = vsub.f32 %v372, %v702
        %v704 = vand.u32 %v703, 4294901760
        %v705 = vsub.f32 %v703, %v704
        %v706 = vand.u32 %v705, 4294901760
        %707 = vmatpush1.msra.mxu0 %v706
        %708 = vmatprep.subr.mxu0 0.0
        %v709 = vand.u32 %v373, 4294901760
        %v710 = vsub.f32 %v373, %v709
        %v711 = vand.u32 %v710, 4294901760
        %v712 = vsub.f32 %v710, %v711
        %v713 = vand.u32 %v712, 4294901760
        %714 = vmatpush1.msra.mxu0 %v713
        %715 = vmatprep.subr.mxu0 0.0
        %v716 = vand.u32 %v374, 4294901760
        %v717 = vsub.f32 %v374, %v716
        %v718 = vand.u32 %v717, 4294901760
        %v719 = vsub.f32 %v717, %v718
        %v720 = vand.u32 %v719, 4294901760
        %721 = vmatpush1.msra.mxu0 %v720
        %722 = vmatprep.subr.mxu0 0.0
        %v723 = vand.u32 %v375, 4294901760
        %v724 = vsub.f32 %v375, %v723
        %v725 = vand.u32 %v724, 4294901760
        %v726 = vsub.f32 %v724, %v725
        %v727 = vand.u32 %v726, 4294901760
        %728 = vmatpush1.msra.mxu0 %v727
        %729 = vmatprep.subr.mxu0 0.0
        %730 = vmatpush1.msra.mxu0 0.0
        %731 = vmatprep.subr.mxu0 0.0
        %732 = vmatpush1.msra.mxu0 0.0
        %733 = vmatprep.subr.mxu0 0.0
        %734 = vmatpush1.msra.mxu0 0.0
        %735 = vmatprep.subr.mxu0 0.0
        %736 = vmatpush1.msra.mxu0 0.0
        %737 = vmatprep.subr.mxu0 0.0
        %738 = vmatpush1.msra.mxu0 0.0
        %739 = vmatprep.subr.mxu0 0.0
        %740 = vmatpush1.msra.mxu0 0.0
        %741 = vmatprep.subr.mxu0 0.0
        %742 = vmatpush1.msra.mxu0 0.0
        %743 = vmatprep.subr.mxu0 0.0
        %744 = vmatpush1.msra.mxu0 0.0
        %745 = vmatprep.subr.mxu0 0.0
        %746 = vmatpush1.msra.mxu0 0.0
        %747 = vmatprep.subr.mxu0 0.0
        %748 = vmatpush1.msra.mxu0 0.0
        %749 = vmatprep.subr.mxu0 0.0
        %750 = vmatpush1.msra.mxu0 0.0
        %751 = vmatprep.subr.mxu0 0.0
        %752 = vmatpush1.msra.mxu0 0.0
        %753 = vmatprep.subr.mxu0 0.0
        %754 = vmatpush1.msra.mxu0 0.0
        %755 = vmatprep.subr.mxu0 0.0
        %756 = vmatpush1.msra.mxu0 0.0
        %757 = vmatprep.subr.mxu0 0.0
        %758 = vmatpush1.msra.mxu0 0.0
        %759 = vmatprep.subr.mxu0 0.0
        %760 = vmatpush1.msra.mxu0 0.0
        %761 = vmatprep.mubr.f32.mxu0 0.0
        %v762 = vand.u32 %v328, 4294901760
        %763 = vmatmul.mubr.f32.gmra.mrb[0].mxu0 %v762
        %v764 = vpop.f32.mrb[0].mxu0
        %v765 = vadd.f32 %v464, %v764
        %v766 = vpop.f32.mrb[0].mxu0
        %767 = vmatprep.mubr.f32.mxu0 0.0
        %v768 = vand.u32 %v329, 4294901760
        %769 = vmatmul.mubr.f32.gmra.mrb[0].mxu0 %v768
        %v770 = vpop.f32.mrb[0].mxu0
        %v771 = vadd.f32 %v474, %v770
        %v772 = vpop.f32.mrb[0].mxu0
        %773 = vmatprep.mubr.f32.mxu0 0.0
        %v774 = vand.u32 %v330, 4294901760
        %775 = vmatmul.mubr.f32.gmra.mrb[0].mxu0 %v774
        %v776 = vpop.f32.mrb[0].mxu0
        %v777 = vadd.f32 %v484, %v776
        %v778 = vpop.f32.mrb[0].mxu0
        %779 = vmatprep.mubr.f32.mxu0 0.0
        %v780 = vand.u32 %v331, 4294901760
        %781 = vmatmul.mubr.f32.gmra.mrb[0].mxu0 %v780
        %v782 = vpop.f32.mrb[0].mxu0
        %v783 = vadd.f32 %v494, %v782
        %v784 = vpop.f32.mrb[0].mxu0
        %785 = vmatprep.mubr.f32.mxu0 0.0
        %v786 = vand.u32 %v332, 4294901760
        %787 = vmatmul.mubr.f32.gmra.mrb[0].mxu0 %v786
        %v788 = vpop.f32.mrb[0].mxu0
        %v789 = vadd.f32 %v504, %v788
        %v790 = vpop.f32.mrb[0].mxu0
        %791 = vmatprep.mubr.f32.mxu0 0.0
        %v792 = vand.u32 %v333, 4294901760
        %793 = vmatmul.mubr.f32.gmra.mrb[0].mxu0 %v792
        %v794 = vpop.f32.mrb[0].mxu0
        %v795 = vadd.f32 %v514, %v794
        %v796 = vpop.f32.mrb[0].mxu0
        %797 = vmatprep.mubr.f32.mxu0 0.0
        %v798 = vand.u32 %v334, 4294901760
        %799 = vmatmul.mubr.f32.gmra.mrb[0].mxu0 %v798
        %v800 = vpop.f32.mrb[0].mxu0
        %v801 = vadd.f32 %v524, %v800
        %v802 = vpop.f32.mrb[0].mxu0
        %803 = vmatprep.mubr.f32.mxu0 0.0
        %v804 = vand.u32 %v335, 4294901760
        %805 = vmatmul.mubr.f32.gmra.mrb[0].mxu0 %v804
        %v806 = vpop.f32.mrb[0].mxu0
        %v807 = vadd.f32 %v534, %v806
        %v808 = vpop.f32.mrb[0].mxu0
        %809 = vmatprep.mubr.f32.mxu0 0.0
        %v810 = vand.u32 %v336, 4294901760
        %811 = vmatmul.mubr.f32.gmra.mrb[0].mxu0 %v810
        %v812 = vpop.f32.mrb[0].mxu0
        %v813 = vadd.f32 %v544, %v812
        %v814 = vpop.f32.mrb[0].mxu0
        %815 = vmatprep.mubr.f32.mxu0 0.0
        %v816 = vand.u32 %v337, 4294901760
        %817 = vmatmul.mubr.f32.gmra.mrb[0].mxu0 %v816
        %v818 = vpop.f32.mrb[0].mxu0
        %v819 = vadd.f32 %v554, %v818
        %v820 = vpop.f32.mrb[0].mxu0
        %821 = vmatprep.mubr.f32.mxu0 0.0
        %v822 = vand.u32 %v338, 4294901760
        %823 = vmatmul.mubr.f32.gmra.mrb[0].mxu0 %v822
        %v824 = vpop.f32.mrb[0].mxu0
        %v825 = vadd.f32 %v564, %v824
        %v826 = vpop.f32.mrb[0].mxu0
        %827 = vmatprep.mubr.f32.mxu0 0.0
        %v828 = vand.u32 %v339, 4294901760
        %829 = vmatmul.mubr.f32.gmra.mrb[0].mxu0 %v828
        %v830 = vpop.f32.mrb[0].mxu0
        %v831 = vadd.f32 %v574, %v830
        %v832 = vpop.f32.mrb[0].mxu0
        %833 = vmatprep.mubr.f32.mxu0 0.0
        %v834 = vand.u32 %v340, 4294901760
        %835 = vmatmul.mubr.f32.gmra.mrb[0].mxu0 %v834
        %v836 = vpop.f32.mrb[0].mxu0
        %v837 = vadd.f32 %v584, %v836
        %v838 = vpop.f32.mrb[0].mxu0
        %839 = vmatprep.mubr.f32.mxu0 0.0
        %v840 = vand.u32 %v341, 4294901760
        %841 = vmatmul.mubr.f32.gmra.mrb[0].mxu0 %v840
        %v842 = vpop.f32.mrb[0].mxu0
        %v843 = vadd.f32 %v594, %v842
        %v844 = vpop.f32.mrb[0].mxu0
        %845 = vmatprep.mubr.f32.mxu0 0.0
        %v846 = vand.u32 %v342, 4294901760
        %847 = vmatmul.mubr.f32.gmra.mrb[0].mxu0 %v846
        %v848 = vpop.f32.mrb[0].mxu0
        %v849 = vadd.f32 %v604, %v848
        %v850 = vpop.f32.mrb[0].mxu0
        %851 = vmatprep.mubr.f32.mxu0 0.0
        %v852 = vand.u32 %v343, 4294901760
        %853 = vmatmul.mubr.f32.gmra.mrb[0].mxu0 %v852
        %v854 = vpop.f32.mrb[0].mxu0
        %v855 = vadd.f32 %v614, %v854
        %v856 = vpop.f32.mrb[0].mxu0
        %857 = vdwg.mxu0
        %858 = vmatprep.subr.mxu0 0.0
        %v859 = vand.u32 %v360, 4294901760
        %v860 = vsub.f32 %v360, %v859
        %861 = vmatpush1.msra.mxu0 %v860
        %862 = vmatprep.subr.mxu0 0.0
        %v863 = vand.u32 %v361, 4294901760
        %v864 = vsub.f32 %v361, %v863
        %865 = vmatpush1.msra.mxu0 %v864
        %866 = vmatprep.subr.mxu0 0.0
        %v867 = vand.u32 %v362, 4294901760
        %v868 = vsub.f32 %v362, %v867
        %869 = vmatpush1.msra.mxu0 %v868
        %870 = vmatprep.subr.mxu0 0.0
        %v871 = vand.u32 %v363, 4294901760
        %v872 = vsub.f32 %v363, %v871
        %873 = vmatpush1.msra.mxu0 %v872
        %874 = vmatprep.subr.mxu0 0.0
        %v875 = vand.u32 %v364, 4294901760
        %v876 = vsub.f32 %v364, %v875
        %877 = vmatpush1.msra.mxu0 %v876
        %878 = vmatprep.subr.mxu0 0.0
        %v879 = vand.u32 %v365, 4294901760
        %v880 = vsub.f32 %v365, %v879
        %881 = vmatpush1.msra.mxu0 %v880
        %882 = vmatprep.subr.mxu0 0.0
        %v883 = vand.u32 %v366, 4294901760
        %v884 = vsub.f32 %v366, %v883
        %885 = vmatpush1.msra.mxu0 %v884
        %886 = vmatprep.subr.mxu0 0.0
        %v887 = vand.u32 %v367, 4294901760
        %v888 = vsub.f32 %v367, %v887
        %889 = vmatpush1.msra.mxu0 %v888
        %890 = vmatprep.subr.mxu0 0.0
        %v891 = vand.u32 %v368, 4294901760
        %v892 = vsub.f32 %v368, %v891
        %893 = vmatpush1.msra.mxu0 %v892
        %894 = vmatprep.subr.mxu0 0.0
        %v895 = vand.u32 %v369, 4294901760
        %v896 = vsub.f32 %v369, %v895
        %897 = vmatpush1.msra.mxu0 %v896
        %898 = vmatprep.subr.mxu0 0.0
        %v899 = vand.u32 %v370, 4294901760
        %v900 = vsub.f32 %v370, %v899
        %901 = vmatpush1.msra.mxu0 %v900
        %902 = vmatprep.subr.mxu0 0.0
        %v903 = vand.u32 %v371, 4294901760
        %v904 = vsub.f32 %v371, %v903
        %905 = vmatpush1.msra.mxu0 %v904
        %906 = vmatprep.subr.mxu0 0.0
        %v907 = vand.u32 %v372, 4294901760
        %v908 = vsub.f32 %v372, %v907
        %909 = vmatpush1.msra.mxu0 %v908
        %910 = vmatprep.subr.mxu0 0.0
        %v911 = vand.u32 %v373, 4294901760
        %v912 = vsub.f32 %v373, %v911
        %913 = vmatpush1.msra.mxu0 %v912
        %914 = vmatprep.subr.mxu0 0.0
        %v915 = vand.u32 %v374, 4294901760
        %v916 = vsub.f32 %v374, %v915
        %917 = vmatpush1.msra.mxu0 %v916
        %918 = vmatprep.subr.mxu0 0.0
        %v919 = vand.u32 %v375, 4294901760
        %v920 = vsub.f32 %v375, %v919
        %921 = vmatpush1.msra.mxu0 %v920
        %922 = vmatprep.subr.mxu0 0.0
        %923 = vmatpush1.msra.mxu0 0.0
        %924 = vmatprep.subr.mxu0 0.0
        %925 = vmatpush1.msra.mxu0 0.0
        %926 = vmatprep.subr.mxu0 0.0
        %927 = vmatpush1.msra.mxu0 0.0
        %928 = vmatprep.subr.mxu0 0.0
        %929 = vmatpush1.msra.mxu0 0.0
        %930 = vmatprep.subr.mxu0 0.0
        %931 = vmatpush1.msra.mxu0 0.0
        %932 = vmatprep.subr.mxu0 0.0
        %933 = vmatpush1.msra.mxu0 0.0
        %934 = vmatprep.subr.mxu0 0.0
        %935 = vmatpush1.msra.mxu0 0.0
        %936 = vmatprep.subr.mxu0 0.0
        %937 = vmatpush1.msra.mxu0 0.0
        %938 = vmatprep.subr.mxu0 0.0
        %939 = vmatpush1.msra.mxu0 0.0
        %940 = vmatprep.subr.mxu0 0.0
        %941 = vmatpush1.msra.mxu0 0.0
        %942 = vmatprep.subr.mxu0 0.0
        %943 = vmatpush1.msra.mxu0 0.0
        %944 = vmatprep.subr.mxu0 0.0
        %945 = vmatpush1.msra.mxu0 0.0
        %946 = vmatprep.subr.mxu0 0.0
        %947 = vmatpush1.msra.mxu0 0.0
        %948 = vmatprep.subr.mxu0 0.0
        %949 = vmatpush1.msra.mxu0 0.0
        %950 = vmatprep.subr.mxu0 0.0
        %951 = vmatpush1.msra.mxu0 0.0
        %952 = vmatprep.subr.mxu0 0.0
        %953 = vmatpush1.msra.mxu0 0.0
        %954 = vmatprep.mubr.f32.mxu0 0.0
        %v955 = vand.u32 %v328, 4294901760
        %v956 = vsub.f32 %v328, %v955
        %957 = vmatmul.mubr.f32.gmra.mrb[0].mxu0 %v956
        %v958 = vpop.f32.mrb[0].mxu0
        %v959 = vadd.f32 %v765, %v958
        %v960 = vpop.f32.mrb[0].mxu0
        %961 = vmatprep.mubr.f32.mxu0 0.0
        %v962 = vand.u32 %v329, 4294901760
        %v963 = vsub.f32 %v329, %v962
        %964 = vmatmul.mubr.f32.gmra.mrb[0].mxu0 %v963
        %v965 = vpop.f32.mrb[0].mxu0
        %v966 = vadd.f32 %v771, %v965
        %v967 = vpop.f32.mrb[0].mxu0
        %968 = vmatprep.mubr.f32.mxu0 0.0
        %v969 = vand.u32 %v330, 4294901760
        %v970 = vsub.f32 %v330, %v969
        %971 = vmatmul.mubr.f32.gmra.mrb[0].mxu0 %v970
        %v972 = vpop.f32.mrb[0].mxu0
        %v973 = vadd.f32 %v777, %v972
        %v974 = vpop.f32.mrb[0].mxu0
        %975 = vmatprep.mubr.f32.mxu0 0.0
        %v976 = vand.u32 %v331, 4294901760
        %v977 = vsub.f32 %v331, %v976
        %978 = vmatmul.mubr.f32.gmra.mrb[0].mxu0 %v977
        %v979 = vpop.f32.mrb[0].mxu0
        %v980 = vadd.f32 %v783, %v979
        %v981 = vpop.f32.mrb[0].mxu0
        %982 = vmatprep.mubr.f32.mxu0 0.0
        %v983 = vand.u32 %v332, 4294901760
        %v984 = vsub.f32 %v332, %v983
        %985 = vmatmul.mubr.f32.gmra.mrb[0].mxu0 %v984
        %v986 = vpop.f32.mrb[0].mxu0
        %v987 = vadd.f32 %v789, %v986
        %v988 = vpop.f32.mrb[0].mxu0
        %989 = vmatprep.mubr.f32.mxu0 0.0
        %v990 = vand.u32 %v333, 4294901760
        %v991 = vsub.f32 %v333, %v990
        %992 = vmatmul.mubr.f32.gmra.mrb[0].mxu0 %v991
        %v993 = vpop.f32.mrb[0].mxu0
        %v994 = vadd.f32 %v795, %v993
        %v995 = vpop.f32.mrb[0].mxu0
        %996 = vmatprep.mubr.f32.mxu0 0.0
        %v997 = vand.u32 %v334, 4294901760
        %v998 = vsub.f32 %v334, %v997
        %999 = vmatmul.mubr.f32.gmra.mrb[0].mxu0 %v998
        %v1000 = vpop.f32.mrb[0].mxu0
        %v1001 = vadd.f32 %v801, %v1000
        %v1002 = vpop.f32.mrb[0].mxu0
        %1003 = vmatprep.mubr.f32.mxu0 0.0
        %v1004 = vand.u32 %v335, 4294901760
        %v1005 = vsub.f32 %v335, %v1004
        %1006 = vmatmul.mubr.f32.gmra.mrb[0].mxu0 %v1005
        %v1007 = vpop.f32.mrb[0].mxu0
        %v1008 = vadd.f32 %v807, %v1007
        %v1009 = vpop.f32.mrb[0].mxu0
        %1010 = vmatprep.mubr.f32.mxu0 0.0
        %v1011 = vand.u32 %v336, 4294901760
        %v1012 = vsub.f32 %v336, %v1011
        %1013 = vmatmul.mubr.f32.gmra.mrb[0].mxu0 %v1012
        %v1014 = vpop.f32.mrb[0].mxu0
        %v1015 = vadd.f32 %v813, %v1014
        %v1016 = vpop.f32.mrb[0].mxu0
        %1017 = vmatprep.mubr.f32.mxu0 0.0
        %v1018 = vand.u32 %v337, 4294901760
        %v1019 = vsub.f32 %v337, %v1018
        %1020 = vmatmul.mubr.f32.gmra.mrb[0].mxu0 %v1019
        %v1021 = vpop.f32.mrb[0].mxu0
        %v1022 = vadd.f32 %v819, %v1021
        %v1023 = vpop.f32.mrb[0].mxu0
        %1024 = vmatprep.mubr.f32.mxu0 0.0
        %v1025 = vand.u32 %v338, 4294901760
        %v1026 = vsub.f32 %v338, %v1025
        %1027 = vmatmul.mubr.f32.gmra.mrb[0].mxu0 %v1026
        %v1028 = vpop.f32.mrb[0].mxu0
        %v1029 = vadd.f32 %v825, %v1028
        %v1030 = vpop.f32.mrb[0].mxu0
        %1031 = vmatprep.mubr.f32.mxu0 0.0
        %v1032 = vand.u32 %v339, 4294901760
        %v1033 = vsub.f32 %v339, %v1032
        %1034 = vmatmul.mubr.f32.gmra.mrb[0].mxu0 %v1033
        %v1035 = vpop.f32.mrb[0].mxu0
        %v1036 = vadd.f32 %v831, %v1035
        %v1037 = vpop.f32.mrb[0].mxu0
        %1038 = vmatprep.mubr.f32.mxu0 0.0
        %v1039 = vand.u32 %v340, 4294901760
        %v1040 = vsub.f32 %v340, %v1039
        %1041 = vmatmul.mubr.f32.gmra.mrb[0].mxu0 %v1040
        %v1042 = vpop.f32.mrb[0].mxu0
        %v1043 = vadd.f32 %v837, %v1042
        %v1044 = vpop.f32.mrb[0].mxu0
        %1045 = vmatprep.mubr.f32.mxu0 0.0
        %v1046 = vand.u32 %v341, 4294901760
        %v1047 = vsub.f32 %v341, %v1046
        %1048 = vmatmul.mubr.f32.gmra.mrb[0].mxu0 %v1047
        %v1049 = vpop.f32.mrb[0].mxu0
        %v1050 = vadd.f32 %v843, %v1049
        %v1051 = vpop.f32.mrb[0].mxu0
        %1052 = vmatprep.mubr.f32.mxu0 0.0
        %v1053 = vand.u32 %v342, 4294901760
        %v1054 = vsub.f32 %v342, %v1053
        %1055 = vmatmul.mubr.f32.gmra.mrb[0].mxu0 %v1054
        %v1056 = vpop.f32.mrb[0].mxu0
        %v1057 = vadd.f32 %v849, %v1056
        %v1058 = vpop.f32.mrb[0].mxu0
        %1059 = vmatprep.mubr.f32.mxu0 0.0
        %v1060 = vand.u32 %v343, 4294901760
        %v1061 = vsub.f32 %v343, %v1060
        %1062 = vmatmul.mubr.f32.gmra.mrb[0].mxu0 %v1061
        %v1063 = vpop.f32.mrb[0].mxu0
        %v1064 = vadd.f32 %v855, %v1063
        %v1065 = vpop.f32.mrb[0].mxu0
        %1066 = vdwg.mxu0
        %1067 = vmatprep.subr.mxu0 0.0
        %v1068 = vand.u32 %v360, 4294901760
        %1069 = vmatpush1.msra.mxu0 %v1068
        %1070 = vmatprep.subr.mxu0 0.0
        %v1071 = vand.u32 %v361, 4294901760
        %1072 = vmatpush1.msra.mxu0 %v1071
        %1073 = vmatprep.subr.mxu0 0.0
        %v1074 = vand.u32 %v362, 4294901760
        %1075 = vmatpush1.msra.mxu0 %v1074
        %1076 = vmatprep.subr.mxu0 0.0
        %v1077 = vand.u32 %v363, 4294901760
        %1078 = vmatpush1.msra.mxu0 %v1077
        %1079 = vmatprep.subr.mxu0 0.0
        %v1080 = vand.u32 %v364, 4294901760
        %1081 = vmatpush1.msra.mxu0 %v1080
        %1082 = vmatprep.subr.mxu0 0.0
        %v1083 = vand.u32 %v365, 4294901760
        %1084 = vmatpush1.msra.mxu0 %v1083
        %1085 = vmatprep.subr.mxu0 0.0
        %v1086 = vand.u32 %v366, 4294901760
        %1087 = vmatpush1.msra.mxu0 %v1086
        %1088 = vmatprep.subr.mxu0 0.0
        %v1089 = vand.u32 %v367, 4294901760
        %1090 = vmatpush1.msra.mxu0 %v1089
        %1091 = vmatprep.subr.mxu0 0.0
        %v1092 = vand.u32 %v368, 4294901760
        %1093 = vmatpush1.msra.mxu0 %v1092
        %1094 = vmatprep.subr.mxu0 0.0
        %v1095 = vand.u32 %v369, 4294901760
        %1096 = vmatpush1.msra.mxu0 %v1095
        %1097 = vmatprep.subr.mxu0 0.0
        %v1098 = vand.u32 %v370, 4294901760
        %1099 = vmatpush1.msra.mxu0 %v1098
        %1100 = vmatprep.subr.mxu0 0.0
        %v1101 = vand.u32 %v371, 4294901760
        %1102 = vmatpush1.msra.mxu0 %v1101
        %1103 = vmatprep.subr.mxu0 0.0
        %v1104 = vand.u32 %v372, 4294901760
        %1105 = vmatpush1.msra.mxu0 %v1104
        %1106 = vmatprep.subr.mxu0 0.0
        %v1107 = vand.u32 %v373, 4294901760
        %1108 = vmatpush1.msra.mxu0 %v1107
        %1109 = vmatprep.subr.mxu0 0.0
        %v1110 = vand.u32 %v374, 4294901760
        %1111 = vmatpush1.msra.mxu0 %v1110
        %1112 = vmatprep.subr.mxu0 0.0
        %v1113 = vand.u32 %v375, 4294901760
        %1114 = vmatpush1.msra.mxu0 %v1113
        %1115 = vmatprep.subr.mxu0 0.0
        %1116 = vmatpush1.msra.mxu0 0.0
        %1117 = vmatprep.subr.mxu0 0.0
        %1118 = vmatpush1.msra.mxu0 0.0
        %1119 = vmatprep.subr.mxu0 0.0
        %1120 = vmatpush1.msra.mxu0 0.0
        %1121 = vmatprep.subr.mxu0 0.0
        %1122 = vmatpush1.msra.mxu0 0.0
        %1123 = vmatprep.subr.mxu0 0.0
        %1124 = vmatpush1.msra.mxu0 0.0
        %1125 = vmatprep.subr.mxu0 0.0
        %1126 = vmatpush1.msra.mxu0 0.0
        %1127 = vmatprep.subr.mxu0 0.0
        %1128 = vmatpush1.msra.mxu0 0.0
        %1129 = vmatprep.subr.mxu0 0.0
        %1130 = vmatpush1.msra.mxu0 0.0
        %1131 = vmatprep.subr.mxu0 0.0
        %1132 = vmatpush1.msra.mxu0 0.0
        %1133 = vmatprep.subr.mxu0 0.0
        %1134 = vmatpush1.msra.mxu0 0.0
        %1135 = vmatprep.subr.mxu0 0.0
        %1136 = vmatpush1.msra.mxu0 0.0
        %1137 = vmatprep.subr.mxu0 0.0
        %1138 = vmatpush1.msra.mxu0 0.0
        %1139 = vmatprep.subr.mxu0 0.0
        %1140 = vmatpush1.msra.mxu0 0.0
        %1141 = vmatprep.subr.mxu0 0.0
        %1142 = vmatpush1.msra.mxu0 0.0
        %1143 = vmatprep.subr.mxu0 0.0
        %1144 = vmatpush1.msra.mxu0 0.0
        %1145 = vmatprep.subr.mxu0 0.0
        %1146 = vmatpush1.msra.mxu0 0.0
        %1147 = vmatprep.mubr.f32.mxu0 0.0
        %v1148 = vand.u32 %v328, 4294901760
        %v1149 = vsub.f32 %v328, %v1148
        %v1150 = vand.u32 %v1149, 4294901760
        %1151 = vmatmul.mubr.f32.gmra.mrb[0].mxu0 %v1150
        %v1152 = vpop.f32.mrb[0].mxu0
        %v1153 = vadd.f32 %v959, %v1152
        %v1154 = vpop.f32.mrb[0].mxu0
        %1155 = vmatprep.mubr.f32.mxu0 0.0
        %v1156 = vand.u32 %v329, 4294901760
        %v1157 = vsub.f32 %v329, %v1156
        %v1158 = vand.u32 %v1157, 4294901760
        %1159 = vmatmul.mubr.f32.gmra.mrb[0].mxu0 %v1158
        %v1160 = vpop.f32.mrb[0].mxu0
        %v1161 = vadd.f32 %v966, %v1160
        %v1162 = vpop.f32.mrb[0].mxu0
        %1163 = vmatprep.mubr.f32.mxu0 0.0
        %v1164 = vand.u32 %v330, 4294901760
        %v1165 = vsub.f32 %v330, %v1164
        %v1166 = vand.u32 %v1165, 4294901760
        %1167 = vmatmul.mubr.f32.gmra.mrb[0].mxu0 %v1166
        %v1168 = vpop.f32.mrb[0].mxu0
        %v1169 = vadd.f32 %v973, %v1168
        %v1170 = vpop.f32.mrb[0].mxu0
        %1171 = vmatprep.mubr.f32.mxu0 0.0
        %v1172 = vand.u32 %v331, 4294901760
        %v1173 = vsub.f32 %v331, %v1172
        %v1174 = vand.u32 %v1173, 4294901760
        %1175 = vmatmul.mubr.f32.gmra.mrb[0].mxu0 %v1174
        %v1176 = vpop.f32.mrb[0].mxu0
        %v1177 = vadd.f32 %v980, %v1176
        %v1178 = vpop.f32.mrb[0].mxu0
        %1179 = vmatprep.mubr.f32.mxu0 0.0
        %v1180 = vand.u32 %v332, 4294901760
        %v1181 = vsub.f32 %v332, %v1180
        %v1182 = vand.u32 %v1181, 4294901760
        %1183 = vmatmul.mubr.f32.gmra.mrb[0].mxu0 %v1182
        %v1184 = vpop.f32.mrb[0].mxu0
        %v1185 = vadd.f32 %v987, %v1184
        %v1186 = vpop.f32.mrb[0].mxu0
        %1187 = vmatprep.mubr.f32.mxu0 0.0
        %v1188 = vand.u32 %v333, 4294901760
        %v1189 = vsub.f32 %v333, %v1188
        %v1190 = vand.u32 %v1189, 4294901760
        %1191 = vmatmul.mubr.f32.gmra.mrb[0].mxu0 %v1190
        %v1192 = vpop.f32.mrb[0].mxu0
        %v1193 = vadd.f32 %v994, %v1192
        %v1194 = vpop.f32.mrb[0].mxu0
        %1195 = vmatprep.mubr.f32.mxu0 0.0
        %v1196 = vand.u32 %v334, 4294901760
        %v1197 = vsub.f32 %v334, %v1196
        %v1198 = vand.u32 %v1197, 4294901760
        %1199 = vmatmul.mubr.f32.gmra.mrb[0].mxu0 %v1198
        %v1200 = vpop.f32.mrb[0].mxu0
        %v1201 = vadd.f32 %v1001, %v1200
        %v1202 = vpop.f32.mrb[0].mxu0
        %1203 = vmatprep.mubr.f32.mxu0 0.0
        %v1204 = vand.u32 %v335, 4294901760
        %v1205 = vsub.f32 %v335, %v1204
        %v1206 = vand.u32 %v1205, 4294901760
        %1207 = vmatmul.mubr.f32.gmra.mrb[0].mxu0 %v1206
        %v1208 = vpop.f32.mrb[0].mxu0
        %v1209 = vadd.f32 %v1008, %v1208
        %v1210 = vpop.f32.mrb[0].mxu0
        %1211 = vmatprep.mubr.f32.mxu0 0.0
        %v1212 = vand.u32 %v336, 4294901760
        %v1213 = vsub.f32 %v336, %v1212
        %v1214 = vand.u32 %v1213, 4294901760
        %1215 = vmatmul.mubr.f32.gmra.mrb[0].mxu0 %v1214
        %v1216 = vpop.f32.mrb[0].mxu0
        %v1217 = vadd.f32 %v1015, %v1216
        %v1218 = vpop.f32.mrb[0].mxu0
        %1219 = vmatprep.mubr.f32.mxu0 0.0
        %v1220 = vand.u32 %v337, 4294901760
        %v1221 = vsub.f32 %v337, %v1220
        %v1222 = vand.u32 %v1221, 4294901760
        %1223 = vmatmul.mubr.f32.gmra.mrb[0].mxu0 %v1222
        %v1224 = vpop.f32.mrb[0].mxu0
        %v1225 = vadd.f32 %v1022, %v1224
        %v1226 = vpop.f32.mrb[0].mxu0
        %1227 = vmatprep.mubr.f32.mxu0 0.0
        %v1228 = vand.u32 %v338, 4294901760
        %v1229 = vsub.f32 %v338, %v1228
        %v1230 = vand.u32 %v1229, 4294901760
        %1231 = vmatmul.mubr.f32.gmra.mrb[0].mxu0 %v1230
        %v1232 = vpop.f32.mrb[0].mxu0
        %v1233 = vadd.f32 %v1029, %v1232
        %v1234 = vpop.f32.mrb[0].mxu0
        %1235 = vmatprep.mubr.f32.mxu0 0.0
        %v1236 = vand.u32 %v339, 4294901760
        %v1237 = vsub.f32 %v339, %v1236
        %v1238 = vand.u32 %v1237, 4294901760
        %1239 = vmatmul.mubr.f32.gmra.mrb[0].mxu0 %v1238
        %v1240 = vpop.f32.mrb[0].mxu0
        %v1241 = vadd.f32 %v1036, %v1240
        %v1242 = vpop.f32.mrb[0].mxu0
        %1243 = vmatprep.mubr.f32.mxu0 0.0
        %v1244 = vand.u32 %v340, 4294901760
        %v1245 = vsub.f32 %v340, %v1244
        %v1246 = vand.u32 %v1245, 4294901760
        %1247 = vmatmul.mubr.f32.gmra.mrb[0].mxu0 %v1246
        %v1248 = vpop.f32.mrb[0].mxu0
        %v1249 = vadd.f32 %v1043, %v1248
        %v1250 = vpop.f32.mrb[0].mxu0
        %1251 = vmatprep.mubr.f32.mxu0 0.0
        %v1252 = vand.u32 %v341, 4294901760
        %v1253 = vsub.f32 %v341, %v1252
        %v1254 = vand.u32 %v1253, 4294901760
        %1255 = vmatmul.mubr.f32.gmra.mrb[0].mxu0 %v1254
        %v1256 = vpop.f32.mrb[0].mxu0
        %v1257 = vadd.f32 %v1050, %v1256
        %v1258 = vpop.f32.mrb[0].mxu0
        %1259 = vmatprep.mubr.f32.mxu0 0.0
        %v1260 = vand.u32 %v342, 4294901760
        %v1261 = vsub.f32 %v342, %v1260
        %v1262 = vand.u32 %v1261, 4294901760
        %1263 = vmatmul.mubr.f32.gmra.mrb[0].mxu0 %v1262
        %v1264 = vpop.f32.mrb[0].mxu0
        %v1265 = vadd.f32 %v1057, %v1264
        %v1266 = vpop.f32.mrb[0].mxu0
        %1267 = vmatprep.mubr.f32.mxu0 0.0
        %v1268 = vand.u32 %v343, 4294901760
        %v1269 = vsub.f32 %v343, %v1268
        %v1270 = vand.u32 %v1269, 4294901760
        %1271 = vmatmul.mubr.f32.gmra.mrb[0].mxu0 %v1270
        %v1272 = vpop.f32.mrb[0].mxu0
        %v1273 = vadd.f32 %v1064, %v1272
        %v1274 = vpop.f32.mrb[0].mxu0
        %1275 = vdwg.mxu0
        %1276 = vmatprep.subr.mxu0 0.0
        %v1277 = vand.u32 %v360, 4294901760
        %v1278 = vsub.f32 %v360, %v1277
        %v1279 = vand.u32 %v1278, 4294901760
        %1280 = vmatpush1.msra.mxu0 %v1279
        %1281 = vmatprep.subr.mxu0 0.0
        %v1282 = vand.u32 %v361, 4294901760
        %v1283 = vsub.f32 %v361, %v1282
        %v1284 = vand.u32 %v1283, 4294901760
        %1285 = vmatpush1.msra.mxu0 %v1284
        %1286 = vmatprep.subr.mxu0 0.0
        %v1287 = vand.u32 %v362, 4294901760
        %v1288 = vsub.f32 %v362, %v1287
        %v1289 = vand.u32 %v1288, 4294901760
        %1290 = vmatpush1.msra.mxu0 %v1289
        %1291 = vmatprep.subr.mxu0 0.0
        %v1292 = vand.u32 %v363, 4294901760
        %v1293 = vsub.f32 %v363, %v1292
        %v1294 = vand.u32 %v1293, 4294901760
        %1295 = vmatpush1.msra.mxu0 %v1294
        %1296 = vmatprep.subr.mxu0 0.0
        %v1297 = vand.u32 %v364, 4294901760
        %v1298 = vsub.f32 %v364, %v1297
        %v1299 = vand.u32 %v1298, 4294901760
        %1300 = vmatpush1.msra.mxu0 %v1299
        %1301 = vmatprep.subr.mxu0 0.0
        %v1302 = vand.u32 %v365, 4294901760
        %v1303 = vsub.f32 %v365, %v1302
        %v1304 = vand.u32 %v1303, 4294901760
        %1305 = vmatpush1.msra.mxu0 %v1304
        %1306 = vmatprep.subr.mxu0 0.0
        %v1307 = vand.u32 %v366, 4294901760
        %v1308 = vsub.f32 %v366, %v1307
        %v1309 = vand.u32 %v1308, 4294901760
        %1310 = vmatpush1.msra.mxu0 %v1309
        %1311 = vmatprep.subr.mxu0 0.0
        %v1312 = vand.u32 %v367, 4294901760
        %v1313 = vsub.f32 %v367, %v1312
        %v1314 = vand.u32 %v1313, 4294901760
        %1315 = vmatpush1.msra.mxu0 %v1314
        %1316 = vmatprep.subr.mxu0 0.0
        %v1317 = vand.u32 %v368, 4294901760
        %v1318 = vsub.f32 %v368, %v1317
        %v1319 = vand.u32 %v1318, 4294901760
        %1320 = vmatpush1.msra.mxu0 %v1319
        %1321 = vmatprep.subr.mxu0 0.0
        %v1322 = vand.u32 %v369, 4294901760
        %v1323 = vsub.f32 %v369, %v1322
        %v1324 = vand.u32 %v1323, 4294901760
        %1325 = vmatpush1.msra.mxu0 %v1324
        %1326 = vmatprep.subr.mxu0 0.0
        %v1327 = vand.u32 %v370, 4294901760
        %v1328 = vsub.f32 %v370, %v1327
        %v1329 = vand.u32 %v1328, 4294901760
        %1330 = vmatpush1.msra.mxu0 %v1329
        %1331 = vmatprep.subr.mxu0 0.0
        %v1332 = vand.u32 %v371, 4294901760
        %v1333 = vsub.f32 %v371, %v1332
        %v1334 = vand.u32 %v1333, 4294901760
        %1335 = vmatpush1.msra.mxu0 %v1334
        %1336 = vmatprep.subr.mxu0 0.0
        %v1337 = vand.u32 %v372, 4294901760
        %v1338 = vsub.f32 %v372, %v1337
        %v1339 = vand.u32 %v1338, 4294901760
        %1340 = vmatpush1.msra.mxu0 %v1339
        %1341 = vmatprep.subr.mxu0 0.0
        %v1342 = vand.u32 %v373, 4294901760
        %v1343 = vsub.f32 %v373, %v1342
        %v1344 = vand.u32 %v1343, 4294901760
        %1345 = vmatpush1.msra.mxu0 %v1344
        %1346 = vmatprep.subr.mxu0 0.0
        %v1347 = vand.u32 %v374, 4294901760
        %v1348 = vsub.f32 %v374, %v1347
        %v1349 = vand.u32 %v1348, 4294901760
        %1350 = vmatpush1.msra.mxu0 %v1349
        %1351 = vmatprep.subr.mxu0 0.0
        %v1352 = vand.u32 %v375, 4294901760
        %v1353 = vsub.f32 %v375, %v1352
        %v1354 = vand.u32 %v1353, 4294901760
        %1355 = vmatpush1.msra.mxu0 %v1354
        %1356 = vmatprep.subr.mxu0 0.0
        %1357 = vmatpush1.msra.mxu0 0.0
        %1358 = vmatprep.subr.mxu0 0.0
        %1359 = vmatpush1.msra.mxu0 0.0
        %1360 = vmatprep.subr.mxu0 0.0
        %1361 = vmatpush1.msra.mxu0 0.0
        %1362 = vmatprep.subr.mxu0 0.0
        %1363 = vmatpush1.msra.mxu0 0.0
        %1364 = vmatprep.subr.mxu0 0.0
        %1365 = vmatpush1.msra.mxu0 0.0
        %1366 = vmatprep.subr.mxu0 0.0
        %1367 = vmatpush1.msra.mxu0 0.0
        %1368 = vmatprep.subr.mxu0 0.0
        %1369 = vmatpush1.msra.mxu0 0.0
        %1370 = vmatprep.subr.mxu0 0.0
        %1371 = vmatpush1.msra.mxu0 0.0
        %1372 = vmatprep.subr.mxu0 0.0
        %1373 = vmatpush1.msra.mxu0 0.0
        %1374 = vmatprep.subr.mxu0 0.0
        %1375 = vmatpush1.msra.mxu0 0.0
        %1376 = vmatprep.subr.mxu0 0.0
        %1377 = vmatpush1.msra.mxu0 0.0
        %1378 = vmatprep.subr.mxu0 0.0
        %1379 = vmatpush1.msra.mxu0 0.0
        %1380 = vmatprep.subr.mxu0 0.0
        %1381 = vmatpush1.msra.mxu0 0.0
        %1382 = vmatprep.subr.mxu0 0.0
        %1383 = vmatpush1.msra.mxu0 0.0
        %1384 = vmatprep.subr.mxu0 0.0
        %1385 = vmatpush1.msra.mxu0 0.0
        %1386 = vmatprep.subr.mxu0 0.0
        %1387 = vmatpush1.msra.mxu0 0.0
        %1388 = vmatprep.mubr.f32.mxu0 0.0
        %v1389 = vand.u32 %v328, 4294901760
        %1390 = vmatmul.mubr.f32.gmra.mrb[0].mxu0 %v1389
        %v1391 = vpop.f32.mrb[0].mxu0
        %v1392 = vadd.f32 %v1153, %v1391
        %v1393 = vpop.f32.mrb[0].mxu0
        %1394 = vmatprep.mubr.f32.mxu0 0.0
        %v1395 = vand.u32 %v329, 4294901760
        %1396 = vmatmul.mubr.f32.gmra.mrb[0].mxu0 %v1395
        %v1397 = vpop.f32.mrb[0].mxu0
        %v1398 = vadd.f32 %v1161, %v1397
        %v1399 = vpop.f32.mrb[0].mxu0
        %1400 = vmatprep.mubr.f32.mxu0 0.0
        %v1401 = vand.u32 %v330, 4294901760
        %1402 = vmatmul.mubr.f32.gmra.mrb[0].mxu0 %v1401
        %v1403 = vpop.f32.mrb[0].mxu0
        %v1404 = vadd.f32 %v1169, %v1403
        %v1405 = vpop.f32.mrb[0].mxu0
        %1406 = vmatprep.mubr.f32.mxu0 0.0
        %v1407 = vand.u32 %v331, 4294901760
        %1408 = vmatmul.mubr.f32.gmra.mrb[0].mxu0 %v1407
        %v1409 = vpop.f32.mrb[0].mxu0
        %v1410 = vadd.f32 %v1177, %v1409
        %v1411 = vpop.f32.mrb[0].mxu0
        %1412 = vmatprep.mubr.f32.mxu0 0.0
        %v1413 = vand.u32 %v332, 4294901760
        %1414 = vmatmul.mubr.f32.gmra.mrb[0].mxu0 %v1413
        %v1415 = vpop.f32.mrb[0].mxu0
        %v1416 = vadd.f32 %v1185, %v1415
        %v1417 = vpop.f32.mrb[0].mxu0
        %1418 = vmatprep.mubr.f32.mxu0 0.0
        %v1419 = vand.u32 %v333, 4294901760
        %1420 = vmatmul.mubr.f32.gmra.mrb[0].mxu0 %v1419
        %v1421 = vpop.f32.mrb[0].mxu0
        %v1422 = vadd.f32 %v1193, %v1421
        %v1423 = vpop.f32.mrb[0].mxu0
        %1424 = vmatprep.mubr.f32.mxu0 0.0
        %v1425 = vand.u32 %v334, 4294901760
        %1426 = vmatmul.mubr.f32.gmra.mrb[0].mxu0 %v1425
        %v1427 = vpop.f32.mrb[0].mxu0
        %v1428 = vadd.f32 %v1201, %v1427
        %v1429 = vpop.f32.mrb[0].mxu0
        %1430 = vmatprep.mubr.f32.mxu0 0.0
        %v1431 = vand.u32 %v335, 4294901760
        %1432 = vmatmul.mubr.f32.gmra.mrb[0].mxu0 %v1431
        %v1433 = vpop.f32.mrb[0].mxu0
        %v1434 = vadd.f32 %v1209, %v1433
        %v1435 = vpop.f32.mrb[0].mxu0
        %1436 = vmatprep.mubr.f32.mxu0 0.0
        %v1437 = vand.u32 %v336, 4294901760
        %1438 = vmatmul.mubr.f32.gmra.mrb[0].mxu0 %v1437
        %v1439 = vpop.f32.mrb[0].mxu0
        %v1440 = vadd.f32 %v1217, %v1439
        %v1441 = vpop.f32.mrb[0].mxu0
        %1442 = vmatprep.mubr.f32.mxu0 0.0
        %v1443 = vand.u32 %v337, 4294901760
        %1444 = vmatmul.mubr.f32.gmra.mrb[0].mxu0 %v1443
        %v1445 = vpop.f32.mrb[0].mxu0
        %v1446 = vadd.f32 %v1225, %v1445
        %v1447 = vpop.f32.mrb[0].mxu0
        %1448 = vmatprep.mubr.f32.mxu0 0.0
        %v1449 = vand.u32 %v338, 4294901760
        %1450 = vmatmul.mubr.f32.gmra.mrb[0].mxu0 %v1449
        %v1451 = vpop.f32.mrb[0].mxu0
        %v1452 = vadd.f32 %v1233, %v1451
        %v1453 = vpop.f32.mrb[0].mxu0
        %1454 = vmatprep.mubr.f32.mxu0 0.0
        %v1455 = vand.u32 %v339, 4294901760
        %1456 = vmatmul.mubr.f32.gmra.mrb[0].mxu0 %v1455
        %v1457 = vpop.f32.mrb[0].mxu0
        %v1458 = vadd.f32 %v1241, %v1457
        %v1459 = vpop.f32.mrb[0].mxu0
        %1460 = vmatprep.mubr.f32.mxu0 0.0
        %v1461 = vand.u32 %v340, 4294901760
        %1462 = vmatmul.mubr.f32.gmra.mrb[0].mxu0 %v1461
        %v1463 = vpop.f32.mrb[0].mxu0
        %v1464 = vadd.f32 %v1249, %v1463
        %v1465 = vpop.f32.mrb[0].mxu0
        %1466 = vmatprep.mubr.f32.mxu0 0.0
        %v1467 = vand.u32 %v341, 4294901760
        %1468 = vmatmul.mubr.f32.gmra.mrb[0].mxu0 %v1467
        %v1469 = vpop.f32.mrb[0].mxu0
        %v1470 = vadd.f32 %v1257, %v1469
        %v1471 = vpop.f32.mrb[0].mxu0
        %1472 = vmatprep.mubr.f32.mxu0 0.0
        %v1473 = vand.u32 %v342, 4294901760
        %1474 = vmatmul.mubr.f32.gmra.mrb[0].mxu0 %v1473
        %v1475 = vpop.f32.mrb[0].mxu0
        %v1476 = vadd.f32 %v1265, %v1475
        %v1477 = vpop.f32.mrb[0].mxu0
        %1478 = vmatprep.mubr.f32.mxu0 0.0
        %v1479 = vand.u32 %v343, 4294901760
        %1480 = vmatmul.mubr.f32.gmra.mrb[0].mxu0 %v1479
        %v1481 = vpop.f32.mrb[0].mxu0
        %v1482 = vadd.f32 %v1273, %v1481
        %v1483 = vpop.f32.mrb[0].mxu0
        %1484 = vdwg.mxu0
        %1485 = vmatprep.subr.mxu0 0.0
        %v1486 = vand.u32 %v360, 4294901760
        %1487 = vmatpush1.msra.mxu0 %v1486
        %1488 = vmatprep.subr.mxu0 0.0
        %v1489 = vand.u32 %v361, 4294901760
        %1490 = vmatpush1.msra.mxu0 %v1489
        %1491 = vmatprep.subr.mxu0 0.0
        %v1492 = vand.u32 %v362, 4294901760
        %1493 = vmatpush1.msra.mxu0 %v1492
        %1494 = vmatprep.subr.mxu0 0.0
        %v1495 = vand.u32 %v363, 4294901760
        %1496 = vmatpush1.msra.mxu0 %v1495
        %1497 = vmatprep.subr.mxu0 0.0
        %v1498 = vand.u32 %v364, 4294901760
        %1499 = vmatpush1.msra.mxu0 %v1498
        %1500 = vmatprep.subr.mxu0 0.0
        %v1501 = vand.u32 %v365, 4294901760
        %1502 = vmatpush1.msra.mxu0 %v1501
        %1503 = vmatprep.subr.mxu0 0.0
        %v1504 = vand.u32 %v366, 4294901760
        %1505 = vmatpush1.msra.mxu0 %v1504
        %1506 = vmatprep.subr.mxu0 0.0
        %v1507 = vand.u32 %v367, 4294901760
        %1508 = vmatpush1.msra.mxu0 %v1507
        %1509 = vmatprep.subr.mxu0 0.0
        %v1510 = vand.u32 %v368, 4294901760
        %1511 = vmatpush1.msra.mxu0 %v1510
        %1512 = vmatprep.subr.mxu0 0.0
        %v1513 = vand.u32 %v369, 4294901760
        %1514 = vmatpush1.msra.mxu0 %v1513
        %1515 = vmatprep.subr.mxu0 0.0
        %v1516 = vand.u32 %v370, 4294901760
        %1517 = vmatpush1.msra.mxu0 %v1516
        %1518 = vmatprep.subr.mxu0 0.0
        %v1519 = vand.u32 %v371, 4294901760
        %1520 = vmatpush1.msra.mxu0 %v1519
        %1521 = vmatprep.subr.mxu0 0.0
        %v1522 = vand.u32 %v372, 4294901760
        %1523 = vmatpush1.msra.mxu0 %v1522
        %1524 = vmatprep.subr.mxu0 0.0
        %v1525 = vand.u32 %v373, 4294901760
        %1526 = vmatpush1.msra.mxu0 %v1525
        %1527 = vmatprep.subr.mxu0 0.0
        %v1528 = vand.u32 %v374, 4294901760
        %1529 = vmatpush1.msra.mxu0 %v1528
        %1530 = vmatprep.subr.mxu0 0.0
        %v1531 = vand.u32 %v375, 4294901760
        %1532 = vmatpush1.msra.mxu0 %v1531
        %1533 = vmatprep.subr.mxu0 0.0
        %1534 = vmatpush1.msra.mxu0 0.0
        %1535 = vmatprep.subr.mxu0 0.0
        %1536 = vmatpush1.msra.mxu0 0.0
        %1537 = vmatprep.subr.mxu0 0.0
        %1538 = vmatpush1.msra.mxu0 0.0
        %1539 = vmatprep.subr.mxu0 0.0
        %1540 = vmatpush1.msra.mxu0 0.0
        %1541 = vmatprep.subr.mxu0 0.0
        %1542 = vmatpush1.msra.mxu0 0.0
        %1543 = vmatprep.subr.mxu0 0.0
        %1544 = vmatpush1.msra.mxu0 0.0
        %1545 = vmatprep.subr.mxu0 0.0
        %1546 = vmatpush1.msra.mxu0 0.0
        %1547 = vmatprep.subr.mxu0 0.0
        %1548 = vmatpush1.msra.mxu0 0.0
        %1549 = vmatprep.subr.mxu0 0.0
        %1550 = vmatpush1.msra.mxu0 0.0
        %1551 = vmatprep.subr.mxu0 0.0
        %1552 = vmatpush1.msra.mxu0 0.0
        %1553 = vmatprep.subr.mxu0 0.0
        %1554 = vmatpush1.msra.mxu0 0.0
        %1555 = vmatprep.subr.mxu0 0.0
        %1556 = vmatpush1.msra.mxu0 0.0
        %1557 = vmatprep.subr.mxu0 0.0
        %1558 = vmatpush1.msra.mxu0 0.0
        %1559 = vmatprep.subr.mxu0 0.0
        %1560 = vmatpush1.msra.mxu0 0.0
        %1561 = vmatprep.subr.mxu0 0.0
        %1562 = vmatpush1.msra.mxu0 0.0
        %1563 = vmatprep.subr.mxu0 0.0
        %1564 = vmatpush1.msra.mxu0 0.0
        %1565 = vmatprep.mubr.f32.mxu0 0.0
        %v1566 = vand.u32 %v328, 4294901760
        %1567 = vmatmul.mubr.f32.gmra.mrb[0].mxu0 %v1566
        %v1568 = vpop.f32.mrb[0].mxu0
        %v1569 = vadd.f32 %v1392, %v1568
        %v1570 = vpop.f32.mrb[0].mxu0
        %1571 = vmatprep.mubr.f32.mxu0 0.0
        %v1572 = vand.u32 %v329, 4294901760
        %1573 = vmatmul.mubr.f32.gmra.mrb[0].mxu0 %v1572
        %v1574 = vpop.f32.mrb[0].mxu0
        %v1575 = vadd.f32 %v1398, %v1574
        %v1576 = vpop.f32.mrb[0].mxu0
        %1577 = vmatprep.mubr.f32.mxu0 0.0
        %v1578 = vand.u32 %v330, 4294901760
        %1579 = vmatmul.mubr.f32.gmra.mrb[0].mxu0 %v1578
        %v1580 = vpop.f32.mrb[0].mxu0
        %v1581 = vadd.f32 %v1404, %v1580
        %v1582 = vpop.f32.mrb[0].mxu0
        %1583 = vmatprep.mubr.f32.mxu0 0.0
        %v1584 = vand.u32 %v331, 4294901760
        %1585 = vmatmul.mubr.f32.gmra.mrb[0].mxu0 %v1584
        %v1586 = vpop.f32.mrb[0].mxu0
        %v1587 = vadd.f32 %v1410, %v1586
        %v1588 = vpop.f32.mrb[0].mxu0
        %1589 = vmatprep.mubr.f32.mxu0 0.0
        %v1590 = vand.u32 %v332, 4294901760
        %1591 = vmatmul.mubr.f32.gmra.mrb[0].mxu0 %v1590
        %v1592 = vpop.f32.mrb[0].mxu0
        %v1593 = vadd.f32 %v1416, %v1592
        %v1594 = vpop.f32.mrb[0].mxu0
        %1595 = vmatprep.mubr.f32.mxu0 0.0
        %v1596 = vand.u32 %v333, 4294901760
        %1597 = vmatmul.mubr.f32.gmra.mrb[0].mxu0 %v1596
        %v1598 = vpop.f32.mrb[0].mxu0
        %v1599 = vadd.f32 %v1422, %v1598
        %v1600 = vpop.f32.mrb[0].mxu0
        %1601 = vmatprep.mubr.f32.mxu0 0.0
        %v1602 = vand.u32 %v334, 4294901760
        %1603 = vmatmul.mubr.f32.gmra.mrb[0].mxu0 %v1602
        %v1604 = vpop.f32.mrb[0].mxu0
        %v1605 = vadd.f32 %v1428, %v1604
        %v1606 = vpop.f32.mrb[0].mxu0
        %1607 = vmatprep.mubr.f32.mxu0 0.0
        %v1608 = vand.u32 %v335, 4294901760
        %1609 = vmatmul.mubr.f32.gmra.mrb[0].mxu0 %v1608
        %v1610 = vpop.f32.mrb[0].mxu0
        %v1611 = vadd.f32 %v1434, %v1610
        %v1612 = vpop.f32.mrb[0].mxu0
        %1613 = vmatprep.mubr.f32.mxu0 0.0
        %v1614 = vand.u32 %v336, 4294901760
        %1615 = vmatmul.mubr.f32.gmra.mrb[0].mxu0 %v1614
        %v1616 = vpop.f32.mrb[0].mxu0
        %v1617 = vadd.f32 %v1440, %v1616
        %v1618 = vpop.f32.mrb[0].mxu0
        %1619 = vmatprep.mubr.f32.mxu0 0.0
        %v1620 = vand.u32 %v337, 4294901760
        %1621 = vmatmul.mubr.f32.gmra.mrb[0].mxu0 %v1620
        %v1622 = vpop.f32.mrb[0].mxu0
        %v1623 = vadd.f32 %v1446, %v1622
        %v1624 = vpop.f32.mrb[0].mxu0
        %1625 = vmatprep.mubr.f32.mxu0 0.0
        %v1626 = vand.u32 %v338, 4294901760
        %1627 = vmatmul.mubr.f32.gmra.mrb[0].mxu0 %v1626
        %v1628 = vpop.f32.mrb[0].mxu0
        %v1629 = vadd.f32 %v1452, %v1628
        %v1630 = vpop.f32.mrb[0].mxu0
        %1631 = vmatprep.mubr.f32.mxu0 0.0
        %v1632 = vand.u32 %v339, 4294901760
        %1633 = vmatmul.mubr.f32.gmra.mrb[0].mxu0 %v1632
        %v1634 = vpop.f32.mrb[0].mxu0
        %v1635 = vadd.f32 %v1458, %v1634
        %v1636 = vpop.f32.mrb[0].mxu0
        %1637 = vmatprep.mubr.f32.mxu0 0.0
        %v1638 = vand.u32 %v340, 4294901760
        %1639 = vmatmul.mubr.f32.gmra.mrb[0].mxu0 %v1638
        %v1640 = vpop.f32.mrb[0].mxu0
        %v1641 = vadd.f32 %v1464, %v1640
        %v1642 = vpop.f32.mrb[0].mxu0
        %1643 = vmatprep.mubr.f32.mxu0 0.0
        %v1644 = vand.u32 %v341, 4294901760
        %1645 = vmatmul.mubr.f32.gmra.mrb[0].mxu0 %v1644
        %v1646 = vpop.f32.mrb[0].mxu0
        %v1647 = vadd.f32 %v1470, %v1646
        %v1648 = vpop.f32.mrb[0].mxu0
        %1649 = vmatprep.mubr.f32.mxu0 0.0
        %v1650 = vand.u32 %v342, 4294901760
        %1651 = vmatmul.mubr.f32.gmra.mrb[0].mxu0 %v1650
        %v1652 = vpop.f32.mrb[0].mxu0
        %v1653 = vadd.f32 %v1476, %v1652
        %v1654 = vpop.f32.mrb[0].mxu0
        %1655 = vmatprep.mubr.f32.mxu0 0.0
        %v1656 = vand.u32 %v343, 4294901760
        %1657 = vmatmul.mubr.f32.gmra.mrb[0].mxu0 %v1656
        %v1658 = vpop.f32.mrb[0].mxu0
        %v1659 = vadd.f32 %v1482, %v1658
        %v1660 = vpop.f32.mrb[0].mxu0
        %1661 = vdwg.mxu0
        %v1662 = vadd.f32 %v344, %v1569
        %v1663 = vadd.f32 %v345, %v1575
        %v1664 = vadd.f32 %v346, %v1581
        %v1665 = vadd.f32 %v347, %v1587
        %v1666 = vadd.f32 %v348, %v1593
        %v1667 = vadd.f32 %v349, %v1599
        %v1668 = vadd.f32 %v350, %v1605
        %v1669 = vadd.f32 %v351, %v1611
        %v1670 = vadd.f32 %v352, %v1617
        %v1671 = vadd.f32 %v353, %v1623
        %v1672 = vadd.f32 %v354, %v1629
        %v1673 = vadd.f32 %v355, %v1635
        %v1674 = vadd.f32 %v356, %v1641
        %v1675 = vadd.f32 %v357, %v1647
        %v1676 = vadd.f32 %v358, %v1653
        %v1677 = vadd.f32 %v359, %v1659
        %1678 = vst [vmem:[%s279] sm:$0xff] %v1662
        %1679 = vst [vmem:[%s279 + $0x8] sm:$0xff] %v1663
        %1680 = vst [vmem:[%s279 + $0x10] sm:$0xff] %v1664
        %1681 = vst [vmem:[%s279 + $0x18] sm:$0xff] %v1665
        %1682 = vst [vmem:[%s279 + $0x20] sm:$0xff] %v1666
        %1683 = vst [vmem:[%s279 + $0x28] sm:$0xff] %v1667
        %1684 = vst [vmem:[%s279 + $0x30] sm:$0xff] %v1668
        %1685 = vst [vmem:[%s279 + $0x38] sm:$0xff] %v1669
        %1686 = vst [vmem:[%s279 + $0x40] sm:$0xff] %v1670
        %1687 = vst [vmem:[%s279 + $0x48] sm:$0xff] %v1671
        %1688 = vst [vmem:[%s279 + $0x50] sm:$0xff] %v1672
        %1689 = vst [vmem:[%s279 + $0x58] sm:$0xff] %v1673
        %1690 = vst [vmem:[%s279 + $0x60] sm:$0xff] %v1674
        %1691 = vst [vmem:[%s279 + $0x68] sm:$0xff] %v1675
        %1692 = vst [vmem:[%s279 + $0x70] sm:$0xff] %v1676
        %1693 = vst [vmem:[%s279 + $0x78] sm:$0xff] %v1677
        %v1694 = vld [vmem:[%s286] sm:$0xff]
        %v1695 = vld [vmem:[%s286 + $0x8] sm:$0xff]
        %v1696 = vld [vmem:[%s286 + $0x10] sm:$0xff]
        %v1697 = vld [vmem:[%s286 + $0x18] sm:$0xff]
        %v1698 = vld [vmem:[%s286 + $0x20] sm:$0xff]
        %v1699 = vld [vmem:[%s286 + $0x28] sm:$0xff]
        %v1700 = vld [vmem:[%s286 + $0x30] sm:$0xff]
        %v1701 = vld [vmem:[%s286 + $0x38] sm:$0xff]
        %v1702 = vld [vmem:[%s286 + $0x40] sm:$0xff]
        %v1703 = vld [vmem:[%s286 + $0x48] sm:$0xff]
        %v1704 = vld [vmem:[%s286 + $0x50] sm:$0xff]
        %v1705 = vld [vmem:[%s286 + $0x58] sm:$0xff]
        %v1706 = vld [vmem:[%s286 + $0x60] sm:$0xff]
        %v1707 = vld [vmem:[%s286 + $0x68] sm:$0xff]
        %v1708 = vld [vmem:[%s286 + $0x70] sm:$0xff]
        %v1709 = vld [vmem:[%s286 + $0x78] sm:$0xff]
        %v1710 = vld [vmem:[#allocation7] sm:$0xff]
        %v1711 = vld [vmem:[#allocation7 + $0x8] sm:$0xff]
        %v1712 = vld [vmem:[#allocation7 + $0x10] sm:$0xff]
        %v1713 = vld [vmem:[#allocation7 + $0x18] sm:$0xff]
        %v1714 = vld [vmem:[#allocation7 + $0x20] sm:$0xff]
        %v1715 = vld [vmem:[#allocation7 + $0x28] sm:$0xff]
        %v1716 = vld [vmem:[#allocation7 + $0x30] sm:$0xff]
        %v1717 = vld [vmem:[#allocation7 + $0x38] sm:$0xff]
        %v1718 = vld [vmem:[#allocation7 + $0x40] sm:$0xff]
        %v1719 = vld [vmem:[#allocation7 + $0x48] sm:$0xff]
        %v1720 = vld [vmem:[#allocation7 + $0x50] sm:$0xff]
        %v1721 = vld [vmem:[#allocation7 + $0x58] sm:$0xff]
        %v1722 = vld [vmem:[#allocation7 + $0x60] sm:$0xff]
        %v1723 = vld [vmem:[#allocation7 + $0x68] sm:$0xff]
        %v1724 = vld [vmem:[#allocation7 + $0x70] sm:$0xff]
        %v1725 = vld [vmem:[#allocation7 + $0x78] sm:$0xff]
        %1726 = vmatprep.subr.mxu0 0.0
        %v1727 = vand.u32 %v1710, 4294901760
        %1728 = vmatpush1.msra.mxu0 %v1727
        %1729 = vmatprep.subr.mxu0 0.0
        %v1730 = vand.u32 %v1711, 4294901760
        %1731 = vmatpush1.msra.mxu0 %v1730
        %1732 = vmatprep.subr.mxu0 0.0
        %v1733 = vand.u32 %v1712, 4294901760
        %1734 = vmatpush1.msra.mxu0 %v1733
        %1735 = vmatprep.subr.mxu0 0.0
        %v1736 = vand.u32 %v1713, 4294901760
        %1737 = vmatpush1.msra.mxu0 %v1736
        %1738 = vmatprep.subr.mxu0 0.0
        %v1739 = vand.u32 %v1714, 4294901760
        %1740 = vmatpush1.msra.mxu0 %v1739
        %1741 = vmatprep.subr.mxu0 0.0
        %v1742 = vand.u32 %v1715, 4294901760
        %1743 = vmatpush1.msra.mxu0 %v1742
        %1744 = vmatprep.subr.mxu0 0.0
        %v1745 = vand.u32 %v1716, 4294901760
        %1746 = vmatpush1.msra.mxu0 %v1745
        %1747 = vmatprep.subr.mxu0 0.0
        %v1748 = vand.u32 %v1717, 4294901760
        %1749 = vmatpush1.msra.mxu0 %v1748
        %1750 = vmatprep.subr.mxu0 0.0
        %v1751 = vand.u32 %v1718, 4294901760
        %1752 = vmatpush1.msra.mxu0 %v1751
        %1753 = vmatprep.subr.mxu0 0.0
        %v1754 = vand.u32 %v1719, 4294901760
        %1755 = vmatpush1.msra.mxu0 %v1754
        %1756 = vmatprep.subr.mxu0 0.0
        %v1757 = vand.u32 %v1720, 4294901760
        %1758 = vmatpush1.msra.mxu0 %v1757
        %1759 = vmatprep.subr.mxu0 0.0
        %v1760 = vand.u32 %v1721, 4294901760
        %1761 = vmatpush1.msra.mxu0 %v1760
        %1762 = vmatprep.subr.mxu0 0.0
        %v1763 = vand.u32 %v1722, 4294901760
        %1764 = vmatpush1.msra.mxu0 %v1763
        %1765 = vmatprep.subr.mxu0 0.0
        %v1766 = vand.u32 %v1723, 4294901760
        %1767 = vmatpush1.msra.mxu0 %v1766
        %1768 = vmatprep.subr.mxu0 0.0
        %v1769 = vand.u32 %v1724, 4294901760
        %1770 = vmatpush1.msra.mxu0 %v1769
        %1771 = vmatprep.subr.mxu0 0.0
        %v1772 = vand.u32 %v1725, 4294901760
        %1773 = vmatpush1.msra.mxu0 %v1772
        %1774 = vmatprep.subr.mxu0 0.0
        %1775 = vmatpush1.msra.mxu0 0.0
        %1776 = vmatprep.subr.mxu0 0.0
        %1777 = vmatpush1.msra.mxu0 0.0
        %1778 = vmatprep.subr.mxu0 0.0
        %1779 = vmatpush1.msra.mxu0 0.0
        %1780 = vmatprep.subr.mxu0 0.0
        %1781 = vmatpush1.msra.mxu0 0.0
        %1782 = vmatprep.subr.mxu0 0.0
        %1783 = vmatpush1.msra.mxu0 0.0
        %1784 = vmatprep.subr.mxu0 0.0
        %1785 = vmatpush1.msra.mxu0 0.0
        %1786 = vmatprep.subr.mxu0 0.0
        %1787 = vmatpush1.msra.mxu0 0.0
        %1788 = vmatprep.subr.mxu0 0.0
        %1789 = vmatpush1.msra.mxu0 0.0
        %1790 = vmatprep.subr.mxu0 0.0
        %1791 = vmatpush1.msra.mxu0 0.0
        %1792 = vmatprep.subr.mxu0 0.0
        %1793 = vmatpush1.msra.mxu0 0.0
        %1794 = vmatprep.subr.mxu0 0.0
        %1795 = vmatpush1.msra.mxu0 0.0
        %1796 = vmatprep.subr.mxu0 0.0
        %1797 = vmatpush1.msra.mxu0 0.0
        %1798 = vmatprep.subr.mxu0 0.0
        %1799 = vmatpush1.msra.mxu0 0.0
        %1800 = vmatprep.subr.mxu0 0.0
        %1801 = vmatpush1.msra.mxu0 0.0
        %1802 = vmatprep.subr.mxu0 0.0
        %1803 = vmatpush1.msra.mxu0 0.0
        %1804 = vmatprep.subr.mxu0 0.0
        %1805 = vmatpush1.msra.mxu0 0.0
        %1806 = vmatprep.mubr.f32.mxu0 0.0
        %v1807 = vand.u32 %v328, 4294901760
        %v1808 = vsub.f32 %v328, %v1807
        %v1809 = vand.u32 %v1808, 4294901760
        %v1810 = vsub.f32 %v1808, %v1809
        %v1811 = vand.u32 %v1810, 4294901760
        %1812 = vmatmul.mubr.f32.gmra.mrb[0].mxu0 %v1811
        %v1813 = vpop.f32.mrb[0].mxu0
        %v1814 = vadd.f32 0.0, %v1813
        %v1815 = vpop.f32.mrb[0].mxu0
        %1816 = vmatprep.mubr.f32.mxu0 0.0
        %v1817 = vand.u32 %v329, 4294901760
        %v1818 = vsub.f32 %v329, %v1817
        %v1819 = vand.u32 %v1818, 4294901760
        %v1820 = vsub.f32 %v1818, %v1819
        %v1821 = vand.u32 %v1820, 4294901760
        %1822 = vmatmul.mubr.f32.gmra.mrb[0].mxu0 %v1821
        %v1823 = vpop.f32.mrb[0].mxu0
        %v1824 = vadd.f32 0.0, %v1823
        %v1825 = vpop.f32.mrb[0].mxu0
        %1826 = vmatprep.mubr.f32.mxu0 0.0
        %v1827 = vand.u32 %v330, 4294901760
        %v1828 = vsub.f32 %v330, %v1827
        %v1829 = vand.u32 %v1828, 4294901760
        %v1830 = vsub.f32 %v1828, %v1829
        %v1831 = vand.u32 %v1830, 4294901760
        %1832 = vmatmul.mubr.f32.gmra.mrb[0].mxu0 %v1831
        %v1833 = vpop.f32.mrb[0].mxu0
        %v1834 = vadd.f32 0.0, %v1833
        %v1835 = vpop.f32.mrb[0].mxu0
        %1836 = vmatprep.mubr.f32.mxu0 0.0
        %v1837 = vand.u32 %v331, 4294901760
        %v1838 = vsub.f32 %v331, %v1837
        %v1839 = vand.u32 %v1838, 4294901760
        %v1840 = vsub.f32 %v1838, %v1839
        %v1841 = vand.u32 %v1840, 4294901760
        %1842 = vmatmul.mubr.f32.gmra.mrb[0].mxu0 %v1841
        %v1843 = vpop.f32.mrb[0].mxu0
        %v1844 = vadd.f32 0.0, %v1843
        %v1845 = vpop.f32.mrb[0].mxu0
        %1846 = vmatprep.mubr.f32.mxu0 0.0
        %v1847 = vand.u32 %v332, 4294901760
        %v1848 = vsub.f32 %v332, %v1847
        %v1849 = vand.u32 %v1848, 4294901760
        %v1850 = vsub.f32 %v1848, %v1849
        %v1851 = vand.u32 %v1850, 4294901760
        %1852 = vmatmul.mubr.f32.gmra.mrb[0].mxu0 %v1851
        %v1853 = vpop.f32.mrb[0].mxu0
        %v1854 = vadd.f32 0.0, %v1853
        %v1855 = vpop.f32.mrb[0].mxu0
        %1856 = vmatprep.mubr.f32.mxu0 0.0
        %v1857 = vand.u32 %v333, 4294901760
        %v1858 = vsub.f32 %v333, %v1857
        %v1859 = vand.u32 %v1858, 4294901760
        %v1860 = vsub.f32 %v1858, %v1859
        %v1861 = vand.u32 %v1860, 4294901760
        %1862 = vmatmul.mubr.f32.gmra.mrb[0].mxu0 %v1861
        %v1863 = vpop.f32.mrb[0].mxu0
        %v1864 = vadd.f32 0.0, %v1863
        %v1865 = vpop.f32.mrb[0].mxu0
        %1866 = vmatprep.mubr.f32.mxu0 0.0
        %v1867 = vand.u32 %v334, 4294901760
        %v1868 = vsub.f32 %v334, %v1867
        %v1869 = vand.u32 %v1868, 4294901760
        %v1870 = vsub.f32 %v1868, %v1869
        %v1871 = vand.u32 %v1870, 4294901760
        %1872 = vmatmul.mubr.f32.gmra.mrb[0].mxu0 %v1871
        %v1873 = vpop.f32.mrb[0].mxu0
        %v1874 = vadd.f32 0.0, %v1873
        %v1875 = vpop.f32.mrb[0].mxu0
        %1876 = vmatprep.mubr.f32.mxu0 0.0
        %v1877 = vand.u32 %v335, 4294901760
        %v1878 = vsub.f32 %v335, %v1877
        %v1879 = vand.u32 %v1878, 4294901760
        %v1880 = vsub.f32 %v1878, %v1879
        %v1881 = vand.u32 %v1880, 4294901760
        %1882 = vmatmul.mubr.f32.gmra.mrb[0].mxu0 %v1881
        %v1883 = vpop.f32.mrb[0].mxu0
        %v1884 = vadd.f32 0.0, %v1883
        %v1885 = vpop.f32.mrb[0].mxu0
        %1886 = vmatprep.mubr.f32.mxu0 0.0
        %v1887 = vand.u32 %v336, 4294901760
        %v1888 = vsub.f32 %v336, %v1887
        %v1889 = vand.u32 %v1888, 4294901760
        %v1890 = vsub.f32 %v1888, %v1889
        %v1891 = vand.u32 %v1890, 4294901760
        %1892 = vmatmul.mubr.f32.gmra.mrb[0].mxu0 %v1891
        %v1893 = vpop.f32.mrb[0].mxu0
        %v1894 = vadd.f32 0.0, %v1893
        %v1895 = vpop.f32.mrb[0].mxu0
        %1896 = vmatprep.mubr.f32.mxu0 0.0
        %v1897 = vand.u32 %v337, 4294901760
        %v1898 = vsub.f32 %v337, %v1897
        %v1899 = vand.u32 %v1898, 4294901760
        %v1900 = vsub.f32 %v1898, %v1899
        %v1901 = vand.u32 %v1900, 4294901760
        %1902 = vmatmul.mubr.f32.gmra.mrb[0].mxu0 %v1901
        %v1903 = vpop.f32.mrb[0].mxu0
        %v1904 = vadd.f32 0.0, %v1903
        %v1905 = vpop.f32.mrb[0].mxu0
        %1906 = vmatprep.mubr.f32.mxu0 0.0
        %v1907 = vand.u32 %v338, 4294901760
        %v1908 = vsub.f32 %v338, %v1907
        %v1909 = vand.u32 %v1908, 4294901760
        %v1910 = vsub.f32 %v1908, %v1909
        %v1911 = vand.u32 %v1910, 4294901760
        %1912 = vmatmul.mubr.f32.gmra.mrb[0].mxu0 %v1911
        %v1913 = vpop.f32.mrb[0].mxu0
        %v1914 = vadd.f32 0.0, %v1913
        %v1915 = vpop.f32.mrb[0].mxu0
        %1916 = vmatprep.mubr.f32.mxu0 0.0
        %v1917 = vand.u32 %v339, 4294901760
        %v1918 = vsub.f32 %v339, %v1917
        %v1919 = vand.u32 %v1918, 4294901760
        %v1920 = vsub.f32 %v1918, %v1919
        %v1921 = vand.u32 %v1920, 4294901760
        %1922 = vmatmul.mubr.f32.gmra.mrb[0].mxu0 %v1921
        %v1923 = vpop.f32.mrb[0].mxu0
        %v1924 = vadd.f32 0.0, %v1923
        %v1925 = vpop.f32.mrb[0].mxu0
        %1926 = vmatprep.mubr.f32.mxu0 0.0
        %v1927 = vand.u32 %v340, 4294901760
        %v1928 = vsub.f32 %v340, %v1927
        %v1929 = vand.u32 %v1928, 4294901760
        %v1930 = vsub.f32 %v1928, %v1929
        %v1931 = vand.u32 %v1930, 4294901760
        %1932 = vmatmul.mubr.f32.gmra.mrb[0].mxu0 %v1931
        %v1933 = vpop.f32.mrb[0].mxu0
        %v1934 = vadd.f32 0.0, %v1933
        %v1935 = vpop.f32.mrb[0].mxu0
        %1936 = vmatprep.mubr.f32.mxu0 0.0
        %v1937 = vand.u32 %v341, 4294901760
        %v1938 = vsub.f32 %v341, %v1937
        %v1939 = vand.u32 %v1938, 4294901760
        %v1940 = vsub.f32 %v1938, %v1939
        %v1941 = vand.u32 %v1940, 4294901760
        %1942 = vmatmul.mubr.f32.gmra.mrb[0].mxu0 %v1941
        %v1943 = vpop.f32.mrb[0].mxu0
        %v1944 = vadd.f32 0.0, %v1943
        %v1945 = vpop.f32.mrb[0].mxu0
        %1946 = vmatprep.mubr.f32.mxu0 0.0
        %v1947 = vand.u32 %v342, 4294901760
        %v1948 = vsub.f32 %v342, %v1947
        %v1949 = vand.u32 %v1948, 4294901760
        %v1950 = vsub.f32 %v1948, %v1949
        %v1951 = vand.u32 %v1950, 4294901760
        %1952 = vmatmul.mubr.f32.gmra.mrb[0].mxu0 %v1951
        %v1953 = vpop.f32.mrb[0].mxu0
        %v1954 = vadd.f32 0.0, %v1953
        %v1955 = vpop.f32.mrb[0].mxu0
        %1956 = vmatprep.mubr.f32.mxu0 0.0
        %v1957 = vand.u32 %v343, 4294901760
        %v1958 = vsub.f32 %v343, %v1957
        %v1959 = vand.u32 %v1958, 4294901760
        %v1960 = vsub.f32 %v1958, %v1959
        %v1961 = vand.u32 %v1960, 4294901760
        %1962 = vmatmul.mubr.f32.gmra.mrb[0].mxu0 %v1961
        %v1963 = vpop.f32.mrb[0].mxu0
        %v1964 = vadd.f32 0.0, %v1963
        %v1965 = vpop.f32.mrb[0].mxu0
        %1966 = vdwg.mxu0
        %1967 = vmatprep.subr.mxu0 0.0
        %v1968 = vand.u32 %v1710, 4294901760
        %v1969 = vsub.f32 %v1710, %v1968
        %v1970 = vand.u32 %v1969, 4294901760
        %v1971 = vsub.f32 %v1969, %v1970
        %v1972 = vand.u32 %v1971, 4294901760
        %1973 = vmatpush1.msra.mxu0 %v1972
        %1974 = vmatprep.subr.mxu0 0.0
        %v1975 = vand.u32 %v1711, 4294901760
        %v1976 = vsub.f32 %v1711, %v1975
        %v1977 = vand.u32 %v1976, 4294901760
        %v1978 = vsub.f32 %v1976, %v1977
        %v1979 = vand.u32 %v1978, 4294901760
        %1980 = vmatpush1.msra.mxu0 %v1979
        %1981 = vmatprep.subr.mxu0 0.0
        %v1982 = vand.u32 %v1712, 4294901760
        %v1983 = vsub.f32 %v1712, %v1982
        %v1984 = vand.u32 %v1983, 4294901760
        %v1985 = vsub.f32 %v1983, %v1984
        %v1986 = vand.u32 %v1985, 4294901760
        %1987 = vmatpush1.msra.mxu0 %v1986
        %1988 = vmatprep.subr.mxu0 0.0
        %v1989 = vand.u32 %v1713, 4294901760
        %v1990 = vsub.f32 %v1713, %v1989
        %v1991 = vand.u32 %v1990, 4294901760
        %v1992 = vsub.f32 %v1990, %v1991
        %v1993 = vand.u32 %v1992, 4294901760
        %1994 = vmatpush1.msra.mxu0 %v1993
        %1995 = vmatprep.subr.mxu0 0.0
        %v1996 = vand.u32 %v1714, 4294901760
        %v1997 = vsub.f32 %v1714, %v1996
        %v1998 = vand.u32 %v1997, 4294901760
        %v1999 = vsub.f32 %v1997, %v1998
        %v2000 = vand.u32 %v1999, 4294901760
        %2001 = vmatpush1.msra.mxu0 %v2000
        %2002 = vmatprep.subr.mxu0 0.0
        %v2003 = vand.u32 %v1715, 4294901760
        %v2004 = vsub.f32 %v1715, %v2003
        %v2005 = vand.u32 %v2004, 4294901760
        %v2006 = vsub.f32 %v2004, %v2005
        %v2007 = vand.u32 %v2006, 4294901760
        %2008 = vmatpush1.msra.mxu0 %v2007
        %2009 = vmatprep.subr.mxu0 0.0
        %v2010 = vand.u32 %v1716, 4294901760
        %v2011 = vsub.f32 %v1716, %v2010
        %v2012 = vand.u32 %v2011, 4294901760
        %v2013 = vsub.f32 %v2011, %v2012
        %v2014 = vand.u32 %v2013, 4294901760
        %2015 = vmatpush1.msra.mxu0 %v2014
        %2016 = vmatprep.subr.mxu0 0.0
        %v2017 = vand.u32 %v1717, 4294901760
        %v2018 = vsub.f32 %v1717, %v2017
        %v2019 = vand.u32 %v2018, 4294901760
        %v2020 = vsub.f32 %v2018, %v2019
        %v2021 = vand.u32 %v2020, 4294901760
        %2022 = vmatpush1.msra.mxu0 %v2021
        %2023 = vmatprep.subr.mxu0 0.0
        %v2024 = vand.u32 %v1718, 4294901760
        %v2025 = vsub.f32 %v1718, %v2024
        %v2026 = vand.u32 %v2025, 4294901760
        %v2027 = vsub.f32 %v2025, %v2026
        %v2028 = vand.u32 %v2027, 4294901760
        %2029 = vmatpush1.msra.mxu0 %v2028
        %2030 = vmatprep.subr.mxu0 0.0
        %v2031 = vand.u32 %v1719, 4294901760
        %v2032 = vsub.f32 %v1719, %v2031
        %v2033 = vand.u32 %v2032, 4294901760
        %v2034 = vsub.f32 %v2032, %v2033
        %v2035 = vand.u32 %v2034, 4294901760
        %2036 = vmatpush1.msra.mxu0 %v2035
        %2037 = vmatprep.subr.mxu0 0.0
        %v2038 = vand.u32 %v1720, 4294901760
        %v2039 = vsub.f32 %v1720, %v2038
        %v2040 = vand.u32 %v2039, 4294901760
        %v2041 = vsub.f32 %v2039, %v2040
        %v2042 = vand.u32 %v2041, 4294901760
        %2043 = vmatpush1.msra.mxu0 %v2042
        %2044 = vmatprep.subr.mxu0 0.0
        %v2045 = vand.u32 %v1721, 4294901760
        %v2046 = vsub.f32 %v1721, %v2045
        %v2047 = vand.u32 %v2046, 4294901760
        %v2048 = vsub.f32 %v2046, %v2047
        %v2049 = vand.u32 %v2048, 4294901760
        %2050 = vmatpush1.msra.mxu0 %v2049
        %2051 = vmatprep.subr.mxu0 0.0
        %v2052 = vand.u32 %v1722, 4294901760
        %v2053 = vsub.f32 %v1722, %v2052
        %v2054 = vand.u32 %v2053, 4294901760
        %v2055 = vsub.f32 %v2053, %v2054
        %v2056 = vand.u32 %v2055, 4294901760
        %2057 = vmatpush1.msra.mxu0 %v2056
        %2058 = vmatprep.subr.mxu0 0.0
        %v2059 = vand.u32 %v1723, 4294901760
        %v2060 = vsub.f32 %v1723, %v2059
        %v2061 = vand.u32 %v2060, 4294901760
        %v2062 = vsub.f32 %v2060, %v2061
        %v2063 = vand.u32 %v2062, 4294901760
        %2064 = vmatpush1.msra.mxu0 %v2063
        %2065 = vmatprep.subr.mxu0 0.0
        %v2066 = vand.u32 %v1724, 4294901760
        %v2067 = vsub.f32 %v1724, %v2066
        %v2068 = vand.u32 %v2067, 4294901760
        %v2069 = vsub.f32 %v2067, %v2068
        %v2070 = vand.u32 %v2069, 4294901760
        %2071 = vmatpush1.msra.mxu0 %v2070
        %2072 = vmatprep.subr.mxu0 0.0
        %v2073 = vand.u32 %v1725, 4294901760
        %v2074 = vsub.f32 %v1725, %v2073
        %v2075 = vand.u32 %v2074, 4294901760
        %v2076 = vsub.f32 %v2074, %v2075
        %v2077 = vand.u32 %v2076, 4294901760
        %2078 = vmatpush1.msra.mxu0 %v2077
        %2079 = vmatprep.subr.mxu0 0.0
        %2080 = vmatpush1.msra.mxu0 0.0
        %2081 = vmatprep.subr.mxu0 0.0
        %2082 = vmatpush1.msra.mxu0 0.0
        %2083 = vmatprep.subr.mxu0 0.0
        %2084 = vmatpush1.msra.mxu0 0.0
        %2085 = vmatprep.subr.mxu0 0.0
        %2086 = vmatpush1.msra.mxu0 0.0
        %2087 = vmatprep.subr.mxu0 0.0
        %2088 = vmatpush1.msra.mxu0 0.0
        %2089 = vmatprep.subr.mxu0 0.0
        %2090 = vmatpush1.msra.mxu0 0.0
        %2091 = vmatprep.subr.mxu0 0.0
        %2092 = vmatpush1.msra.mxu0 0.0
        %2093 = vmatprep.subr.mxu0 0.0
        %2094 = vmatpush1.msra.mxu0 0.0
        %2095 = vmatprep.subr.mxu0 0.0
        %2096 = vmatpush1.msra.mxu0 0.0
        %2097 = vmatprep.subr.mxu0 0.0
        %2098 = vmatpush1.msra.mxu0 0.0
        %2099 = vmatprep.subr.mxu0 0.0
        %2100 = vmatpush1.msra.mxu0 0.0
        %2101 = vmatprep.subr.mxu0 0.0
        %2102 = vmatpush1.msra.mxu0 0.0
        %2103 = vmatprep.subr.mxu0 0.0
        %2104 = vmatpush1.msra.mxu0 0.0
        %2105 = vmatprep.subr.mxu0 0.0
        %2106 = vmatpush1.msra.mxu0 0.0
        %2107 = vmatprep.subr.mxu0 0.0
        %2108 = vmatpush1.msra.mxu0 0.0
        %2109 = vmatprep.subr.mxu0 0.0
        %2110 = vmatpush1.msra.mxu0 0.0
        %2111 = vmatprep.mubr.f32.mxu0 0.0
        %v2112 = vand.u32 %v328, 4294901760
        %2113 = vmatmul.mubr.f32.gmra.mrb[0].mxu0 %v2112
        %v2114 = vpop.f32.mrb[0].mxu0
        %v2115 = vadd.f32 %v1814, %v2114
        %v2116 = vpop.f32.mrb[0].mxu0
        %2117 = vmatprep.mubr.f32.mxu0 0.0
        %v2118 = vand.u32 %v329, 4294901760
        %2119 = vmatmul.mubr.f32.gmra.mrb[0].mxu0 %v2118
        %v2120 = vpop.f32.mrb[0].mxu0
        %v2121 = vadd.f32 %v1824, %v2120
        %v2122 = vpop.f32.mrb[0].mxu0
        %2123 = vmatprep.mubr.f32.mxu0 0.0
        %v2124 = vand.u32 %v330, 4294901760
        %2125 = vmatmul.mubr.f32.gmra.mrb[0].mxu0 %v2124
        %v2126 = vpop.f32.mrb[0].mxu0
        %v2127 = vadd.f32 %v1834, %v2126
        %v2128 = vpop.f32.mrb[0].mxu0
        %2129 = vmatprep.mubr.f32.mxu0 0.0
        %v2130 = vand.u32 %v331, 4294901760
        %2131 = vmatmul.mubr.f32.gmra.mrb[0].mxu0 %v2130
        %v2132 = vpop.f32.mrb[0].mxu0
        %v2133 = vadd.f32 %v1844, %v2132
        %v2134 = vpop.f32.mrb[0].mxu0
        %2135 = vmatprep.mubr.f32.mxu0 0.0
        %v2136 = vand.u32 %v332, 4294901760
        %2137 = vmatmul.mubr.f32.gmra.mrb[0].mxu0 %v2136
        %v2138 = vpop.f32.mrb[0].mxu0
        %v2139 = vadd.f32 %v1854, %v2138
        %v2140 = vpop.f32.mrb[0].mxu0
        %2141 = vmatprep.mubr.f32.mxu0 0.0
        %v2142 = vand.u32 %v333, 4294901760
        %2143 = vmatmul.mubr.f32.gmra.mrb[0].mxu0 %v2142
        %v2144 = vpop.f32.mrb[0].mxu0
        %v2145 = vadd.f32 %v1864, %v2144
        %v2146 = vpop.f32.mrb[0].mxu0
        %2147 = vmatprep.mubr.f32.mxu0 0.0
        %v2148 = vand.u32 %v334, 4294901760
        %2149 = vmatmul.mubr.f32.gmra.mrb[0].mxu0 %v2148
        %v2150 = vpop.f32.mrb[0].mxu0
        %v2151 = vadd.f32 %v1874, %v2150
        %v2152 = vpop.f32.mrb[0].mxu0
        %2153 = vmatprep.mubr.f32.mxu0 0.0
        %v2154 = vand.u32 %v335, 4294901760
        %2155 = vmatmul.mubr.f32.gmra.mrb[0].mxu0 %v2154
        %v2156 = vpop.f32.mrb[0].mxu0
        %v2157 = vadd.f32 %v1884, %v2156
        %v2158 = vpop.f32.mrb[0].mxu0
        %2159 = vmatprep.mubr.f32.mxu0 0.0
        %v2160 = vand.u32 %v336, 4294901760
        %2161 = vmatmul.mubr.f32.gmra.mrb[0].mxu0 %v2160
        %v2162 = vpop.f32.mrb[0].mxu0
        %v2163 = vadd.f32 %v1894, %v2162
        %v2164 = vpop.f32.mrb[0].mxu0
        %2165 = vmatprep.mubr.f32.mxu0 0.0
        %v2166 = vand.u32 %v337, 4294901760
        %2167 = vmatmul.mubr.f32.gmra.mrb[0].mxu0 %v2166
        %v2168 = vpop.f32.mrb[0].mxu0
        %v2169 = vadd.f32 %v1904, %v2168
        %v2170 = vpop.f32.mrb[0].mxu0
        %2171 = vmatprep.mubr.f32.mxu0 0.0
        %v2172 = vand.u32 %v338, 4294901760
        %2173 = vmatmul.mubr.f32.gmra.mrb[0].mxu0 %v2172
        %v2174 = vpop.f32.mrb[0].mxu0
        %v2175 = vadd.f32 %v1914, %v2174
        %v2176 = vpop.f32.mrb[0].mxu0
        %2177 = vmatprep.mubr.f32.mxu0 0.0
        %v2178 = vand.u32 %v339, 4294901760
        %2179 = vmatmul.mubr.f32.gmra.mrb[0].mxu0 %v2178
        %v2180 = vpop.f32.mrb[0].mxu0
        %v2181 = vadd.f32 %v1924, %v2180
        %v2182 = vpop.f32.mrb[0].mxu0
        %2183 = vmatprep.mubr.f32.mxu0 0.0
        %v2184 = vand.u32 %v340, 4294901760
        %2185 = vmatmul.mubr.f32.gmra.mrb[0].mxu0 %v2184
        %v2186 = vpop.f32.mrb[0].mxu0
        %v2187 = vadd.f32 %v1934, %v2186
        %v2188 = vpop.f32.mrb[0].mxu0
        %2189 = vmatprep.mubr.f32.mxu0 0.0
        %v2190 = vand.u32 %v341, 4294901760
        %2191 = vmatmul.mubr.f32.gmra.mrb[0].mxu0 %v2190
        %v2192 = vpop.f32.mrb[0].mxu0
        %v2193 = vadd.f32 %v1944, %v2192
        %v2194 = vpop.f32.mrb[0].mxu0
        %2195 = vmatprep.mubr.f32.mxu0 0.0
        %v2196 = vand.u32 %v342, 4294901760
        %2197 = vmatmul.mubr.f32.gmra.mrb[0].mxu0 %v2196
        %v2198 = vpop.f32.mrb[0].mxu0
        %v2199 = vadd.f32 %v1954, %v2198
        %v2200 = vpop.f32.mrb[0].mxu0
        %2201 = vmatprep.mubr.f32.mxu0 0.0
        %v2202 = vand.u32 %v343, 4294901760
        %2203 = vmatmul.mubr.f32.gmra.mrb[0].mxu0 %v2202
        %v2204 = vpop.f32.mrb[0].mxu0
        %v2205 = vadd.f32 %v1964, %v2204
        %v2206 = vpop.f32.mrb[0].mxu0
        %2207 = vdwg.mxu0
        %2208 = vmatprep.subr.mxu0 0.0
        %v2209 = vand.u32 %v1710, 4294901760
        %v2210 = vsub.f32 %v1710, %v2209
        %2211 = vmatpush1.msra.mxu0 %v2210
        %2212 = vmatprep.subr.mxu0 0.0
        %v2213 = vand.u32 %v1711, 4294901760
        %v2214 = vsub.f32 %v1711, %v2213
        %2215 = vmatpush1.msra.mxu0 %v2214
        %2216 = vmatprep.subr.mxu0 0.0
        %v2217 = vand.u32 %v1712, 4294901760
        %v2218 = vsub.f32 %v1712, %v2217
        %2219 = vmatpush1.msra.mxu0 %v2218
        %2220 = vmatprep.subr.mxu0 0.0
        %v2221 = vand.u32 %v1713, 4294901760
        %v2222 = vsub.f32 %v1713, %v2221
        %2223 = vmatpush1.msra.mxu0 %v2222
        %2224 = vmatprep.subr.mxu0 0.0
        %v2225 = vand.u32 %v1714, 4294901760
        %v2226 = vsub.f32 %v1714, %v2225
        %2227 = vmatpush1.msra.mxu0 %v2226
        %2228 = vmatprep.subr.mxu0 0.0
        %v2229 = vand.u32 %v1715, 4294901760
        %v2230 = vsub.f32 %v1715, %v2229
        %2231 = vmatpush1.msra.mxu0 %v2230
        %2232 = vmatprep.subr.mxu0 0.0
        %v2233 = vand.u32 %v1716, 4294901760
        %v2234 = vsub.f32 %v1716, %v2233
        %2235 = vmatpush1.msra.mxu0 %v2234
        %2236 = vmatprep.subr.mxu0 0.0
        %v2237 = vand.u32 %v1717, 4294901760
        %v2238 = vsub.f32 %v1717, %v2237
        %2239 = vmatpush1.msra.mxu0 %v2238
        %2240 = vmatprep.subr.mxu0 0.0
        %v2241 = vand.u32 %v1718, 4294901760
        %v2242 = vsub.f32 %v1718, %v2241
        %2243 = vmatpush1.msra.mxu0 %v2242
        %2244 = vmatprep.subr.mxu0 0.0
        %v2245 = vand.u32 %v1719, 4294901760
        %v2246 = vsub.f32 %v1719, %v2245
        %2247 = vmatpush1.msra.mxu0 %v2246
        %2248 = vmatprep.subr.mxu0 0.0
        %v2249 = vand.u32 %v1720, 4294901760
        %v2250 = vsub.f32 %v1720, %v2249
        %2251 = vmatpush1.msra.mxu0 %v2250
        %2252 = vmatprep.subr.mxu0 0.0
        %v2253 = vand.u32 %v1721, 4294901760
        %v2254 = vsub.f32 %v1721, %v2253
        %2255 = vmatpush1.msra.mxu0 %v2254
        %2256 = vmatprep.subr.mxu0 0.0
        %v2257 = vand.u32 %v1722, 4294901760
        %v2258 = vsub.f32 %v1722, %v2257
        %2259 = vmatpush1.msra.mxu0 %v2258
        %2260 = vmatprep.subr.mxu0 0.0
        %v2261 = vand.u32 %v1723, 4294901760
        %v2262 = vsub.f32 %v1723, %v2261
        %2263 = vmatpush1.msra.mxu0 %v2262
        %2264 = vmatprep.subr.mxu0 0.0
        %v2265 = vand.u32 %v1724, 4294901760
        %v2266 = vsub.f32 %v1724, %v2265
        %2267 = vmatpush1.msra.mxu0 %v2266
        %2268 = vmatprep.subr.mxu0 0.0
        %v2269 = vand.u32 %v1725, 4294901760
        %v2270 = vsub.f32 %v1725, %v2269
        %2271 = vmatpush1.msra.mxu0 %v2270
        %2272 = vmatprep.subr.mxu0 0.0
        %2273 = vmatpush1.msra.mxu0 0.0
        %2274 = vmatprep.subr.mxu0 0.0
        %2275 = vmatpush1.msra.mxu0 0.0
        %2276 = vmatprep.subr.mxu0 0.0
        %2277 = vmatpush1.msra.mxu0 0.0
        %2278 = vmatprep.subr.mxu0 0.0
        %2279 = vmatpush1.msra.mxu0 0.0
        %2280 = vmatprep.subr.mxu0 0.0
        %2281 = vmatpush1.msra.mxu0 0.0
        %2282 = vmatprep.subr.mxu0 0.0
        %2283 = vmatpush1.msra.mxu0 0.0
        %2284 = vmatprep.subr.mxu0 0.0
        %2285 = vmatpush1.msra.mxu0 0.0
        %2286 = vmatprep.subr.mxu0 0.0
        %2287 = vmatpush1.msra.mxu0 0.0
        %2288 = vmatprep.subr.mxu0 0.0
        %2289 = vmatpush1.msra.mxu0 0.0
        %2290 = vmatprep.subr.mxu0 0.0
        %2291 = vmatpush1.msra.mxu0 0.0
        %2292 = vmatprep.subr.mxu0 0.0
        %2293 = vmatpush1.msra.mxu0 0.0
        %2294 = vmatprep.subr.mxu0 0.0
        %2295 = vmatpush1.msra.mxu0 0.0
        %2296 = vmatprep.subr.mxu0 0.0
        %2297 = vmatpush1.msra.mxu0 0.0
        %2298 = vmatprep.subr.mxu0 0.0
        %2299 = vmatpush1.msra.mxu0 0.0
        %2300 = vmatprep.subr.mxu0 0.0
        %2301 = vmatpush1.msra.mxu0 0.0
        %2302 = vmatprep.subr.mxu0 0.0
        %2303 = vmatpush1.msra.mxu0 0.0
        %2304 = vmatprep.mubr.f32.mxu0 0.0
        %v2305 = vand.u32 %v328, 4294901760
        %v2306 = vsub.f32 %v328, %v2305
        %2307 = vmatmul.mubr.f32.gmra.mrb[0].mxu0 %v2306
        %v2308 = vpop.f32.mrb[0].mxu0
        %v2309 = vadd.f32 %v2115, %v2308
        %v2310 = vpop.f32.mrb[0].mxu0
        %2311 = vmatprep.mubr.f32.mxu0 0.0
        %v2312 = vand.u32 %v329, 4294901760
        %v2313 = vsub.f32 %v329, %v2312
        %2314 = vmatmul.mubr.f32.gmra.mrb[0].mxu0 %v2313
        %v2315 = vpop.f32.mrb[0].mxu0
        %v2316 = vadd.f32 %v2121, %v2315
        %v2317 = vpop.f32.mrb[0].mxu0
        %2318 = vmatprep.mubr.f32.mxu0 0.0
        %v2319 = vand.u32 %v330, 4294901760
        %v2320 = vsub.f32 %v330, %v2319
        %2321 = vmatmul.mubr.f32.gmra.mrb[0].mxu0 %v2320
        %v2322 = vpop.f32.mrb[0].mxu0
        %v2323 = vadd.f32 %v2127, %v2322
        %v2324 = vpop.f32.mrb[0].mxu0
        %2325 = vmatprep.mubr.f32.mxu0 0.0
        %v2326 = vand.u32 %v331, 4294901760
        %v2327 = vsub.f32 %v331, %v2326
        %2328 = vmatmul.mubr.f32.gmra.mrb[0].mxu0 %v2327
        %v2329 = vpop.f32.mrb[0].mxu0
        %v2330 = vadd.f32 %v2133, %v2329
        %v2331 = vpop.f32.mrb[0].mxu0
        %2332 = vmatprep.mubr.f32.mxu0 0.0
        %v2333 = vand.u32 %v332, 4294901760
        %v2334 = vsub.f32 %v332, %v2333
        %2335 = vmatmul.mubr.f32.gmra.mrb[0].mxu0 %v2334
        %v2336 = vpop.f32.mrb[0].mxu0
        %v2337 = vadd.f32 %v2139, %v2336
        %v2338 = vpop.f32.mrb[0].mxu0
        %2339 = vmatprep.mubr.f32.mxu0 0.0
        %v2340 = vand.u32 %v333, 4294901760
        %v2341 = vsub.f32 %v333, %v2340
        %2342 = vmatmul.mubr.f32.gmra.mrb[0].mxu0 %v2341
        %v2343 = vpop.f32.mrb[0].mxu0
        %v2344 = vadd.f32 %v2145, %v2343
        %v2345 = vpop.f32.mrb[0].mxu0
        %2346 = vmatprep.mubr.f32.mxu0 0.0
        %v2347 = vand.u32 %v334, 4294901760
        %v2348 = vsub.f32 %v334, %v2347
        %2349 = vmatmul.mubr.f32.gmra.mrb[0].mxu0 %v2348
        %v2350 = vpop.f32.mrb[0].mxu0
        %v2351 = vadd.f32 %v2151, %v2350
        %v2352 = vpop.f32.mrb[0].mxu0
        %2353 = vmatprep.mubr.f32.mxu0 0.0
        %v2354 = vand.u32 %v335, 4294901760
        %v2355 = vsub.f32 %v335, %v2354
        %2356 = vmatmul.mubr.f32.gmra.mrb[0].mxu0 %v2355
        %v2357 = vpop.f32.mrb[0].mxu0
        %v2358 = vadd.f32 %v2157, %v2357
        %v2359 = vpop.f32.mrb[0].mxu0
        %2360 = vmatprep.mubr.f32.mxu0 0.0
        %v2361 = vand.u32 %v336, 4294901760
        %v2362 = vsub.f32 %v336, %v2361
        %2363 = vmatmul.mubr.f32.gmra.mrb[0].mxu0 %v2362
        %v2364 = vpop.f32.mrb[0].mxu0
        %v2365 = vadd.f32 %v2163, %v2364
        %v2366 = vpop.f32.mrb[0].mxu0
        %2367 = vmatprep.mubr.f32.mxu0 0.0
        %v2368 = vand.u32 %v337, 4294901760
        %v2369 = vsub.f32 %v337, %v2368
        %2370 = vmatmul.mubr.f32.gmra.mrb[0].mxu0 %v2369
        %v2371 = vpop.f32.mrb[0].mxu0
        %v2372 = vadd.f32 %v2169, %v2371
        %v2373 = vpop.f32.mrb[0].mxu0
        %2374 = vmatprep.mubr.f32.mxu0 0.0
        %v2375 = vand.u32 %v338, 4294901760
        %v2376 = vsub.f32 %v338, %v2375
        %2377 = vmatmul.mubr.f32.gmra.mrb[0].mxu0 %v2376
        %v2378 = vpop.f32.mrb[0].mxu0
        %v2379 = vadd.f32 %v2175, %v2378
        %v2380 = vpop.f32.mrb[0].mxu0
        %2381 = vmatprep.mubr.f32.mxu0 0.0
        %v2382 = vand.u32 %v339, 4294901760
        %v2383 = vsub.f32 %v339, %v2382
        %2384 = vmatmul.mubr.f32.gmra.mrb[0].mxu0 %v2383
        %v2385 = vpop.f32.mrb[0].mxu0
        %v2386 = vadd.f32 %v2181, %v2385
        %v2387 = vpop.f32.mrb[0].mxu0
        %2388 = vmatprep.mubr.f32.mxu0 0.0
        %v2389 = vand.u32 %v340, 4294901760
        %v2390 = vsub.f32 %v340, %v2389
        %2391 = vmatmul.mubr.f32.gmra.mrb[0].mxu0 %v2390
        %v2392 = vpop.f32.mrb[0].mxu0
        %v2393 = vadd.f32 %v2187, %v2392
        %v2394 = vpop.f32.mrb[0].mxu0
        %2395 = vmatprep.mubr.f32.mxu0 0.0
        %v2396 = vand.u32 %v341, 4294901760
        %v2397 = vsub.f32 %v341, %v2396
        %2398 = vmatmul.mubr.f32.gmra.mrb[0].mxu0 %v2397
        %v2399 = vpop.f32.mrb[0].mxu0
        %v2400 = vadd.f32 %v2193, %v2399
        %v2401 = vpop.f32.mrb[0].mxu0
        %2402 = vmatprep.mubr.f32.mxu0 0.0
        %v2403 = vand.u32 %v342, 4294901760
        %v2404 = vsub.f32 %v342, %v2403
        %2405 = vmatmul.mubr.f32.gmra.mrb[0].mxu0 %v2404
        %v2406 = vpop.f32.mrb[0].mxu0
        %v2407 = vadd.f32 %v2199, %v2406
        %v2408 = vpop.f32.mrb[0].mxu0
        %2409 = vmatprep.mubr.f32.mxu0 0.0
        %v2410 = vand.u32 %v343, 4294901760
        %v2411 = vsub.f32 %v343, %v2410
        %2412 = vmatmul.mubr.f32.gmra.mrb[0].mxu0 %v2411
        %v2413 = vpop.f32.mrb[0].mxu0
        %v2414 = vadd.f32 %v2205, %v2413
        %v2415 = vpop.f32.mrb[0].mxu0
        %2416 = vdwg.mxu0
        %2417 = vmatprep.subr.mxu0 0.0
        %v2418 = vand.u32 %v1710, 4294901760
        %2419 = vmatpush1.msra.mxu0 %v2418
        %2420 = vmatprep.subr.mxu0 0.0
        %v2421 = vand.u32 %v1711, 4294901760
        %2422 = vmatpush1.msra.mxu0 %v2421
        %2423 = vmatprep.subr.mxu0 0.0
        %v2424 = vand.u32 %v1712, 4294901760
        %2425 = vmatpush1.msra.mxu0 %v2424
        %2426 = vmatprep.subr.mxu0 0.0
        %v2427 = vand.u32 %v1713, 4294901760
        %2428 = vmatpush1.msra.mxu0 %v2427
        %2429 = vmatprep.subr.mxu0 0.0
        %v2430 = vand.u32 %v1714, 4294901760
        %2431 = vmatpush1.msra.mxu0 %v2430
        %2432 = vmatprep.subr.mxu0 0.0
        %v2433 = vand.u32 %v1715, 4294901760
        %2434 = vmatpush1.msra.mxu0 %v2433
        %2435 = vmatprep.subr.mxu0 0.0
        %v2436 = vand.u32 %v1716, 4294901760
        %2437 = vmatpush1.msra.mxu0 %v2436
        %2438 = vmatprep.subr.mxu0 0.0
        %v2439 = vand.u32 %v1717, 4294901760
        %2440 = vmatpush1.msra.mxu0 %v2439
        %2441 = vmatprep.subr.mxu0 0.0
        %v2442 = vand.u32 %v1718, 4294901760
        %2443 = vmatpush1.msra.mxu0 %v2442
        %2444 = vmatprep.subr.mxu0 0.0
        %v2445 = vand.u32 %v1719, 4294901760
        %2446 = vmatpush1.msra.mxu0 %v2445
        %2447 = vmatprep.subr.mxu0 0.0
        %v2448 = vand.u32 %v1720, 4294901760
        %2449 = vmatpush1.msra.mxu0 %v2448
        %2450 = vmatprep.subr.mxu0 0.0
        %v2451 = vand.u32 %v1721, 4294901760
        %2452 = vmatpush1.msra.mxu0 %v2451
        %2453 = vmatprep.subr.mxu0 0.0
        %v2454 = vand.u32 %v1722, 4294901760
        %2455 = vmatpush1.msra.mxu0 %v2454
        %2456 = vmatprep.subr.mxu0 0.0
        %v2457 = vand.u32 %v1723, 4294901760
        %2458 = vmatpush1.msra.mxu0 %v2457
        %2459 = vmatprep.subr.mxu0 0.0
        %v2460 = vand.u32 %v1724, 4294901760
        %2461 = vmatpush1.msra.mxu0 %v2460
        %2462 = vmatprep.subr.mxu0 0.0
        %v2463 = vand.u32 %v1725, 4294901760
        %2464 = vmatpush1.msra.mxu0 %v2463
        %2465 = vmatprep.subr.mxu0 0.0
        %2466 = vmatpush1.msra.mxu0 0.0
        %2467 = vmatprep.subr.mxu0 0.0
        %2468 = vmatpush1.msra.mxu0 0.0
        %2469 = vmatprep.subr.mxu0 0.0
        %2470 = vmatpush1.msra.mxu0 0.0
        %2471 = vmatprep.subr.mxu0 0.0
        %2472 = vmatpush1.msra.mxu0 0.0
        %2473 = vmatprep.subr.mxu0 0.0
        %2474 = vmatpush1.msra.mxu0 0.0
        %2475 = vmatprep.subr.mxu0 0.0
        %2476 = vmatpush1.msra.mxu0 0.0
        %2477 = vmatprep.subr.mxu0 0.0
        %2478 = vmatpush1.msra.mxu0 0.0
        %2479 = vmatprep.subr.mxu0 0.0
        %2480 = vmatpush1.msra.mxu0 0.0
        %2481 = vmatprep.subr.mxu0 0.0
        %2482 = vmatpush1.msra.mxu0 0.0
        %2483 = vmatprep.subr.mxu0 0.0
        %2484 = vmatpush1.msra.mxu0 0.0
        %2485 = vmatprep.subr.mxu0 0.0
        %2486 = vmatpush1.msra.mxu0 0.0
        %2487 = vmatprep.subr.mxu0 0.0
        %2488 = vmatpush1.msra.mxu0 0.0
        %2489 = vmatprep.subr.mxu0 0.0
        %2490 = vmatpush1.msra.mxu0 0.0
        %2491 = vmatprep.subr.mxu0 0.0
        %2492 = vmatpush1.msra.mxu0 0.0
        %2493 = vmatprep.subr.mxu0 0.0
        %2494 = vmatpush1.msra.mxu0 0.0
        %2495 = vmatprep.subr.mxu0 0.0
        %2496 = vmatpush1.msra.mxu0 0.0
        %2497 = vmatprep.mubr.f32.mxu0 0.0
        %v2498 = vand.u32 %v328, 4294901760
        %v2499 = vsub.f32 %v328, %v2498
        %v2500 = vand.u32 %v2499, 4294901760
        %2501 = vmatmul.mubr.f32.gmra.mrb[0].mxu0 %v2500
        %v2502 = vpop.f32.mrb[0].mxu0
        %v2503 = vadd.f32 %v2309, %v2502
        %v2504 = vpop.f32.mrb[0].mxu0
        %2505 = vmatprep.mubr.f32.mxu0 0.0
        %v2506 = vand.u32 %v329, 4294901760
        %v2507 = vsub.f32 %v329, %v2506
        %v2508 = vand.u32 %v2507, 4294901760
        %2509 = vmatmul.mubr.f32.gmra.mrb[0].mxu0 %v2508
        %v2510 = vpop.f32.mrb[0].mxu0
        %v2511 = vadd.f32 %v2316, %v2510
        %v2512 = vpop.f32.mrb[0].mxu0
        %2513 = vmatprep.mubr.f32.mxu0 0.0
        %v2514 = vand.u32 %v330, 4294901760
        %v2515 = vsub.f32 %v330, %v2514
        %v2516 = vand.u32 %v2515, 4294901760
        %2517 = vmatmul.mubr.f32.gmra.mrb[0].mxu0 %v2516
        %v2518 = vpop.f32.mrb[0].mxu0
        %v2519 = vadd.f32 %v2323, %v2518
        %v2520 = vpop.f32.mrb[0].mxu0
        %2521 = vmatprep.mubr.f32.mxu0 0.0
        %v2522 = vand.u32 %v331, 4294901760
        %v2523 = vsub.f32 %v331, %v2522
        %v2524 = vand.u32 %v2523, 4294901760
        %2525 = vmatmul.mubr.f32.gmra.mrb[0].mxu0 %v2524
        %v2526 = vpop.f32.mrb[0].mxu0
        %v2527 = vadd.f32 %v2330, %v2526
        %v2528 = vpop.f32.mrb[0].mxu0
        %2529 = vmatprep.mubr.f32.mxu0 0.0
        %v2530 = vand.u32 %v332, 4294901760
        %v2531 = vsub.f32 %v332, %v2530
        %v2532 = vand.u32 %v2531, 4294901760
        %2533 = vmatmul.mubr.f32.gmra.mrb[0].mxu0 %v2532
        %v2534 = vpop.f32.mrb[0].mxu0
        %v2535 = vadd.f32 %v2337, %v2534
        %v2536 = vpop.f32.mrb[0].mxu0
        %2537 = vmatprep.mubr.f32.mxu0 0.0
        %v2538 = vand.u32 %v333, 4294901760
        %v2539 = vsub.f32 %v333, %v2538
        %v2540 = vand.u32 %v2539, 4294901760
        %2541 = vmatmul.mubr.f32.gmra.mrb[0].mxu0 %v2540
        %v2542 = vpop.f32.mrb[0].mxu0
        %v2543 = vadd.f32 %v2344, %v2542
        %v2544 = vpop.f32.mrb[0].mxu0
        %2545 = vmatprep.mubr.f32.mxu0 0.0
        %v2546 = vand.u32 %v334, 4294901760
        %v2547 = vsub.f32 %v334, %v2546
        %v2548 = vand.u32 %v2547, 4294901760
        %2549 = vmatmul.mubr.f32.gmra.mrb[0].mxu0 %v2548
        %v2550 = vpop.f32.mrb[0].mxu0
        %v2551 = vadd.f32 %v2351, %v2550
        %v2552 = vpop.f32.mrb[0].mxu0
        %2553 = vmatprep.mubr.f32.mxu0 0.0
        %v2554 = vand.u32 %v335, 4294901760
        %v2555 = vsub.f32 %v335, %v2554
        %v2556 = vand.u32 %v2555, 4294901760
        %2557 = vmatmul.mubr.f32.gmra.mrb[0].mxu0 %v2556
        %v2558 = vpop.f32.mrb[0].mxu0
        %v2559 = vadd.f32 %v2358, %v2558
        %v2560 = vpop.f32.mrb[0].mxu0
        %2561 = vmatprep.mubr.f32.mxu0 0.0
        %v2562 = vand.u32 %v336, 4294901760
        %v2563 = vsub.f32 %v336, %v2562
        %v2564 = vand.u32 %v2563, 4294901760
        %2565 = vmatmul.mubr.f32.gmra.mrb[0].mxu0 %v2564
        %v2566 = vpop.f32.mrb[0].mxu0
        %v2567 = vadd.f32 %v2365, %v2566
        %v2568 = vpop.f32.mrb[0].mxu0
        %2569 = vmatprep.mubr.f32.mxu0 0.0
        %v2570 = vand.u32 %v337, 4294901760
        %v2571 = vsub.f32 %v337, %v2570
        %v2572 = vand.u32 %v2571, 4294901760
        %2573 = vmatmul.mubr.f32.gmra.mrb[0].mxu0 %v2572
        %v2574 = vpop.f32.mrb[0].mxu0
        %v2575 = vadd.f32 %v2372, %v2574
        %v2576 = vpop.f32.mrb[0].mxu0
        %2577 = vmatprep.mubr.f32.mxu0 0.0
        %v2578 = vand.u32 %v338, 4294901760
        %v2579 = vsub.f32 %v338, %v2578
        %v2580 = vand.u32 %v2579, 4294901760
        %2581 = vmatmul.mubr.f32.gmra.mrb[0].mxu0 %v2580
        %v2582 = vpop.f32.mrb[0].mxu0
        %v2583 = vadd.f32 %v2379, %v2582
        %v2584 = vpop.f32.mrb[0].mxu0
        %2585 = vmatprep.mubr.f32.mxu0 0.0
        %v2586 = vand.u32 %v339, 4294901760
        %v2587 = vsub.f32 %v339, %v2586
        %v2588 = vand.u32 %v2587, 4294901760
        %2589 = vmatmul.mubr.f32.gmra.mrb[0].mxu0 %v2588
        %v2590 = vpop.f32.mrb[0].mxu0
        %v2591 = vadd.f32 %v2386, %v2590
        %v2592 = vpop.f32.mrb[0].mxu0
        %2593 = vmatprep.mubr.f32.mxu0 0.0
        %v2594 = vand.u32 %v340, 4294901760
        %v2595 = vsub.f32 %v340, %v2594
        %v2596 = vand.u32 %v2595, 4294901760
        %2597 = vmatmul.mubr.f32.gmra.mrb[0].mxu0 %v2596
        %v2598 = vpop.f32.mrb[0].mxu0
        %v2599 = vadd.f32 %v2393, %v2598
        %v2600 = vpop.f32.mrb[0].mxu0
        %2601 = vmatprep.mubr.f32.mxu0 0.0
        %v2602 = vand.u32 %v341, 4294901760
        %v2603 = vsub.f32 %v341, %v2602
        %v2604 = vand.u32 %v2603, 4294901760
        %2605 = vmatmul.mubr.f32.gmra.mrb[0].mxu0 %v2604
        %v2606 = vpop.f32.mrb[0].mxu0
        %v2607 = vadd.f32 %v2400, %v2606
        %v2608 = vpop.f32.mrb[0].mxu0
        %2609 = vmatprep.mubr.f32.mxu0 0.0
        %v2610 = vand.u32 %v342, 4294901760
        %v2611 = vsub.f32 %v342, %v2610
        %v2612 = vand.u32 %v2611, 4294901760
        %2613 = vmatmul.mubr.f32.gmra.mrb[0].mxu0 %v2612
        %v2614 = vpop.f32.mrb[0].mxu0
        %v2615 = vadd.f32 %v2407, %v2614
        %v2616 = vpop.f32.mrb[0].mxu0
        %2617 = vmatprep.mubr.f32.mxu0 0.0
        %v2618 = vand.u32 %v343, 4294901760
        %v2619 = vsub.f32 %v343, %v2618
        %v2620 = vand.u32 %v2619, 4294901760
        %2621 = vmatmul.mubr.f32.gmra.mrb[0].mxu0 %v2620
        %v2622 = vpop.f32.mrb[0].mxu0
        %v2623 = vadd.f32 %v2414, %v2622
        %v2624 = vpop.f32.mrb[0].mxu0
        %2625 = vdwg.mxu0
        %2626 = vmatprep.subr.mxu0 0.0
        %v2627 = vand.u32 %v1710, 4294901760
        %v2628 = vsub.f32 %v1710, %v2627
        %v2629 = vand.u32 %v2628, 4294901760
        %2630 = vmatpush1.msra.mxu0 %v2629
        %2631 = vmatprep.subr.mxu0 0.0
        %v2632 = vand.u32 %v1711, 4294901760
        %v2633 = vsub.f32 %v1711, %v2632
        %v2634 = vand.u32 %v2633, 4294901760
        %2635 = vmatpush1.msra.mxu0 %v2634
        %2636 = vmatprep.subr.mxu0 0.0
        %v2637 = vand.u32 %v1712, 4294901760
        %v2638 = vsub.f32 %v1712, %v2637
        %v2639 = vand.u32 %v2638, 4294901760
        %2640 = vmatpush1.msra.mxu0 %v2639
        %2641 = vmatprep.subr.mxu0 0.0
        %v2642 = vand.u32 %v1713, 4294901760
        %v2643 = vsub.f32 %v1713, %v2642
        %v2644 = vand.u32 %v2643, 4294901760
        %2645 = vmatpush1.msra.mxu0 %v2644
        %2646 = vmatprep.subr.mxu0 0.0
        %v2647 = vand.u32 %v1714, 4294901760
        %v2648 = vsub.f32 %v1714, %v2647
        %v2649 = vand.u32 %v2648, 4294901760
        %2650 = vmatpush1.msra.mxu0 %v2649
        %2651 = vmatprep.subr.mxu0 0.0
        %v2652 = vand.u32 %v1715, 4294901760
        %v2653 = vsub.f32 %v1715, %v2652
        %v2654 = vand.u32 %v2653, 4294901760
        %2655 = vmatpush1.msra.mxu0 %v2654
        %2656 = vmatprep.subr.mxu0 0.0
        %v2657 = vand.u32 %v1716, 4294901760
        %v2658 = vsub.f32 %v1716, %v2657
        %v2659 = vand.u32 %v2658, 4294901760
        %2660 = vmatpush1.msra.mxu0 %v2659
        %2661 = vmatprep.subr.mxu0 0.0
        %v2662 = vand.u32 %v1717, 4294901760
        %v2663 = vsub.f32 %v1717, %v2662
        %v2664 = vand.u32 %v2663, 4294901760
        %2665 = vmatpush1.msra.mxu0 %v2664
        %2666 = vmatprep.subr.mxu0 0.0
        %v2667 = vand.u32 %v1718, 4294901760
        %v2668 = vsub.f32 %v1718, %v2667
        %v2669 = vand.u32 %v2668, 4294901760
        %2670 = vmatpush1.msra.mxu0 %v2669
        %2671 = vmatprep.subr.mxu0 0.0
        %v2672 = vand.u32 %v1719, 4294901760
        %v2673 = vsub.f32 %v1719, %v2672
        %v2674 = vand.u32 %v2673, 4294901760
        %2675 = vmatpush1.msra.mxu0 %v2674
        %2676 = vmatprep.subr.mxu0 0.0
        %v2677 = vand.u32 %v1720, 4294901760
        %v2678 = vsub.f32 %v1720, %v2677
        %v2679 = vand.u32 %v2678, 4294901760
        %2680 = vmatpush1.msra.mxu0 %v2679
        %2681 = vmatprep.subr.mxu0 0.0
        %v2682 = vand.u32 %v1721, 4294901760
        %v2683 = vsub.f32 %v1721, %v2682
        %v2684 = vand.u32 %v2683, 4294901760
        %2685 = vmatpush1.msra.mxu0 %v2684
        %2686 = vmatprep.subr.mxu0 0.0
        %v2687 = vand.u32 %v1722, 4294901760
        %v2688 = vsub.f32 %v1722, %v2687
        %v2689 = vand.u32 %v2688, 4294901760
        %2690 = vmatpush1.msra.mxu0 %v2689
        %2691 = vmatprep.subr.mxu0 0.0
        %v2692 = vand.u32 %v1723, 4294901760
        %v2693 = vsub.f32 %v1723, %v2692
        %v2694 = vand.u32 %v2693, 4294901760
        %2695 = vmatpush1.msra.mxu0 %v2694
        %2696 = vmatprep.subr.mxu0 0.0
        %v2697 = vand.u32 %v1724, 4294901760
        %v2698 = vsub.f32 %v1724, %v2697
        %v2699 = vand.u32 %v2698, 4294901760
        %2700 = vmatpush1.msra.mxu0 %v2699
        %2701 = vmatprep.subr.mxu0 0.0
        %v2702 = vand.u32 %v1725, 4294901760
        %v2703 = vsub.f32 %v1725, %v2702
        %v2704 = vand.u32 %v2703, 4294901760
        %2705 = vmatpush1.msra.mxu0 %v2704
        %2706 = vmatprep.subr.mxu0 0.0
        %2707 = vmatpush1.msra.mxu0 0.0
        %2708 = vmatprep.subr.mxu0 0.0
        %2709 = vmatpush1.msra.mxu0 0.0
        %2710 = vmatprep.subr.mxu0 0.0
        %2711 = vmatpush1.msra.mxu0 0.0
        %2712 = vmatprep.subr.mxu0 0.0
        %2713 = vmatpush1.msra.mxu0 0.0
        %2714 = vmatprep.subr.mxu0 0.0
        %2715 = vmatpush1.msra.mxu0 0.0
        %2716 = vmatprep.subr.mxu0 0.0
        %2717 = vmatpush1.msra.mxu0 0.0
        %2718 = vmatprep.subr.mxu0 0.0
        %2719 = vmatpush1.msra.mxu0 0.0
        %2720 = vmatprep.subr.mxu0 0.0
        %2721 = vmatpush1.msra.mxu0 0.0
        %2722 = vmatprep.subr.mxu0 0.0
        %2723 = vmatpush1.msra.mxu0 0.0
        %2724 = vmatprep.subr.mxu0 0.0
        %2725 = vmatpush1.msra.mxu0 0.0
        %2726 = vmatprep.subr.mxu0 0.0
        %2727 = vmatpush1.msra.mxu0 0.0
        %2728 = vmatprep.subr.mxu0 0.0
        %2729 = vmatpush1.msra.mxu0 0.0
        %2730 = vmatprep.subr.mxu0 0.0
        %2731 = vmatpush1.msra.mxu0 0.0
        %2732 = vmatprep.subr.mxu0 0.0
        %2733 = vmatpush1.msra.mxu0 0.0
        %2734 = vmatprep.subr.mxu0 0.0
        %2735 = vmatpush1.msra.mxu0 0.0
        %2736 = vmatprep.subr.mxu0 0.0
        %2737 = vmatpush1.msra.mxu0 0.0
        %2738 = vmatprep.mubr.f32.mxu0 0.0
        %v2739 = vand.u32 %v328, 4294901760
        %2740 = vmatmul.mubr.f32.gmra.mrb[0].mxu0 %v2739
        %v2741 = vpop.f32.mrb[0].mxu0
        %v2742 = vadd.f32 %v2503, %v2741
        %v2743 = vpop.f32.mrb[0].mxu0
        %2744 = vmatprep.mubr.f32.mxu0 0.0
        %v2745 = vand.u32 %v329, 4294901760
        %2746 = vmatmul.mubr.f32.gmra.mrb[0].mxu0 %v2745
        %v2747 = vpop.f32.mrb[0].mxu0
        %v2748 = vadd.f32 %v2511, %v2747
        %v2749 = vpop.f32.mrb[0].mxu0
        %2750 = vmatprep.mubr.f32.mxu0 0.0
        %v2751 = vand.u32 %v330, 4294901760
        %2752 = vmatmul.mubr.f32.gmra.mrb[0].mxu0 %v2751
        %v2753 = vpop.f32.mrb[0].mxu0
        %v2754 = vadd.f32 %v2519, %v2753
        %v2755 = vpop.f32.mrb[0].mxu0
        %2756 = vmatprep.mubr.f32.mxu0 0.0
        %v2757 = vand.u32 %v331, 4294901760
        %2758 = vmatmul.mubr.f32.gmra.mrb[0].mxu0 %v2757
        %v2759 = vpop.f32.mrb[0].mxu0
        %v2760 = vadd.f32 %v2527, %v2759
        %v2761 = vpop.f32.mrb[0].mxu0
        %2762 = vmatprep.mubr.f32.mxu0 0.0
        %v2763 = vand.u32 %v332, 4294901760
        %2764 = vmatmul.mubr.f32.gmra.mrb[0].mxu0 %v2763
        %v2765 = vpop.f32.mrb[0].mxu0
        %v2766 = vadd.f32 %v2535, %v2765
        %v2767 = vpop.f32.mrb[0].mxu0
        %2768 = vmatprep.mubr.f32.mxu0 0.0
        %v2769 = vand.u32 %v333, 4294901760
        %2770 = vmatmul.mubr.f32.gmra.mrb[0].mxu0 %v2769
        %v2771 = vpop.f32.mrb[0].mxu0
        %v2772 = vadd.f32 %v2543, %v2771
        %v2773 = vpop.f32.mrb[0].mxu0
        %2774 = vmatprep.mubr.f32.mxu0 0.0
        %v2775 = vand.u32 %v334, 4294901760
        %2776 = vmatmul.mubr.f32.gmra.mrb[0].mxu0 %v2775
        %v2777 = vpop.f32.mrb[0].mxu0
        %v2778 = vadd.f32 %v2551, %v2777
        %v2779 = vpop.f32.mrb[0].mxu0
        %2780 = vmatprep.mubr.f32.mxu0 0.0
        %v2781 = vand.u32 %v335, 4294901760
        %2782 = vmatmul.mubr.f32.gmra.mrb[0].mxu0 %v2781
        %v2783 = vpop.f32.mrb[0].mxu0
        %v2784 = vadd.f32 %v2559, %v2783
        %v2785 = vpop.f32.mrb[0].mxu0
        %2786 = vmatprep.mubr.f32.mxu0 0.0
        %v2787 = vand.u32 %v336, 4294901760
        %2788 = vmatmul.mubr.f32.gmra.mrb[0].mxu0 %v2787
        %v2789 = vpop.f32.mrb[0].mxu0
        %v2790 = vadd.f32 %v2567, %v2789
        %v2791 = vpop.f32.mrb[0].mxu0
        %2792 = vmatprep.mubr.f32.mxu0 0.0
        %v2793 = vand.u32 %v337, 4294901760
        %2794 = vmatmul.mubr.f32.gmra.mrb[0].mxu0 %v2793
        %v2795 = vpop.f32.mrb[0].mxu0
        %v2796 = vadd.f32 %v2575, %v2795
        %v2797 = vpop.f32.mrb[0].mxu0
        %2798 = vmatprep.mubr.f32.mxu0 0.0
        %v2799 = vand.u32 %v338, 4294901760
        %2800 = vmatmul.mubr.f32.gmra.mrb[0].mxu0 %v2799
        %v2801 = vpop.f32.mrb[0].mxu0
        %v2802 = vadd.f32 %v2583, %v2801
        %v2803 = vpop.f32.mrb[0].mxu0
        %2804 = vmatprep.mubr.f32.mxu0 0.0
        %v2805 = vand.u32 %v339, 4294901760
        %2806 = vmatmul.mubr.f32.gmra.mrb[0].mxu0 %v2805
        %v2807 = vpop.f32.mrb[0].mxu0
        %v2808 = vadd.f32 %v2591, %v2807
        %v2809 = vpop.f32.mrb[0].mxu0
        %2810 = vmatprep.mubr.f32.mxu0 0.0
        %v2811 = vand.u32 %v340, 4294901760
        %2812 = vmatmul.mubr.f32.gmra.mrb[0].mxu0 %v2811
        %v2813 = vpop.f32.mrb[0].mxu0
        %v2814 = vadd.f32 %v2599, %v2813
        %v2815 = vpop.f32.mrb[0].mxu0
        %2816 = vmatprep.mubr.f32.mxu0 0.0
        %v2817 = vand.u32 %v341, 4294901760
        %2818 = vmatmul.mubr.f32.gmra.mrb[0].mxu0 %v2817
        %v2819 = vpop.f32.mrb[0].mxu0
        %v2820 = vadd.f32 %v2607, %v2819
        %v2821 = vpop.f32.mrb[0].mxu0
        %2822 = vmatprep.mubr.f32.mxu0 0.0
        %v2823 = vand.u32 %v342, 4294901760
        %2824 = vmatmul.mubr.f32.gmra.mrb[0].mxu0 %v2823
        %v2825 = vpop.f32.mrb[0].mxu0
        %v2826 = vadd.f32 %v2615, %v2825
        %v2827 = vpop.f32.mrb[0].mxu0
        %2828 = vmatprep.mubr.f32.mxu0 0.0
        %v2829 = vand.u32 %v343, 4294901760
        %2830 = vmatmul.mubr.f32.gmra.mrb[0].mxu0 %v2829
        %v2831 = vpop.f32.mrb[0].mxu0
        %v2832 = vadd.f32 %v2623, %v2831
        %v2833 = vpop.f32.mrb[0].mxu0
        %2834 = vdwg.mxu0
        %2835 = vmatprep.subr.mxu0 0.0
        %v2836 = vand.u32 %v1710, 4294901760
        %2837 = vmatpush1.msra.mxu0 %v2836
        %2838 = vmatprep.subr.mxu0 0.0
        %v2839 = vand.u32 %v1711, 4294901760
        %2840 = vmatpush1.msra.mxu0 %v2839
        %2841 = vmatprep.subr.mxu0 0.0
        %v2842 = vand.u32 %v1712, 4294901760
        %2843 = vmatpush1.msra.mxu0 %v2842
        %2844 = vmatprep.subr.mxu0 0.0
        %v2845 = vand.u32 %v1713, 4294901760
        %2846 = vmatpush1.msra.mxu0 %v2845
        %2847 = vmatprep.subr.mxu0 0.0
        %v2848 = vand.u32 %v1714, 4294901760
        %2849 = vmatpush1.msra.mxu0 %v2848
        %2850 = vmatprep.subr.mxu0 0.0
        %v2851 = vand.u32 %v1715, 4294901760
        %2852 = vmatpush1.msra.mxu0 %v2851
        %2853 = vmatprep.subr.mxu0 0.0
        %v2854 = vand.u32 %v1716, 4294901760
        %2855 = vmatpush1.msra.mxu0 %v2854
        %2856 = vmatprep.subr.mxu0 0.0
        %v2857 = vand.u32 %v1717, 4294901760
        %2858 = vmatpush1.msra.mxu0 %v2857
        %2859 = vmatprep.subr.mxu0 0.0
        %v2860 = vand.u32 %v1718, 4294901760
        %2861 = vmatpush1.msra.mxu0 %v2860
        %2862 = vmatprep.subr.mxu0 0.0
        %v2863 = vand.u32 %v1719, 4294901760
        %2864 = vmatpush1.msra.mxu0 %v2863
        %2865 = vmatprep.subr.mxu0 0.0
        %v2866 = vand.u32 %v1720, 4294901760
        %2867 = vmatpush1.msra.mxu0 %v2866
        %2868 = vmatprep.subr.mxu0 0.0
        %v2869 = vand.u32 %v1721, 4294901760
        %2870 = vmatpush1.msra.mxu0 %v2869
        %2871 = vmatprep.subr.mxu0 0.0
        %v2872 = vand.u32 %v1722, 4294901760
        %2873 = vmatpush1.msra.mxu0 %v2872
        %2874 = vmatprep.subr.mxu0 0.0
        %v2875 = vand.u32 %v1723, 4294901760
        %2876 = vmatpush1.msra.mxu0 %v2875
        %2877 = vmatprep.subr.mxu0 0.0
        %v2878 = vand.u32 %v1724, 4294901760
        %2879 = vmatpush1.msra.mxu0 %v2878
        %2880 = vmatprep.subr.mxu0 0.0
        %v2881 = vand.u32 %v1725, 4294901760
        %2882 = vmatpush1.msra.mxu0 %v2881
        %2883 = vmatprep.subr.mxu0 0.0
        %2884 = vmatpush1.msra.mxu0 0.0
        %2885 = vmatprep.subr.mxu0 0.0
        %2886 = vmatpush1.msra.mxu0 0.0
        %2887 = vmatprep.subr.mxu0 0.0
        %2888 = vmatpush1.msra.mxu0 0.0
        %2889 = vmatprep.subr.mxu0 0.0
        %2890 = vmatpush1.msra.mxu0 0.0
        %2891 = vmatprep.subr.mxu0 0.0
        %2892 = vmatpush1.msra.mxu0 0.0
        %2893 = vmatprep.subr.mxu0 0.0
        %2894 = vmatpush1.msra.mxu0 0.0
        %2895 = vmatprep.subr.mxu0 0.0
        %2896 = vmatpush1.msra.mxu0 0.0
        %2897 = vmatprep.subr.mxu0 0.0
        %2898 = vmatpush1.msra.mxu0 0.0
        %2899 = vmatprep.subr.mxu0 0.0
        %2900 = vmatpush1.msra.mxu0 0.0
        %2901 = vmatprep.subr.mxu0 0.0
        %2902 = vmatpush1.msra.mxu0 0.0
        %2903 = vmatprep.subr.mxu0 0.0
        %2904 = vmatpush1.msra.mxu0 0.0
        %2905 = vmatprep.subr.mxu0 0.0
        %2906 = vmatpush1.msra.mxu0 0.0
        %2907 = vmatprep.subr.mxu0 0.0
        %2908 = vmatpush1.msra.mxu0 0.0
        %2909 = vmatprep.subr.mxu0 0.0
        %2910 = vmatpush1.msra.mxu0 0.0
        %2911 = vmatprep.subr.mxu0 0.0
        %2912 = vmatpush1.msra.mxu0 0.0
        %2913 = vmatprep.subr.mxu0 0.0
        %2914 = vmatpush1.msra.mxu0 0.0
        %2915 = vmatprep.mubr.f32.mxu0 0.0
        %v2916 = vand.u32 %v328, 4294901760
        %2917 = vmatmul.mubr.f32.gmra.mrb[0].mxu0 %v2916
        %v2918 = vpop.f32.mrb[0].mxu0
        %v2919 = vadd.f32 %v2742, %v2918
        %v2920 = vpop.f32.mrb[0].mxu0
        %2921 = vmatprep.mubr.f32.mxu0 0.0
        %v2922 = vand.u32 %v329, 4294901760
        %2923 = vmatmul.mubr.f32.gmra.mrb[0].mxu0 %v2922
        %v2924 = vpop.f32.mrb[0].mxu0
        %v2925 = vadd.f32 %v2748, %v2924
        %v2926 = vpop.f32.mrb[0].mxu0
        %2927 = vmatprep.mubr.f32.mxu0 0.0
        %v2928 = vand.u32 %v330, 4294901760
        %2929 = vmatmul.mubr.f32.gmra.mrb[0].mxu0 %v2928
        %v2930 = vpop.f32.mrb[0].mxu0
        %v2931 = vadd.f32 %v2754, %v2930
        %v2932 = vpop.f32.mrb[0].mxu0
        %2933 = vmatprep.mubr.f32.mxu0 0.0
        %v2934 = vand.u32 %v331, 4294901760
        %2935 = vmatmul.mubr.f32.gmra.mrb[0].mxu0 %v2934
        %v2936 = vpop.f32.mrb[0].mxu0
        %v2937 = vadd.f32 %v2760, %v2936
        %v2938 = vpop.f32.mrb[0].mxu0
        %2939 = vmatprep.mubr.f32.mxu0 0.0
        %v2940 = vand.u32 %v332, 4294901760
        %2941 = vmatmul.mubr.f32.gmra.mrb[0].mxu0 %v2940
        %v2942 = vpop.f32.mrb[0].mxu0
        %v2943 = vadd.f32 %v2766, %v2942
        %v2944 = vpop.f32.mrb[0].mxu0
        %2945 = vmatprep.mubr.f32.mxu0 0.0
        %v2946 = vand.u32 %v333, 4294901760
        %2947 = vmatmul.mubr.f32.gmra.mrb[0].mxu0 %v2946
        %v2948 = vpop.f32.mrb[0].mxu0
        %v2949 = vadd.f32 %v2772, %v2948
        %v2950 = vpop.f32.mrb[0].mxu0
        %2951 = vmatprep.mubr.f32.mxu0 0.0
        %v2952 = vand.u32 %v334, 4294901760
        %2953 = vmatmul.mubr.f32.gmra.mrb[0].mxu0 %v2952
        %v2954 = vpop.f32.mrb[0].mxu0
        %v2955 = vadd.f32 %v2778, %v2954
        %v2956 = vpop.f32.mrb[0].mxu0
        %2957 = vmatprep.mubr.f32.mxu0 0.0
        %v2958 = vand.u32 %v335, 4294901760
        %2959 = vmatmul.mubr.f32.gmra.mrb[0].mxu0 %v2958
        %v2960 = vpop.f32.mrb[0].mxu0
        %v2961 = vadd.f32 %v2784, %v2960
        %v2962 = vpop.f32.mrb[0].mxu0
        %2963 = vmatprep.mubr.f32.mxu0 0.0
        %v2964 = vand.u32 %v336, 4294901760
        %2965 = vmatmul.mubr.f32.gmra.mrb[0].mxu0 %v2964
        %v2966 = vpop.f32.mrb[0].mxu0
        %v2967 = vadd.f32 %v2790, %v2966
        %v2968 = vpop.f32.mrb[0].mxu0
        %2969 = vmatprep.mubr.f32.mxu0 0.0
        %v2970 = vand.u32 %v337, 4294901760
        %2971 = vmatmul.mubr.f32.gmra.mrb[0].mxu0 %v2970
        %v2972 = vpop.f32.mrb[0].mxu0
        %v2973 = vadd.f32 %v2796, %v2972
        %v2974 = vpop.f32.mrb[0].mxu0
        %2975 = vmatprep.mubr.f32.mxu0 0.0
        %v2976 = vand.u32 %v338, 4294901760
        %2977 = vmatmul.mubr.f32.gmra.mrb[0].mxu0 %v2976
        %v2978 = vpop.f32.mrb[0].mxu0
        %v2979 = vadd.f32 %v2802, %v2978
        %v2980 = vpop.f32.mrb[0].mxu0
        %2981 = vmatprep.mubr.f32.mxu0 0.0
        %v2982 = vand.u32 %v339, 4294901760
        %2983 = vmatmul.mubr.f32.gmra.mrb[0].mxu0 %v2982
        %v2984 = vpop.f32.mrb[0].mxu0
        %v2985 = vadd.f32 %v2808, %v2984
        %v2986 = vpop.f32.mrb[0].mxu0
        %2987 = vmatprep.mubr.f32.mxu0 0.0
        %v2988 = vand.u32 %v340, 4294901760
        %2989 = vmatmul.mubr.f32.gmra.mrb[0].mxu0 %v2988
        %v2990 = vpop.f32.mrb[0].mxu0
        %v2991 = vadd.f32 %v2814, %v2990
        %v2992 = vpop.f32.mrb[0].mxu0
        %2993 = vmatprep.mubr.f32.mxu0 0.0
        %v2994 = vand.u32 %v341, 4294901760
        %2995 = vmatmul.mubr.f32.gmra.mrb[0].mxu0 %v2994
        %v2996 = vpop.f32.mrb[0].mxu0
        %v2997 = vadd.f32 %v2820, %v2996
        %v2998 = vpop.f32.mrb[0].mxu0
        %2999 = vmatprep.mubr.f32.mxu0 0.0
        %v3000 = vand.u32 %v342, 4294901760
        %3001 = vmatmul.mubr.f32.gmra.mrb[0].mxu0 %v3000
        %v3002 = vpop.f32.mrb[0].mxu0
        %v3003 = vadd.f32 %v2826, %v3002
        %v3004 = vpop.f32.mrb[0].mxu0
        %3005 = vmatprep.mubr.f32.mxu0 0.0
        %v3006 = vand.u32 %v343, 4294901760
        %3007 = vmatmul.mubr.f32.gmra.mrb[0].mxu0 %v3006
        %v3008 = vpop.f32.mrb[0].mxu0
        %v3009 = vadd.f32 %v2832, %v3008
        %v3010 = vpop.f32.mrb[0].mxu0
        %3011 = vdwg.mxu0
        %v3012 = vadd.f32 %v1694, %v2919
        %v3013 = vadd.f32 %v1695, %v2925
        %v3014 = vadd.f32 %v1696, %v2931
        %v3015 = vadd.f32 %v1697, %v2937
        %v3016 = vadd.f32 %v1698, %v2943
        %v3017 = vadd.f32 %v1699, %v2949
        %v3018 = vadd.f32 %v1700, %v2955
        %v3019 = vadd.f32 %v1701, %v2961
        %v3020 = vadd.f32 %v1702, %v2967
        %v3021 = vadd.f32 %v1703, %v2973
        %v3022 = vadd.f32 %v1704, %v2979
        %v3023 = vadd.f32 %v1705, %v2985
        %v3024 = vadd.f32 %v1706, %v2991
        %v3025 = vadd.f32 %v1707, %v2997
        %v3026 = vadd.f32 %v1708, %v3003
        %v3027 = vadd.f32 %v1709, %v3009
        %3028 = vst [vmem:[%s286] sm:$0xff] %v3012
        %3029 = vst [vmem:[%s286 + $0x8] sm:$0xff] %v3013
        %3030 = vst [vmem:[%s286 + $0x10] sm:$0xff] %v3014
        %3031 = vst [vmem:[%s286 + $0x18] sm:$0xff] %v3015
        %3032 = vst [vmem:[%s286 + $0x20] sm:$0xff] %v3016
        %3033 = vst [vmem:[%s286 + $0x28] sm:$0xff] %v3017
        %3034 = vst [vmem:[%s286 + $0x30] sm:$0xff] %v3018
        %3035 = vst [vmem:[%s286 + $0x38] sm:$0xff] %v3019
        %3036 = vst [vmem:[%s286 + $0x40] sm:$0xff] %v3020
        %3037 = vst [vmem:[%s286 + $0x48] sm:$0xff] %v3021
        %3038 = vst [vmem:[%s286 + $0x50] sm:$0xff] %v3022
        %3039 = vst [vmem:[%s286 + $0x58] sm:$0xff] %v3023
        %3040 = vst [vmem:[%s286 + $0x60] sm:$0xff] %v3024
        %3041 = vst [vmem:[%s286 + $0x68] sm:$0xff] %v3025
        %3042 = vst [vmem:[%s286 + $0x70] sm:$0xff] %v3026
        %3043 = vst [vmem:[%s286 + $0x78] sm:$0xff] %v3027
        %s3044 = sand.u32 %s126, 1
        %s3045 = scalar_lea.sflag [#allocation4], %s3044
        %s3046 = sand.u32 %s126, 1
        %s3047 = smul.addr %s3046, 128
        %s3048 = scalar_lea.vmem [#allocation8], %s3047
        %s3049 = sand.u32 %s152, 1
        %s3050 = scalar_lea.sflag [#allocation10], %s3049
        %s3051 = sand.u32 %s152, 1
        %s3052 = smul.addr %s3051, 128
        %s3053 = scalar_lea.vmem [#allocation9], %s3052
        // Predicated region
        $region49: #{tpu_custom_call.1} parent=31 // pred_check
          %p3054 = pneg %p136
        $region50: #{tpu_custom_call.1} parent=31 // pred_check_branch
          %3056 = sbr.rel (%p3054) target = $region52
        $region51: #{tpu_custom_call.1} parent=31 // pred_region
          %s3057 = smul.u32 16, %s30
          %s3059 = ssub.s32 2048, 2048
          %3060 = vsyncadd %s3045, %s3059
          %s3061 = smul.addr %s3057, 128
          %s3062 = scalar_lea.hbm %s3, %s3061
          %s3063 = sshll.u32 %s3048, 4
          %s3064 = int_to_ptr.vmem [resolvable:$true] %s3063
          %3069 = dma.vmem_to_hbm [thread:$0]  %s3064, 2048, %s3062, %s3045, 128, 128, 8
        $region52: #{tpu_custom_call.1} parent=31 // pred_fallthru
          _
        // Predicated region
        $region53: #{tpu_custom_call.1} parent=31 // pred_check
          %p3070 = pneg %p162
        $region54: #{tpu_custom_call.1} parent=31 // pred_check_branch
          %3072 = sbr.rel (%p3070) target = $region56
        $region55: #{tpu_custom_call.1} parent=31 // pred_region
          %s3073 = smul.u32 16, %s30
          %s3075 = ssub.s32 2048, 2048
          %3076 = vsyncadd %s3050, %s3075
          %s3077 = smul.addr %s3073, 128
          %s3078 = scalar_lea.hbm %s4, %s3077
          %s3079 = sshll.u32 %s3053, 4
          %s3080 = int_to_ptr.vmem [resolvable:$true] %s3079
          %3085 = dma.vmem_to_hbm [thread:$0]  %s3080, 2048, %s3078, %s3050, 128, 128, 8
        $region56: #{tpu_custom_call.1} parent=31 // pred_fallthru
          _
      $region32: #{tpu_custom_call.1} parent=5 // pred_fallthru
        _
      %p3086 = scmp.le.s32.totalorder 2, %s21
      // Predicated region
      $region57: #{tpu_custom_call.1} parent=5 // pred_check
        %p3087 = pneg %p3086
      $region58: #{tpu_custom_call.1} parent=5 // pred_check_branch
        %3089 = sbr.rel (%p3087) target = $region60
      $region59: #{tpu_custom_call.1} parent=5 // pred_region
        %s3090 = ssub.s32 %s21, 2
        // Predicated region
        $region61: #{tpu_custom_call.1} parent=59 // pred_check
          %p3091 = pneg %p142
        $region62: #{tpu_custom_call.1} parent=59 // pred_check_branch
          %3093 = sbr.rel (%p3091) target = $region64
        $region63: #{tpu_custom_call.1} parent=59 // pred_region
          %s3094 = sand.u32 %s127, 1
          %s3095 = scalar_lea.sflag [#allocation4], %s3094
          %s3096 = sand.u32 %s127, 1
          %s3097 = smul.addr %s3096, 128
          %s3098 = scalar_lea.vmem [#allocation8], %s3097
          %3099 = dma.done %s3095, 2048
        $region64: #{tpu_custom_call.1} parent=59 // pred_fallthru
          _
        // Predicated region
        $region65: #{tpu_custom_call.1} parent=59 // pred_check
          %p3100 = pneg %p168
        $region66: #{tpu_custom_call.1} parent=59 // pred_check_branch
          %3102 = sbr.rel (%p3100) target = $region68
        $region67: #{tpu_custom_call.1} parent=59 // pred_region
          %s3103 = sand.u32 %s153, 1
          %s3104 = scalar_lea.sflag [#allocation10], %s3103
          %s3105 = sand.u32 %s153, 1
          %s3106 = smul.addr %s3105, 128
          %s3107 = scalar_lea.vmem [#allocation9], %s3106
          %3108 = dma.done %s3104, 2048
        $region68: #{tpu_custom_call.1} parent=59 // pred_fallthru
          _
      $region60: #{tpu_custom_call.1} parent=5 // pred_fallthru
        _
    $region6: #{tpu_custom_call.1} parent=1 // loop_footer
      %s25 = sadd.s32 1, %s21
    $region7: #{tpu_custom_call.1} parent=1 // loop_footer_branch
      %20 = sbr.rel target = $region3
    $region8: #{tpu_custom_call.1} parent=1 // loop_exit
      _
    %3109 = vsyncpa [#allocation3], 1
    %s3110 = scalar_lea.sflag [#allocation3], 1
    %3111 = vsyncpa %s3110, 1
    %3112 = vsyncpa [#allocation6], 1
    %3113 = vsyncpa [#allocation4], 1
    %s3114 = scalar_lea.sflag [#allocation4], 1
    %3115 = vsyncpa %s3114, 1
    %3116 = vsyncpa [#allocation10], 1
    %s3117 = scalar_lea.sflag [#allocation10], 1
    %3118 = vsyncpa %s3117, 1

</llo_original>
